<compile_context>
chip_gen: v5e
topology: v5e:2x2
jax: 0.10.0
libtpu: 0.0.40
codegen_flags: <defaults>
</compile_context>

<pallas_src>
import functools

import jax
import jax.numpy as jnp
from jax import lax
from jax.experimental import pallas as pl
from jax.experimental.pallas import tpu as pltpu


def _spatial_attn_kernel(x_ref, w_ref, o_ref,
                         sum_ref, max_ref, pad_ref, shift_ref,
                         *, C, TC, H, W, K, p, n_acc):
    # x_ref:     (TC, H*W)    VMEM  — lane-dense channel tile of one image
    # w_ref:     (2*K*K,)     SMEM  — [avg-channel taps..., max-channel taps...]
    # o_ref:     (H, W)       VMEM  — attention map for this image
    # sum_ref:   (1, H*W)     VMEM scratch — running channel sum
    # max_ref:   (1, H*W)     VMEM scratch — running channel max
    # pad_ref:   (2, Hp, Wp)  VMEM scratch — zero-padded pooled maps
    # shift_ref: (2, K, Hp, W) VMEM scratch — K lane-shifted copies per map
    c = pl.program_id(1)
    n_c = pl.num_programs(1)

    @pl.when(c == 0)
    def _init():
        sum_ref[...] = jnp.zeros_like(sum_ref)
        max_ref[...] = jnp.full_like(max_ref, -jnp.inf)

    x = x_ref[...].astype(jnp.float32)  # (TC, H*W)

    def _accumulate(xs, xm):
        sum_ref[...] = sum_ref[...] + jnp.sum(xs, axis=0, keepdims=True)
        max_ref[...] = jnp.maximum(max_ref[...],
                                   jnp.max(xm, axis=0, keepdims=True))

    if C % TC != 0:
        # Ragged channel tail: the iota/select masking only runs on the last
        # channel tile; all full tiles take the unmasked fast path.
        @pl.when(c < n_c - 1)
        def _full_tile():
            _accumulate(x, x)

        @pl.when(c == n_c - 1)
        def _ragged_tile():
            ch = c * TC + lax.broadcasted_iota(jnp.int32, (TC, 1), 0)
            valid = ch < C
            _accumulate(jnp.where(valid, x, 0.0),
                        jnp.where(valid, x, -jnp.inf))
    else:
        _accumulate(x, x)

    @pl.when(c == n_c - 1)
    def _finalize():
        # Pooled maps back to (H, W): tiny, once per image.
        avg = (sum_ref[...] * (1.0 / C)).reshape(H, W)
        mx = max_ref[...].reshape(H, W)

        # Zero-padded pooled maps, built entirely in VMEM (no host-side pad of
        # x). Full zeroing of this tiny buffer is cheaper/simpler than
        # border-only masked stores.
        pad_ref[...] = jnp.zeros_like(pad_ref)
        pad_ref[0, p:p + H, p:p + W] = avg
        pad_ref[1, p:p + H, p:p + W] = mx

        # Hoist lane shifts out of the tap loop: K lane-shifted copies of each
        # padded pooled map (2*K slices instead of 2*K*K).
        a_full = pad_ref[0]  # (Hp, Wp)
        m_full = pad_ref[1]
        for dx in range(K):
            shift_ref[0, dx] = a_full[:, dx:dx + W]
            shift_ref[1, dx] = m_full[:, dx:dx + W]

        # KxK conv: lane-aligned, sublane-offset VMEM loads + VPU mul/add
        # spread over n_acc independent accumulators (bounded vreg pressure).
        accs = [jnp.zeros((H, W), jnp.float32) for _ in range(n_acc)]
        t = 0
        for dy in range(K):
            for dx in range(K):
                a = shift_ref[0, dx, dy:dy + H, :]
                m = shift_ref[1, dx, dy:dy + H, :]
                wa = w_ref[dy * K + dx]
                wm = w_ref[K * K + dy * K + dx]
                accs[t % n_acc] = accs[t % n_acc] + (wa * a + wm * m)
                t += 1
        if n_acc == 4:
            acc = (accs[0] + accs[1]) + (accs[2] + accs[3])
        else:
            acc = accs[0]
            for extra in accs[1:]:
                acc = acc + extra

        o_ref[...] = jax.nn.sigmoid(acc).astype(o_ref.dtype)


def spatial_attention(x, weight, kernel_size=7, c_tile=None,
                      vmem_limit_bytes=None):
    """CBAM SpatialAttention forward.  x: (N, C, H, W), weight: (1, 2, K, K)
    -> (N, 1, H, W).

    Feed x at its native dtype (bf16 preferred: the kernel is HBM-read bound
    and upcasts to f32 in VMEM); do NOT pre-widen to f32 at the call site.
    """
    N, C, H, W = x.shape
    K = int(kernel_size)
    p = K // 2
    Hp, Wp = H + 2 * p, W + 2 * p
    HW = H * W

    # Lane-dense view of the input (free reshape for contiguous NCHW).
    x_flat = x.reshape(N, C, HW)

    # Generation-aware VMEM budget (v5e/v6e: 128 MiB; v7x: 64 MiB per core).
    try:
        vmem_cap = int(pltpu.get_tpu_info().vmem_capacity_bytes)
    except Exception:  # pragma: no cover - conservative fallback
        vmem_cap = 64 * 1024 * 1024
    if vmem_limit_bytes is None:
        vmem_limit_bytes = min(vmem_cap // 2, 64 * 1024 * 1024)

    itemsize = jnp.dtype(x.dtype).itemsize
    # Bytes per channel row as laid out in VMEM; lane-dense, so padded == real
    # (up to a single 128-lane remainder).
    row_bytes = pl.cdiv(HW, 128) * 128 * itemsize
    if c_tile is None:
        # Target ~1-2 MiB of real streamed data per block (HBM throughput
        # saturates around 0.5-1 MiB); double-buffered input stays well under
        # the per-generation VMEM budget.
        target_bytes = min(2 * 1024 * 1024, vmem_limit_bytes // 8)
        c_tile = max(1, target_bytes // row_bytes)
    TC = min(int(c_tile), C)
    if TC < C:
        TC = (TC // 8) * 8          # (8,128) rule on the (TC, H*W) block
        if TC < 8:
            TC = 8
        if TC >= C:
            TC = C
    nC = pl.cdiv(C, TC)

    # Bound vreg pressure in the unrolled KxK tap loop: each f32 (H, W)
    # accumulator costs ~ceil(H/8)*ceil(W/128) vregs.
    vregs_per_acc = pl.cdiv(H, 8) * pl.cdiv(W, 128)
    n_acc = 4 if vregs_per_acc <= 8 else 2
    # TODO(synk): strip-tile the finalize conv over sublane rows for very large
    # maps (H, W >= ~112) instead of just dropping to 2 accumulators.

    w_flat = weight.reshape(-1).astype(jnp.float32)  # (2*K*K,) conv taps

    kern = functools.partial(_spatial_attn_kernel,
                             C=C, TC=TC, H=H, W=W, K=K, p=p, n_acc=n_acc)

    return pl.pallas_call(
        kern,
        out_shape=jax.ShapeDtypeStruct((N, 1, H, W), x.dtype),
        grid_spec=pltpu.PrefetchScalarGridSpec(
            num_scalar_prefetch=0,
            grid=(N, nC),
            in_specs=[
                # Lane-dense (TC, H*W) channel tile of one image.
                pl.BlockSpec((None, TC, HW), lambda n, c: (n, c, 0)),
                # Conv taps as scalars in SMEM.
                pl.BlockSpec(memory_space=pltpu.MemorySpace.SMEM),
            ],
            out_specs=pl.BlockSpec((None, None, H, W),
                                   lambda n, c: (n, 0, 0, 0)),
            scratch_shapes=[
                pltpu.VMEM((1, HW), jnp.float32),         # running channel sum
                pltpu.VMEM((1, HW), jnp.float32),         # running channel max
                pltpu.VMEM((2, Hp, Wp), jnp.float32),     # padded pooled maps
                pltpu.VMEM((2, K, Hp, W), jnp.float32),   # lane-shifted copies
            ]),
        compiler_params=pltpu.CompilerParams(
            dimension_semantics=("parallel", "arbitrary"),
            vmem_limit_bytes=int(vmem_limit_bytes)),
    )(x_flat, w_flat)


def _ref_forward(x, weight, kernel_size=7):
    """Pure-JAX reference mirroring the PyTorch forward."""
    avg = jnp.mean(x, axis=1, keepdims=True)
    mx = jnp.max(x, axis=1, keepdims=True)
    cat = jnp.concatenate([avg, mx], axis=1)
    p = kernel_size // 2
    y = lax.conv_general_dilated(
        cat, weight, window_strides=(1, 1), padding=[(p, p), (p, p)],
        dimension_numbers=("NCHW", "OIHW", "NCHW"),
        precision=lax.Precision.HIGHEST)
    return jax.nn.sigmoid(y)


if __name__ == "__main__":
    key = jax.random.PRNGKey(0)
    kx, kw, kx2 = jax.random.split(key, 3)

    K = 7
    # Deterministic synthetic conv weight: (out=1, in=2, K, K).
    weight = 0.1 * jax.random.normal(kw, (1, 2, K, K), dtype=jnp.float32)

    # Small demo shape (C % TC == 0 fast path; nC == 1).
    N, C, H, W = 2, 4, 16, 16
    x = jax.random.normal(kx, (N, C, H, W), dtype=jnp.float32)
    out = jax.block_until_ready(spatial_attention(x, weight, kernel_size=K))
    ref = _ref_forward(x, weight, kernel_size=K)
    assert out.shape == (N, 1, H, W), out.shape
    assert jnp.allclose(out, ref, atol=1e-5, rtol=1e-5), \
        float(jnp.max(jnp.abs(out - ref)))

    # Ragged channel tiling (C % TC != 0) exercises the masked last-tile path.
    C2 = 20
    x2 = jax.random.normal(kx2, (N, C2, H, W), dtype=jnp.float32)
    out2 = jax.block_until_ready(
        spatial_attention(x2, weight, kernel_size=K, c_tile=8))
    ref2 = _ref_forward(x2, weight, kernel_size=K)
    assert out2.shape == (N, 1, H, W), out2.shape
    assert jnp.allclose(out2, ref2, atol=1e-5, rtol=1e-5), \
        float(jnp.max(jnp.abs(out2 - ref2)))

    print("KERNEL_OK")
</pallas_src>

<mosaic_0001>
module attributes {stable_mosaic.version = 11 : i64} {
  func.func @_spatial_attn_kernel(%arg0: i32, %arg1: i32, %arg2: memref<1x4x256xf32, #tpu.memory_space<vmem>>, %arg3: memref<98xf32, #tpu.memory_space<smem>>, %arg4: memref<1x1x16x16xf32, #tpu.memory_space<vmem>>, %arg5: memref<1x256xf32, #tpu.memory_space<vmem>>, %arg6: memref<1x256xf32, #tpu.memory_space<vmem>>, %arg7: memref<2x22x22xf32, #tpu.memory_space<vmem>>, %arg8: memref<2x7x22x16xf32, #tpu.memory_space<vmem>>) attributes {dimension_semantics = [#tpu.dimension_semantics<parallel>, #tpu.dimension_semantics<arbitrary>], iteration_bounds = array<i64: 2, 1>, scalar_prefetch = 0 : i64, scratch_operands = 4 : i64, tpu.core_type = #tpu.core_type<tc>, window_params = [{transform_indices = @transform_0, window_bounds = array<i64: 1, 4, 256>}, {transform_indices = @transform_1, window_bounds = array<i64: 98>}, {transform_indices = @transform_2, window_bounds = array<i64: 1, 1, 16, 16>}]} {
    %c0_i32 = arith.constant 0 : i32
    %0 = arith.cmpi eq, %arg1, %c0_i32 : i32
    %1 = arith.extui %0 : i1 to i32
    %c0_i32_0 = arith.constant 0 : i32
    %2 = arith.cmpi ne, %1, %c0_i32_0 : i32
    scf.if %2 {
      %cst_14 = arith.constant 0.000000e+00 : f32
      %18 = vector.broadcast %cst_14 : f32 to vector<1x256xf32>
      %c0_15 = arith.constant 0 : index
      %c0_16 = arith.constant 0 : index
      %19 = vector.load %arg5[%c0_15, %c0_16] : memref<1x256xf32, #tpu.memory_space<vmem>>, vector<1x256xf32>
      tpu.vector_store %arg5[%c0_15, %c0_16], %18 {strides = array<i32>} : memref<1x256xf32, #tpu.memory_space<vmem>>, vector<1x256xf32>,
      %cst_17 = arith.constant 0xFF800000 : f32
      %20 = vector.broadcast %cst_17 : f32 to vector<1x256xf32>
      %c0_18 = arith.constant 0 : index
      %c0_19 = arith.constant 0 : index
      %21 = vector.load %arg6[%c0_18, %c0_19] : memref<1x256xf32, #tpu.memory_space<vmem>>, vector<1x256xf32>
      tpu.vector_store %arg6[%c0_18, %c0_19], %20 {strides = array<i32>} : memref<1x256xf32, #tpu.memory_space<vmem>>, vector<1x256xf32>,
    } else {
    }
    %c0 = arith.constant 0 : index
    %c0_1 = arith.constant 0 : index
    %c0_2 = arith.constant 0 : index
    %3 = vector.load %arg2[%c0, %c0_1, %c0_2] : memref<1x4x256xf32, #tpu.memory_space<vmem>>, vector<1x4x256xf32>
    %4 = vector.shape_cast %3 : vector<1x4x256xf32> to vector<4x256xf32>
    %c0_3 = arith.constant 0 : index
    %c0_4 = arith.constant 0 : index
    %5 = vector.load %arg5[%c0_3, %c0_4] : memref<1x256xf32, #tpu.memory_space<vmem>>, vector<1x256xf32>
    %cst = arith.constant dense<0.000000e+00> : vector<256xf32>
    %6 = vector.multi_reduction <add>, %4, %cst [0] : vector<4x256xf32> to vector<256xf32>
    %7 = vector.shape_cast %6 : vector<256xf32> to vector<1x256xf32>
    %8 = arith.addf %5, %7 : vector<1x256xf32>
    %c0_5 = arith.constant 0 : index
    %c0_6 = arith.constant 0 : index
    %9 = vector.load %arg5[%c0_5, %c0_6] : memref<1x256xf32, #tpu.memory_space<vmem>>, vector<1x256xf32>
    tpu.vector_store %arg5[%c0_5, %c0_6], %8 {strides = array<i32>} : memref<1x256xf32, #tpu.memory_space<vmem>>, vector<1x256xf32>,
    %c0_7 = arith.constant 0 : index
    %c0_8 = arith.constant 0 : index
    %10 = vector.load %arg6[%c0_7, %c0_8] : memref<1x256xf32, #tpu.memory_space<vmem>>, vector<1x256xf32>
    %cst_9 = arith.constant dense<0xFF800000> : vector<256xf32>
    %11 = vector.multi_reduction <maximumf>, %4, %cst_9 [0] : vector<4x256xf32> to vector<256xf32>
    %12 = vector.shape_cast %11 : vector<256xf32> to vector<1x256xf32>
    %13 = arith.maximumf %10, %12 : vector<1x256xf32>
    %c0_10 = arith.constant 0 : index
    %c0_11 = arith.constant 0 : index
    %14 = vector.load %arg6[%c0_10, %c0_11] : memref<1x256xf32, #tpu.memory_space<vmem>>, vector<1x256xf32>
    tpu.vector_store %arg6[%c0_10, %c0_11], %13 {strides = array<i32>} : memref<1x256xf32, #tpu.memory_space<vmem>>, vector<1x256xf32>,
    %c0_i32_12 = arith.constant 0 : i32
    %15 = arith.cmpi eq, %arg1, %c0_i32_12 : i32
    %16 = arith.extui %15 : i1 to i32
    %c0_i32_13 = arith.constant 0 : i32
    %17 = arith.cmpi ne, %16, %c0_i32_13 : i32
    scf.if %17 {
      %c0_14 = arith.constant 0 : index
      %c0_15 = arith.constant 0 : index
      %18 = vector.load %arg5[%c0_14, %c0_15] : memref<1x256xf32, #tpu.memory_space<vmem>>, vector<1x256xf32>
      %cst_16 = arith.constant 2.500000e-01 : f32
      %19 = vector.broadcast %cst_16 : f32 to vector<1x256xf32>
      %20 = arith.mulf %18, %19 : vector<1x256xf32>
      %21 = vector.shape_cast %20 : vector<1x256xf32> to vector<16x16xf32>
      %c0_17 = arith.constant 0 : index
      %c0_18 = arith.constant 0 : index
      %22 = vector.load %arg6[%c0_17, %c0_18] : memref<1x256xf32, #tpu.memory_space<vmem>>, vector<1x256xf32>
      %23 = vector.shape_cast %22 : vector<1x256xf32> to vector<16x16xf32>
      %cst_19 = arith.constant 0.000000e+00 : f32
      %24 = vector.broadcast %cst_19 : f32 to vector<2x22x22xf32>
      %c0_20 = arith.constant 0 : index
      %c0_21 = arith.constant 0 : index
      %c0_22 = arith.constant 0 : index
      %25 = vector.load %arg7[%c0_20, %c0_21, %c0_22] : memref<2x22x22xf32, #tpu.memory_space<vmem>>, vector<2x22x22xf32>
      tpu.vector_store %arg7[%c0_20, %c0_21, %c0_22], %24 {strides = array<i32>} : memref<2x22x22xf32, #tpu.memory_space<vmem>>, vector<2x22x22xf32>,
      %c0_23 = arith.constant 0 : index
      %c3 = arith.constant 3 : index
      %c3_24 = arith.constant 3 : index
      %26 = vector.load %arg7[%c0_23, %c3, %c3_24] : memref<2x22x22xf32, #tpu.memory_space<vmem>>, vector<1x16x16xf32>
      %27 = vector.shape_cast %26 : vector<1x16x16xf32> to vector<16x16xf32>
      %28 = vector.shape_cast %21 : vector<16x16xf32> to vector<1x16x16xf32>
      tpu.vector_store %arg7[%c0_23, %c3, %c3_24], %28 {strides = array<i32>} : memref<2x22x22xf32, #tpu.memory_space<vmem>>, vector<1x16x16xf32>,
      %c1 = arith.constant 1 : index
      %c3_25 = arith.constant 3 : index
      %c3_26 = arith.constant 3 : index
      %29 = vector.load %arg7[%c1, %c3_25, %c3_26] : memref<2x22x22xf32, #tpu.memory_space<vmem>>, vector<1x16x16xf32>
      %30 = vector.shape_cast %29 : vector<1x16x16xf32> to vector<16x16xf32>
      %31 = vector.shape_cast %23 : vector<16x16xf32> to vector<1x16x16xf32>
      tpu.vector_store %arg7[%c1, %c3_25, %c3_26], %31 {strides = array<i32>} : memref<2x22x22xf32, #tpu.memory_space<vmem>>, vector<1x16x16xf32>,
      %c0_27 = arith.constant 0 : index
      %c0_28 = arith.constant 0 : index
      %c0_29 = arith.constant 0 : index
      %32 = vector.load %arg7[%c0_27, %c0_28, %c0_29] : memref<2x22x22xf32, #tpu.memory_space<vmem>>, vector<1x22x22xf32>
      %33 = vector.shape_cast %32 : vector<1x22x22xf32> to vector<22x22xf32>
      %c1_30 = arith.constant 1 : index
      %c0_31 = arith.constant 0 : index
      %c0_32 = arith.constant 0 : index
      %34 = vector.load %arg7[%c1_30, %c0_31, %c0_32] : memref<2x22x22xf32, #tpu.memory_space<vmem>>, vector<1x22x22xf32>
      %35 = vector.shape_cast %34 : vector<1x22x22xf32> to vector<22x22xf32>
      %36 = vector.extract_strided_slice %33 {offsets = [0, 0], sizes = [22, 16], strides = [1, 1]} : vector<22x22xf32> to vector<22x16xf32>
      %c0_33 = arith.constant 0 : index
      %c0_34 = arith.constant 0 : index
      %c0_35 = arith.constant 0 : index
      %c0_36 = arith.constant 0 : index
      %37 = vector.load %arg8[%c0_33, %c0_34, %c0_35, %c0_36] : memref<2x7x22x16xf32, #tpu.memory_space<vmem>>, vector<1x1x22x16xf32>
      %38 = vector.shape_cast %37 : vector<1x1x22x16xf32> to vector<22x16xf32>
      %39 = vector.shape_cast %36 : vector<22x16xf32> to vector<1x1x22x16xf32>
      tpu.vector_store %arg8[%c0_33, %c0_34, %c0_35, %c0_36], %39 {strides = array<i32>} : memref<2x7x22x16xf32, #tpu.memory_space<vmem>>, vector<1x1x22x16xf32>,
      %40 = vector.extract_strided_slice %35 {offsets = [0, 0], sizes = [22, 16], strides = [1, 1]} : vector<22x22xf32> to vector<22x16xf32>
      %c1_37 = arith.constant 1 : index
      %c0_38 = arith.constant 0 : index
      %c0_39 = arith.constant 0 : index
      %c0_40 = arith.constant 0 : index
      %41 = vector.load %arg8[%c1_37, %c0_38, %c0_39, %c0_40] : memref<2x7x22x16xf32, #tpu.memory_space<vmem>>, vector<1x1x22x16xf32>
      %42 = vector.shape_cast %41 : vector<1x1x22x16xf32> to vector<22x16xf32>
      %43 = vector.shape_cast %40 : vector<22x16xf32> to vector<1x1x22x16xf32>
      tpu.vector_store %arg8[%c1_37, %c0_38, %c0_39, %c0_40], %43 {strides = array<i32>} : memref<2x7x22x16xf32, #tpu.memory_space<vmem>>, vector<1x1x22x16xf32>,
      %44 = vector.extract_strided_slice %33 {offsets = [0, 1], sizes = [22, 16], strides = [1, 1]} : vector<22x22xf32> to vector<22x16xf32>
      %c0_41 = arith.constant 0 : index
      %c1_42 = arith.constant 1 : index
      %c0_43 = arith.constant 0 : index
      %c0_44 = arith.constant 0 : index
      %45 = vector.load %arg8[%c0_41, %c1_42, %c0_43, %c0_44] : memref<2x7x22x16xf32, #tpu.memory_space<vmem>>, vector<1x1x22x16xf32>
      %46 = vector.shape_cast %45 : vector<1x1x22x16xf32> to vector<22x16xf32>
      %47 = vector.shape_cast %44 : vector<22x16xf32> to vector<1x1x22x16xf32>
      tpu.vector_store %arg8[%c0_41, %c1_42, %c0_43, %c0_44], %47 {strides = array<i32>} : memref<2x7x22x16xf32, #tpu.memory_space<vmem>>, vector<1x1x22x16xf32>,
      %48 = vector.extract_strided_slice %35 {offsets = [0, 1], sizes = [22, 16], strides = [1, 1]} : vector<22x22xf32> to vector<22x16xf32>
      %c1_45 = arith.constant 1 : index
      %c1_46 = arith.constant 1 : index
      %c0_47 = arith.constant 0 : index
      %c0_48 = arith.constant 0 : index
      %49 = vector.load %arg8[%c1_45, %c1_46, %c0_47, %c0_48] : memref<2x7x22x16xf32, #tpu.memory_space<vmem>>, vector<1x1x22x16xf32>
      %50 = vector.shape_cast %49 : vector<1x1x22x16xf32> to vector<22x16xf32>
      %51 = vector.shape_cast %48 : vector<22x16xf32> to vector<1x1x22x16xf32>
      tpu.vector_store %arg8[%c1_45, %c1_46, %c0_47, %c0_48], %51 {strides = array<i32>} : memref<2x7x22x16xf32, #tpu.memory_space<vmem>>, vector<1x1x22x16xf32>,
      %52 = vector.extract_strided_slice %33 {offsets = [0, 2], sizes = [22, 16], strides = [1, 1]} : vector<22x22xf32> to vector<22x16xf32>
      %c0_49 = arith.constant 0 : index
      %c2 = arith.constant 2 : index
      %c0_50 = arith.constant 0 : index
      %c0_51 = arith.constant 0 : index
      %53 = vector.load %arg8[%c0_49, %c2, %c0_50, %c0_51] : memref<2x7x22x16xf32, #tpu.memory_space<vmem>>, vector<1x1x22x16xf32>
      %54 = vector.shape_cast %53 : vector<1x1x22x16xf32> to vector<22x16xf32>
      %55 = vector.shape_cast %52 : vector<22x16xf32> to vector<1x1x22x16xf32>
      tpu.vector_store %arg8[%c0_49, %c2, %c0_50, %c0_51], %55 {strides = array<i32>} : memref<2x7x22x16xf32, #tpu.memory_space<vmem>>, vector<1x1x22x16xf32>,
      %56 = vector.extract_strided_slice %35 {offsets = [0, 2], sizes = [22, 16], strides = [1, 1]} : vector<22x22xf32> to vector<22x16xf32>
      %c1_52 = arith.constant 1 : index
      %c2_53 = arith.constant 2 : index
      %c0_54 = arith.constant 0 : index
      %c0_55 = arith.constant 0 : index
      %57 = vector.load %arg8[%c1_52, %c2_53, %c0_54, %c0_55] : memref<2x7x22x16xf32, #tpu.memory_space<vmem>>, vector<1x1x22x16xf32>
      %58 = vector.shape_cast %57 : vector<1x1x22x16xf32> to vector<22x16xf32>
      %59 = vector.shape_cast %56 : vector<22x16xf32> to vector<1x1x22x16xf32>
      tpu.vector_store %arg8[%c1_52, %c2_53, %c0_54, %c0_55], %59 {strides = array<i32>} : memref<2x7x22x16xf32, #tpu.memory_space<vmem>>, vector<1x1x22x16xf32>,
      %60 = vector.extract_strided_slice %33 {offsets = [0, 3], sizes = [22, 16], strides = [1, 1]} : vector<22x22xf32> to vector<22x16xf32>
      %c0_56 = arith.constant 0 : index
      %c3_57 = arith.constant 3 : index
      %c0_58 = arith.constant 0 : index
      %c0_59 = arith.constant 0 : index
      %61 = vector.load %arg8[%c0_56, %c3_57, %c0_58, %c0_59] : memref<2x7x22x16xf32, #tpu.memory_space<vmem>>, vector<1x1x22x16xf32>
      %62 = vector.shape_cast %61 : vector<1x1x22x16xf32> to vector<22x16xf32>
      %63 = vector.shape_cast %60 : vector<22x16xf32> to vector<1x1x22x16xf32>
      tpu.vector_store %arg8[%c0_56, %c3_57, %c0_58, %c0_59], %63 {strides = array<i32>} : memref<2x7x22x16xf32, #tpu.memory_space<vmem>>, vector<1x1x22x16xf32>,
      %64 = vector.extract_strided_slice %35 {offsets = [0, 3], sizes = [22, 16], strides = [1, 1]} : vector<22x22xf32> to vector<22x16xf32>
      %c1_60 = arith.constant 1 : index
      %c3_61 = arith.constant 3 : index
      %c0_62 = arith.constant 0 : index
      %c0_63 = arith.constant 0 : index
      %65 = vector.load %arg8[%c1_60, %c3_61, %c0_62, %c0_63] : memref<2x7x22x16xf32, #tpu.memory_space<vmem>>, vector<1x1x22x16xf32>
      %66 = vector.shape_cast %65 : vector<1x1x22x16xf32> to vector<22x16xf32>
      %67 = vector.shape_cast %64 : vector<22x16xf32> to vector<1x1x22x16xf32>
      tpu.vector_store %arg8[%c1_60, %c3_61, %c0_62, %c0_63], %67 {strides = array<i32>} : memref<2x7x22x16xf32, #tpu.memory_space<vmem>>, vector<1x1x22x16xf32>,
      %68 = vector.extract_strided_slice %33 {offsets = [0, 4], sizes = [22, 16], strides = [1, 1]} : vector<22x22xf32> to vector<22x16xf32>
      %c0_64 = arith.constant 0 : index
      %c4 = arith.constant 4 : index
      %c0_65 = arith.constant 0 : index
      %c0_66 = arith.constant 0 : index
      %69 = vector.load %arg8[%c0_64, %c4, %c0_65, %c0_66] : memref<2x7x22x16xf32, #tpu.memory_space<vmem>>, vector<1x1x22x16xf32>
      %70 = vector.shape_cast %69 : vector<1x1x22x16xf32> to vector<22x16xf32>
      %71 = vector.shape_cast %68 : vector<22x16xf32> to vector<1x1x22x16xf32>
      tpu.vector_store %arg8[%c0_64, %c4, %c0_65, %c0_66], %71 {strides = array<i32>} : memref<2x7x22x16xf32, #tpu.memory_space<vmem>>, vector<1x1x22x16xf32>,
      %72 = vector.extract_strided_slice %35 {offsets = [0, 4], sizes = [22, 16], strides = [1, 1]} : vector<22x22xf32> to vector<22x16xf32>
      %c1_67 = arith.constant 1 : index
      %c4_68 = arith.constant 4 : index
      %c0_69 = arith.constant 0 : index
      %c0_70 = arith.constant 0 : index
      %73 = vector.load %arg8[%c1_67, %c4_68, %c0_69, %c0_70] : memref<2x7x22x16xf32, #tpu.memory_space<vmem>>, vector<1x1x22x16xf32>
      %74 = vector.shape_cast %73 : vector<1x1x22x16xf32> to vector<22x16xf32>
      %75 = vector.shape_cast %72 : vector<22x16xf32> to vector<1x1x22x16xf32>
      tpu.vector_store %arg8[%c1_67, %c4_68, %c0_69, %c0_70], %75 {strides = array<i32>} : memref<2x7x22x16xf32, #tpu.memory_space<vmem>>, vector<1x1x22x16xf32>,
      %76 = vector.extract_strided_slice %33 {offsets = [0, 5], sizes = [22, 16], strides = [1, 1]} : vector<22x22xf32> to vector<22x16xf32>
      %c0_71 = arith.constant 0 : index
      %c5 = arith.constant 5 : index
      %c0_72 = arith.constant 0 : index
      %c0_73 = arith.constant 0 : index
      %77 = vector.load %arg8[%c0_71, %c5, %c0_72, %c0_73] : memref<2x7x22x16xf32, #tpu.memory_space<vmem>>, vector<1x1x22x16xf32>
      %78 = vector.shape_cast %77 : vector<1x1x22x16xf32> to vector<22x16xf32>
      %79 = vector.shape_cast %76 : vector<22x16xf32> to vector<1x1x22x16xf32>
      tpu.vector_store %arg8[%c0_71, %c5, %c0_72, %c0_73], %79 {strides = array<i32>} : memref<2x7x22x16xf32, #tpu.memory_space<vmem>>, vector<1x1x22x16xf32>,
      %80 = vector.extract_strided_slice %35 {offsets = [0, 5], sizes = [22, 16], strides = [1, 1]} : vector<22x22xf32> to vector<22x16xf32>
      %c1_74 = arith.constant 1 : index
      %c5_75 = arith.constant 5 : index
      %c0_76 = arith.constant 0 : index
      %c0_77 = arith.constant 0 : index
      %81 = vector.load %arg8[%c1_74, %c5_75, %c0_76, %c0_77] : memref<2x7x22x16xf32, #tpu.memory_space<vmem>>, vector<1x1x22x16xf32>
      %82 = vector.shape_cast %81 : vector<1x1x22x16xf32> to vector<22x16xf32>
      %83 = vector.shape_cast %80 : vector<22x16xf32> to vector<1x1x22x16xf32>
      tpu.vector_store %arg8[%c1_74, %c5_75, %c0_76, %c0_77], %83 {strides = array<i32>} : memref<2x7x22x16xf32, #tpu.memory_space<vmem>>, vector<1x1x22x16xf32>,
      %84 = vector.extract_strided_slice %33 {offsets = [0, 6], sizes = [22, 16], strides = [1, 1]} : vector<22x22xf32> to vector<22x16xf32>
      %c0_78 = arith.constant 0 : index
      %c6 = arith.constant 6 : index
      %c0_79 = arith.constant 0 : index
      %c0_80 = arith.constant 0 : index
      %85 = vector.load %arg8[%c0_78, %c6, %c0_79, %c0_80] : memref<2x7x22x16xf32, #tpu.memory_space<vmem>>, vector<1x1x22x16xf32>
      %86 = vector.shape_cast %85 : vector<1x1x22x16xf32> to vector<22x16xf32>
      %87 = vector.shape_cast %84 : vector<22x16xf32> to vector<1x1x22x16xf32>
      tpu.vector_store %arg8[%c0_78, %c6, %c0_79, %c0_80], %87 {strides = array<i32>} : memref<2x7x22x16xf32, #tpu.memory_space<vmem>>, vector<1x1x22x16xf32>,
      %88 = vector.extract_strided_slice %35 {offsets = [0, 6], sizes = [22, 16], strides = [1, 1]} : vector<22x22xf32> to vector<22x16xf32>
      %c1_81 = arith.constant 1 : index
      %c6_82 = arith.constant 6 : index
      %c0_83 = arith.constant 0 : index
      %c0_84 = arith.constant 0 : index
      %89 = vector.load %arg8[%c1_81, %c6_82, %c0_83, %c0_84] : memref<2x7x22x16xf32, #tpu.memory_space<vmem>>, vector<1x1x22x16xf32>
      %90 = vector.shape_cast %89 : vector<1x1x22x16xf32> to vector<22x16xf32>
      %91 = vector.shape_cast %88 : vector<22x16xf32> to vector<1x1x22x16xf32>
      tpu.vector_store %arg8[%c1_81, %c6_82, %c0_83, %c0_84], %91 {strides = array<i32>} : memref<2x7x22x16xf32, #tpu.memory_space<vmem>>, vector<1x1x22x16xf32>,
      %cst_85 = arith.constant 0.000000e+00 : f32
      %92 = vector.broadcast %cst_85 : f32 to vector<16x16xf32>
      %cst_86 = arith.constant 0.000000e+00 : f32
      %93 = vector.broadcast %cst_86 : f32 to vector<16x16xf32>
      %cst_87 = arith.constant 0.000000e+00 : f32
      %94 = vector.broadcast %cst_87 : f32 to vector<16x16xf32>
      %cst_88 = arith.constant 0.000000e+00 : f32
      %95 = vector.broadcast %cst_88 : f32 to vector<16x16xf32>
      %c0_89 = arith.constant 0 : index
      %c0_90 = arith.constant 0 : index
      %c0_91 = arith.constant 0 : index
      %c0_92 = arith.constant 0 : index
      %96 = vector.load %arg8[%c0_89, %c0_90, %c0_91, %c0_92] : memref<2x7x22x16xf32, #tpu.memory_space<vmem>>, vector<1x1x16x16xf32>
      %97 = vector.shape_cast %96 : vector<1x1x16x16xf32> to vector<16x16xf32>
      %c1_93 = arith.constant 1 : index
      %c0_94 = arith.constant 0 : index
      %c0_95 = arith.constant 0 : index
      %c0_96 = arith.constant 0 : index
      %98 = vector.load %arg8[%c1_93, %c0_94, %c0_95, %c0_96] : memref<2x7x22x16xf32, #tpu.memory_space<vmem>>, vector<1x1x16x16xf32>
      %99 = vector.shape_cast %98 : vector<1x1x16x16xf32> to vector<16x16xf32>
      %c0_97 = arith.constant 0 : index
      %100 = memref.load %arg3[%c0_97] : memref<98xf32, #tpu.memory_space<smem>>
      %c49 = arith.constant 49 : index
      %101 = memref.load %arg3[%c49] : memref<98xf32, #tpu.memory_space<smem>>
      %102 = vector.broadcast %100 : f32 to vector<16x16xf32>
      %103 = arith.mulf %102, %97 : vector<16x16xf32>
      %104 = vector.broadcast %101 : f32 to vector<16x16xf32>
      %105 = arith.mulf %104, %99 : vector<16x16xf32>
      %106 = arith.addf %103, %105 : vector<16x16xf32>
      %107 = arith.addf %92, %106 : vector<16x16xf32>
      %c0_98 = arith.constant 0 : index
      %c1_99 = arith.constant 1 : index
      %c0_100 = arith.constant 0 : index
      %c0_101 = arith.constant 0 : index
      %108 = vector.load %arg8[%c0_98, %c1_99, %c0_100, %c0_101] : memref<2x7x22x16xf32, #tpu.memory_space<vmem>>, vector<1x1x16x16xf32>
      %109 = vector.shape_cast %108 : vector<1x1x16x16xf32> to vector<16x16xf32>
      %c1_102 = arith.constant 1 : index
      %c1_103 = arith.constant 1 : index
      %c0_104 = arith.constant 0 : index
      %c0_105 = arith.constant 0 : index
      %110 = vector.load %arg8[%c1_102, %c1_103, %c0_104, %c0_105] : memref<2x7x22x16xf32, #tpu.memory_space<vmem>>, vector<1x1x16x16xf32>
      %111 = vector.shape_cast %110 : vector<1x1x16x16xf32> to vector<16x16xf32>
      %c1_106 = arith.constant 1 : index
      %112 = memref.load %arg3[%c1_106] : memref<98xf32, #tpu.memory_space<smem>>
      %c50 = arith.constant 50 : index
      %113 = memref.load %arg3[%c50] : memref<98xf32, #tpu.memory_space<smem>>
      %114 = vector.broadcast %112 : f32 to vector<16x16xf32>
      %115 = arith.mulf %114, %109 : vector<16x16xf32>
      %116 = vector.broadcast %113 : f32 to vector<16x16xf32>
      %117 = arith.mulf %116, %111 : vector<16x16xf32>
      %118 = arith.addf %115, %117 : vector<16x16xf32>
      %119 = arith.addf %93, %118 : vector<16x16xf32>
      %c0_107 = arith.constant 0 : index
      %c2_108 = arith.constant 2 : index
      %c0_109 = arith.constant 0 : index
      %c0_110 = arith.constant 0 : index
      %120 = vector.load %arg8[%c0_107, %c2_108, %c0_109, %c0_110] : memref<2x7x22x16xf32, #tpu.memory_space<vmem>>, vector<1x1x16x16xf32>
      %121 = vector.shape_cast %120 : vector<1x1x16x16xf32> to vector<16x16xf32>
      %c1_111 = arith.constant 1 : index
      %c2_112 = arith.constant 2 : index
      %c0_113 = arith.constant 0 : index
      %c0_114 = arith.constant 0 : index
      %122 = vector.load %arg8[%c1_111, %c2_112, %c0_113, %c0_114] : memref<2x7x22x16xf32, #tpu.memory_space<vmem>>, vector<1x1x16x16xf32>
      %123 = vector.shape_cast %122 : vector<1x1x16x16xf32> to vector<16x16xf32>
      %c2_115 = arith.constant 2 : index
      %124 = memref.load %arg3[%c2_115] : memref<98xf32, #tpu.memory_space<smem>>
      %c51 = arith.constant 51 : index
      %125 = memref.load %arg3[%c51] : memref<98xf32, #tpu.memory_space<smem>>
      %126 = vector.broadcast %124 : f32 to vector<16x16xf32>
      %127 = arith.mulf %126, %121 : vector<16x16xf32>
      %128 = vector.broadcast %125 : f32 to vector<16x16xf32>
      %129 = arith.mulf %128, %123 : vector<16x16xf32>
      %130 = arith.addf %127, %129 : vector<16x16xf32>
      %131 = arith.addf %94, %130 : vector<16x16xf32>
      %c0_116 = arith.constant 0 : index
      %c3_117 = arith.constant 3 : index
      %c0_118 = arith.constant 0 : index
      %c0_119 = arith.constant 0 : index
      %132 = vector.load %arg8[%c0_116, %c3_117, %c0_118, %c0_119] : memref<2x7x22x16xf32, #tpu.memory_space<vmem>>, vector<1x1x16x16xf32>
      %133 = vector.shape_cast %132 : vector<1x1x16x16xf32> to vector<16x16xf32>
      %c1_120 = arith.constant 1 : index
      %c3_121 = arith.constant 3 : index
      %c0_122 = arith.constant 0 : index
      %c0_123 = arith.constant 0 : index
      %134 = vector.load %arg8[%c1_120, %c3_121, %c0_122, %c0_123] : memref<2x7x22x16xf32, #tpu.memory_space<vmem>>, vector<1x1x16x16xf32>
      %135 = vector.shape_cast %134 : vector<1x1x16x16xf32> to vector<16x16xf32>
      %c3_124 = arith.constant 3 : index
      %136 = memref.load %arg3[%c3_124] : memref<98xf32, #tpu.memory_space<smem>>
      %c52 = arith.constant 52 : index
      %137 = memref.load %arg3[%c52] : memref<98xf32, #tpu.memory_space<smem>>
      %138 = vector.broadcast %136 : f32 to vector<16x16xf32>
      %139 = arith.mulf %138, %133 : vector<16x16xf32>
      %140 = vector.broadcast %137 : f32 to vector<16x16xf32>
      %141 = arith.mulf %140, %135 : vector<16x16xf32>
      %142 = arith.addf %139, %141 : vector<16x16xf32>
      %143 = arith.addf %95, %142 : vector<16x16xf32>
      %c0_125 = arith.constant 0 : index
      %c4_126 = arith.constant 4 : index
      %c0_127 = arith.constant 0 : index
      %c0_128 = arith.constant 0 : index
      %144 = vector.load %arg8[%c0_125, %c4_126, %c0_127, %c0_128] : memref<2x7x22x16xf32, #tpu.memory_space<vmem>>, vector<1x1x16x16xf32>
      %145 = vector.shape_cast %144 : vector<1x1x16x16xf32> to vector<16x16xf32>
      %c1_129 = arith.constant 1 : index
      %c4_130 = arith.constant 4 : index
      %c0_131 = arith.constant 0 : index
      %c0_132 = arith.constant 0 : index
      %146 = vector.load %arg8[%c1_129, %c4_130, %c0_131, %c0_132] : memref<2x7x22x16xf32, #tpu.memory_space<vmem>>, vector<1x1x16x16xf32>
      %147 = vector.shape_cast %146 : vector<1x1x16x16xf32> to vector<16x16xf32>
      %c4_133 = arith.constant 4 : index
      %148 = memref.load %arg3[%c4_133] : memref<98xf32, #tpu.memory_space<smem>>
      %c53 = arith.constant 53 : index
      %149 = memref.load %arg3[%c53] : memref<98xf32, #tpu.memory_space<smem>>
      %150 = vector.broadcast %148 : f32 to vector<16x16xf32>
      %151 = arith.mulf %150, %145 : vector<16x16xf32>
      %152 = vector.broadcast %149 : f32 to vector<16x16xf32>
      %153 = arith.mulf %152, %147 : vector<16x16xf32>
      %154 = arith.addf %151, %153 : vector<16x16xf32>
      %155 = arith.addf %107, %154 : vector<16x16xf32>
      %c0_134 = arith.constant 0 : index
      %c5_135 = arith.constant 5 : index
      %c0_136 = arith.constant 0 : index
      %c0_137 = arith.constant 0 : index
      %156 = vector.load %arg8[%c0_134, %c5_135, %c0_136, %c0_137] : memref<2x7x22x16xf32, #tpu.memory_space<vmem>>, vector<1x1x16x16xf32>
      %157 = vector.shape_cast %156 : vector<1x1x16x16xf32> to vector<16x16xf32>
      %c1_138 = arith.constant 1 : index
      %c5_139 = arith.constant 5 : index
      %c0_140 = arith.constant 0 : index
      %c0_141 = arith.constant 0 : index
      %158 = vector.load %arg8[%c1_138, %c5_139, %c0_140, %c0_141] : memref<2x7x22x16xf32, #tpu.memory_space<vmem>>, vector<1x1x16x16xf32>
      %159 = vector.shape_cast %158 : vector<1x1x16x16xf32> to vector<16x16xf32>
      %c5_142 = arith.constant 5 : index
      %160 = memref.load %arg3[%c5_142] : memref<98xf32, #tpu.memory_space<smem>>
      %c54 = arith.constant 54 : index
      %161 = memref.load %arg3[%c54] : memref<98xf32, #tpu.memory_space<smem>>
      %162 = vector.broadcast %160 : f32 to vector<16x16xf32>
      %163 = arith.mulf %162, %157 : vector<16x16xf32>
      %164 = vector.broadcast %161 : f32 to vector<16x16xf32>
      %165 = arith.mulf %164, %159 : vector<16x16xf32>
      %166 = arith.addf %163, %165 : vector<16x16xf32>
      %167 = arith.addf %119, %166 : vector<16x16xf32>
      %c0_143 = arith.constant 0 : index
      %c6_144 = arith.constant 6 : index
      %c0_145 = arith.constant 0 : index
      %c0_146 = arith.constant 0 : index
      %168 = vector.load %arg8[%c0_143, %c6_144, %c0_145, %c0_146] : memref<2x7x22x16xf32, #tpu.memory_space<vmem>>, vector<1x1x16x16xf32>
      %169 = vector.shape_cast %168 : vector<1x1x16x16xf32> to vector<16x16xf32>
      %c1_147 = arith.constant 1 : index
      %c6_148 = arith.constant 6 : index
      %c0_149 = arith.constant 0 : index
      %c0_150 = arith.constant 0 : index
      %170 = vector.load %arg8[%c1_147, %c6_148, %c0_149, %c0_150] : memref<2x7x22x16xf32, #tpu.memory_space<vmem>>, vector<1x1x16x16xf32>
      %171 = vector.shape_cast %170 : vector<1x1x16x16xf32> to vector<16x16xf32>
      %c6_151 = arith.constant 6 : index
      %172 = memref.load %arg3[%c6_151] : memref<98xf32, #tpu.memory_space<smem>>
      %c55 = arith.constant 55 : index
      %173 = memref.load %arg3[%c55] : memref<98xf32, #tpu.memory_space<smem>>
      %174 = vector.broadcast %172 : f32 to vector<16x16xf32>
      %175 = arith.mulf %174, %169 : vector<16x16xf32>
      %176 = vector.broadcast %173 : f32 to vector<16x16xf32>
      %177 = arith.mulf %176, %171 : vector<16x16xf32>
      %178 = arith.addf %175, %177 : vector<16x16xf32>
      %179 = arith.addf %131, %178 : vector<16x16xf32>
      %c0_152 = arith.constant 0 : index
      %c0_153 = arith.constant 0 : index
      %c1_154 = arith.constant 1 : index
      %c0_155 = arith.constant 0 : index
      %180 = vector.load %arg8[%c0_152, %c0_153, %c1_154, %c0_155] : memref<2x7x22x16xf32, #tpu.memory_space<vmem>>, vector<1x1x16x16xf32>
      %181 = vector.shape_cast %180 : vector<1x1x16x16xf32> to vector<16x16xf32>
      %c1_156 = arith.constant 1 : index
      %c0_157 = arith.constant 0 : index
      %c1_158 = arith.constant 1 : index
      %c0_159 = arith.constant 0 : index
      %182 = vector.load %arg8[%c1_156, %c0_157, %c1_158, %c0_159] : memref<2x7x22x16xf32, #tpu.memory_space<vmem>>, vector<1x1x16x16xf32>
      %183 = vector.shape_cast %182 : vector<1x1x16x16xf32> to vector<16x16xf32>
      %c7 = arith.constant 7 : index
      %184 = memref.load %arg3[%c7] : memref<98xf32, #tpu.memory_space<smem>>
      %c56 = arith.constant 56 : index
      %185 = memref.load %arg3[%c56] : memref<98xf32, #tpu.memory_space<smem>>
      %186 = vector.broadcast %184 : f32 to vector<16x16xf32>
      %187 = arith.mulf %186, %181 : vector<16x16xf32>
      %188 = vector.broadcast %185 : f32 to vector<16x16xf32>
      %189 = arith.mulf %188, %183 : vector<16x16xf32>
      %190 = arith.addf %187, %189 : vector<16x16xf32>
      %191 = arith.addf %143, %190 : vector<16x16xf32>
      %c0_160 = arith.constant 0 : index
      %c1_161 = arith.constant 1 : index
      %c1_162 = arith.constant 1 : index
      %c0_163 = arith.constant 0 : index
      %192 = vector.load %arg8[%c0_160, %c1_161, %c1_162, %c0_163] : memref<2x7x22x16xf32, #tpu.memory_space<vmem>>, vector<1x1x16x16xf32>
      %193 = vector.shape_cast %192 : vector<1x1x16x16xf32> to vector<16x16xf32>
      %c1_164 = arith.constant 1 : index
      %c1_165 = arith.constant 1 : index
      %c1_166 = arith.constant 1 : index
      %c0_167 = arith.constant 0 : index
      %194 = vector.load %arg8[%c1_164, %c1_165, %c1_166, %c0_167] : memref<2x7x22x16xf32, #tpu.memory_space<vmem>>, vector<1x1x16x16xf32>
      %195 = vector.shape_cast %194 : vector<1x1x16x16xf32> to vector<16x16xf32>
      %c8 = arith.constant 8 : index
      %196 = memref.load %arg3[%c8] : memref<98xf32, #tpu.memory_space<smem>>
      %c57 = arith.constant 57 : index
      %197 = memref.load %arg3[%c57] : memref<98xf32, #tpu.memory_space<smem>>
      %198 = vector.broadcast %196 : f32 to vector<16x16xf32>
      %199 = arith.mulf %198, %193 : vector<16x16xf32>
      %200 = vector.broadcast %197 : f32 to vector<16x16xf32>
      %201 = arith.mulf %200, %195 : vector<16x16xf32>
      %202 = arith.addf %199, %201 : vector<16x16xf32>
      %203 = arith.addf %155, %202 : vector<16x16xf32>
      %c0_168 = arith.constant 0 : index
      %c2_169 = arith.constant 2 : index
      %c1_170 = arith.constant 1 : index
      %c0_171 = arith.constant 0 : index
      %204 = vector.load %arg8[%c0_168, %c2_169, %c1_170, %c0_171] : memref<2x7x22x16xf32, #tpu.memory_space<vmem>>, vector<1x1x16x16xf32>
      %205 = vector.shape_cast %204 : vector<1x1x16x16xf32> to vector<16x16xf32>
      %c1_172 = arith.constant 1 : index
      %c2_173 = arith.constant 2 : index
      %c1_174 = arith.constant 1 : index
      %c0_175 = arith.constant 0 : index
      %206 = vector.load %arg8[%c1_172, %c2_173, %c1_174, %c0_175] : memref<2x7x22x16xf32, #tpu.memory_space<vmem>>, vector<1x1x16x16xf32>
      %207 = vector.shape_cast %206 : vector<1x1x16x16xf32> to vector<16x16xf32>
      %c9 = arith.constant 9 : index
      %208 = memref.load %arg3[%c9] : memref<98xf32, #tpu.memory_space<smem>>
      %c58 = arith.constant 58 : index
      %209 = memref.load %arg3[%c58] : memref<98xf32, #tpu.memory_space<smem>>
      %210 = vector.broadcast %208 : f32 to vector<16x16xf32>
      %211 = arith.mulf %210, %205 : vector<16x16xf32>
      %212 = vector.broadcast %209 : f32 to vector<16x16xf32>
      %213 = arith.mulf %212, %207 : vector<16x16xf32>
      %214 = arith.addf %211, %213 : vector<16x16xf32>
      %215 = arith.addf %167, %214 : vector<16x16xf32>
      %c0_176 = arith.constant 0 : index
      %c3_177 = arith.constant 3 : index
      %c1_178 = arith.constant 1 : index
      %c0_179 = arith.constant 0 : index
      %216 = vector.load %arg8[%c0_176, %c3_177, %c1_178, %c0_179] : memref<2x7x22x16xf32, #tpu.memory_space<vmem>>, vector<1x1x16x16xf32>
      %217 = vector.shape_cast %216 : vector<1x1x16x16xf32> to vector<16x16xf32>
      %c1_180 = arith.constant 1 : index
      %c3_181 = arith.constant 3 : index
      %c1_182 = arith.constant 1 : index
      %c0_183 = arith.constant 0 : index
      %218 = vector.load %arg8[%c1_180, %c3_181, %c1_182, %c0_183] : memref<2x7x22x16xf32, #tpu.memory_space<vmem>>, vector<1x1x16x16xf32>
      %219 = vector.shape_cast %218 : vector<1x1x16x16xf32> to vector<16x16xf32>
      %c10 = arith.constant 10 : index
      %220 = memref.load %arg3[%c10] : memref<98xf32, #tpu.memory_space<smem>>
      %c59 = arith.constant 59 : index
      %221 = memref.load %arg3[%c59] : memref<98xf32, #tpu.memory_space<smem>>
      %222 = vector.broadcast %220 : f32 to vector<16x16xf32>
      %223 = arith.mulf %222, %217 : vector<16x16xf32>
      %224 = vector.broadcast %221 : f32 to vector<16x16xf32>
      %225 = arith.mulf %224, %219 : vector<16x16xf32>
      %226 = arith.addf %223, %225 : vector<16x16xf32>
      %227 = arith.addf %179, %226 : vector<16x16xf32>
      %c0_184 = arith.constant 0 : index
      %c4_185 = arith.constant 4 : index
      %c1_186 = arith.constant 1 : index
      %c0_187 = arith.constant 0 : index
      %228 = vector.load %arg8[%c0_184, %c4_185, %c1_186, %c0_187] : memref<2x7x22x16xf32, #tpu.memory_space<vmem>>, vector<1x1x16x16xf32>
      %229 = vector.shape_cast %228 : vector<1x1x16x16xf32> to vector<16x16xf32>
      %c1_188 = arith.constant 1 : index
      %c4_189 = arith.constant 4 : index
      %c1_190 = arith.constant 1 : index
      %c0_191 = arith.constant 0 : index
      %230 = vector.load %arg8[%c1_188, %c4_189, %c1_190, %c0_191] : memref<2x7x22x16xf32, #tpu.memory_space<vmem>>, vector<1x1x16x16xf32>
      %231 = vector.shape_cast %230 : vector<1x1x16x16xf32> to vector<16x16xf32>
      %c11 = arith.constant 11 : index
      %232 = memref.load %arg3[%c11] : memref<98xf32, #tpu.memory_space<smem>>
      %c60 = arith.constant 60 : index
      %233 = memref.load %arg3[%c60] : memref<98xf32, #tpu.memory_space<smem>>
      %234 = vector.broadcast %232 : f32 to vector<16x16xf32>
      %235 = arith.mulf %234, %229 : vector<16x16xf32>
      %236 = vector.broadcast %233 : f32 to vector<16x16xf32>
      %237 = arith.mulf %236, %231 : vector<16x16xf32>
      %238 = arith.addf %235, %237 : vector<16x16xf32>
      %239 = arith.addf %191, %238 : vector<16x16xf32>
      %c0_192 = arith.constant 0 : index
      %c5_193 = arith.constant 5 : index
      %c1_194 = arith.constant 1 : index
      %c0_195 = arith.constant 0 : index
      %240 = vector.load %arg8[%c0_192, %c5_193, %c1_194, %c0_195] : memref<2x7x22x16xf32, #tpu.memory_space<vmem>>, vector<1x1x16x16xf32>
      %241 = vector.shape_cast %240 : vector<1x1x16x16xf32> to vector<16x16xf32>
      %c1_196 = arith.constant 1 : index
      %c5_197 = arith.constant 5 : index
      %c1_198 = arith.constant 1 : index
      %c0_199 = arith.constant 0 : index
      %242 = vector.load %arg8[%c1_196, %c5_197, %c1_198, %c0_199] : memref<2x7x22x16xf32, #tpu.memory_space<vmem>>, vector<1x1x16x16xf32>
      %243 = vector.shape_cast %242 : vector<1x1x16x16xf32> to vector<16x16xf32>
      %c12 = arith.constant 12 : index
      %244 = memref.load %arg3[%c12] : memref<98xf32, #tpu.memory_space<smem>>
      %c61 = arith.constant 61 : index
      %245 = memref.load %arg3[%c61] : memref<98xf32, #tpu.memory_space<smem>>
      %246 = vector.broadcast %244 : f32 to vector<16x16xf32>
      %247 = arith.mulf %246, %241 : vector<16x16xf32>
      %248 = vector.broadcast %245 : f32 to vector<16x16xf32>
      %249 = arith.mulf %248, %243 : vector<16x16xf32>
      %250 = arith.addf %247, %249 : vector<16x16xf32>
      %251 = arith.addf %203, %250 : vector<16x16xf32>
      %c0_200 = arith.constant 0 : index
      %c6_201 = arith.constant 6 : index
      %c1_202 = arith.constant 1 : index
      %c0_203 = arith.constant 0 : index
      %252 = vector.load %arg8[%c0_200, %c6_201, %c1_202, %c0_203] : memref<2x7x22x16xf32, #tpu.memory_space<vmem>>, vector<1x1x16x16xf32>
      %253 = vector.shape_cast %252 : vector<1x1x16x16xf32> to vector<16x16xf32>
      %c1_204 = arith.constant 1 : index
      %c6_205 = arith.constant 6 : index
      %c1_206 = arith.constant 1 : index
      %c0_207 = arith.constant 0 : index
      %254 = vector.load %arg8[%c1_204, %c6_205, %c1_206, %c0_207] : memref<2x7x22x16xf32, #tpu.memory_space<vmem>>, vector<1x1x16x16xf32>
      %255 = vector.shape_cast %254 : vector<1x1x16x16xf32> to vector<16x16xf32>
      %c13 = arith.constant 13 : index
      %256 = memref.load %arg3[%c13] : memref<98xf32, #tpu.memory_space<smem>>
      %c62 = arith.constant 62 : index
      %257 = memref.load %arg3[%c62] : memref<98xf32, #tpu.memory_space<smem>>
      %258 = vector.broadcast %256 : f32 to vector<16x16xf32>
      %259 = arith.mulf %258, %253 : vector<16x16xf32>
      %260 = vector.broadcast %257 : f32 to vector<16x16xf32>
      %261 = arith.mulf %260, %255 : vector<16x16xf32>
      %262 = arith.addf %259, %261 : vector<16x16xf32>
      %263 = arith.addf %215, %262 : vector<16x16xf32>
      %c0_208 = arith.constant 0 : index
      %c0_209 = arith.constant 0 : index
      %c2_210 = arith.constant 2 : index
      %c0_211 = arith.constant 0 : index
      %264 = vector.load %arg8[%c0_208, %c0_209, %c2_210, %c0_211] : memref<2x7x22x16xf32, #tpu.memory_space<vmem>>, vector<1x1x16x16xf32>
      %265 = vector.shape_cast %264 : vector<1x1x16x16xf32> to vector<16x16xf32>
      %c1_212 = arith.constant 1 : index
      %c0_213 = arith.constant 0 : index
      %c2_214 = arith.constant 2 : index
      %c0_215 = arith.constant 0 : index
      %266 = vector.load %arg8[%c1_212, %c0_213, %c2_214, %c0_215] : memref<2x7x22x16xf32, #tpu.memory_space<vmem>>, vector<1x1x16x16xf32>
      %267 = vector.shape_cast %266 : vector<1x1x16x16xf32> to vector<16x16xf32>
      %c14 = arith.constant 14 : index
      %268 = memref.load %arg3[%c14] : memref<98xf32, #tpu.memory_space<smem>>
      %c63 = arith.constant 63 : index
      %269 = memref.load %arg3[%c63] : memref<98xf32, #tpu.memory_space<smem>>
      %270 = vector.broadcast %268 : f32 to vector<16x16xf32>
      %271 = arith.mulf %270, %265 : vector<16x16xf32>
      %272 = vector.broadcast %269 : f32 to vector<16x16xf32>
      %273 = arith.mulf %272, %267 : vector<16x16xf32>
      %274 = arith.addf %271, %273 : vector<16x16xf32>
      %275 = arith.addf %227, %274 : vector<16x16xf32>
      %c0_216 = arith.constant 0 : index
      %c1_217 = arith.constant 1 : index
      %c2_218 = arith.constant 2 : index
      %c0_219 = arith.constant 0 : index
      %276 = vector.load %arg8[%c0_216, %c1_217, %c2_218, %c0_219] : memref<2x7x22x16xf32, #tpu.memory_space<vmem>>, vector<1x1x16x16xf32>
      %277 = vector.shape_cast %276 : vector<1x1x16x16xf32> to vector<16x16xf32>
      %c1_220 = arith.constant 1 : index
      %c1_221 = arith.constant 1 : index
      %c2_222 = arith.constant 2 : index
      %c0_223 = arith.constant 0 : index
      %278 = vector.load %arg8[%c1_220, %c1_221, %c2_222, %c0_223] : memref<2x7x22x16xf32, #tpu.memory_space<vmem>>, vector<1x1x16x16xf32>
      %279 = vector.shape_cast %278 : vector<1x1x16x16xf32> to vector<16x16xf32>
      %c15 = arith.constant 15 : index
      %280 = memref.load %arg3[%c15] : memref<98xf32, #tpu.memory_space<smem>>
      %c64 = arith.constant 64 : index
      %281 = memref.load %arg3[%c64] : memref<98xf32, #tpu.memory_space<smem>>
      %282 = vector.broadcast %280 : f32 to vector<16x16xf32>
      %283 = arith.mulf %282, %277 : vector<16x16xf32>
      %284 = vector.broadcast %281 : f32 to vector<16x16xf32>
      %285 = arith.mulf %284, %279 : vector<16x16xf32>
      %286 = arith.addf %283, %285 : vector<16x16xf32>
      %287 = arith.addf %239, %286 : vector<16x16xf32>
      %c0_224 = arith.constant 0 : index
      %c2_225 = arith.constant 2 : index
      %c2_226 = arith.constant 2 : index
      %c0_227 = arith.constant 0 : index
      %288 = vector.load %arg8[%c0_224, %c2_225, %c2_226, %c0_227] : memref<2x7x22x16xf32, #tpu.memory_space<vmem>>, vector<1x1x16x16xf32>
      %289 = vector.shape_cast %288 : vector<1x1x16x16xf32> to vector<16x16xf32>
      %c1_228 = arith.constant 1 : index
      %c2_229 = arith.constant 2 : index
      %c2_230 = arith.constant 2 : index
      %c0_231 = arith.constant 0 : index
      %290 = vector.load %arg8[%c1_228, %c2_229, %c2_230, %c0_231] : memref<2x7x22x16xf32, #tpu.memory_space<vmem>>, vector<1x1x16x16xf32>
      %291 = vector.shape_cast %290 : vector<1x1x16x16xf32> to vector<16x16xf32>
      %c16 = arith.constant 16 : index
      %292 = memref.load %arg3[%c16] : memref<98xf32, #tpu.memory_space<smem>>
      %c65 = arith.constant 65 : index
      %293 = memref.load %arg3[%c65] : memref<98xf32, #tpu.memory_space<smem>>
      %294 = vector.broadcast %292 : f32 to vector<16x16xf32>
      %295 = arith.mulf %294, %289 : vector<16x16xf32>
      %296 = vector.broadcast %293 : f32 to vector<16x16xf32>
      %297 = arith.mulf %296, %291 : vector<16x16xf32>
      %298 = arith.addf %295, %297 : vector<16x16xf32>
      %299 = arith.addf %251, %298 : vector<16x16xf32>
      %c0_232 = arith.constant 0 : index
      %c3_233 = arith.constant 3 : index
      %c2_234 = arith.constant 2 : index
      %c0_235 = arith.constant 0 : index
      %300 = vector.load %arg8[%c0_232, %c3_233, %c2_234, %c0_235] : memref<2x7x22x16xf32, #tpu.memory_space<vmem>>, vector<1x1x16x16xf32>
      %301 = vector.shape_cast %300 : vector<1x1x16x16xf32> to vector<16x16xf32>
      %c1_236 = arith.constant 1 : index
      %c3_237 = arith.constant 3 : index
      %c2_238 = arith.constant 2 : index
      %c0_239 = arith.constant 0 : index
      %302 = vector.load %arg8[%c1_236, %c3_237, %c2_238, %c0_239] : memref<2x7x22x16xf32, #tpu.memory_space<vmem>>, vector<1x1x16x16xf32>
      %303 = vector.shape_cast %302 : vector<1x1x16x16xf32> to vector<16x16xf32>
      %c17 = arith.constant 17 : index
      %304 = memref.load %arg3[%c17] : memref<98xf32, #tpu.memory_space<smem>>
      %c66 = arith.constant 66 : index
      %305 = memref.load %arg3[%c66] : memref<98xf32, #tpu.memory_space<smem>>
      %306 = vector.broadcast %304 : f32 to vector<16x16xf32>
      %307 = arith.mulf %306, %301 : vector<16x16xf32>
      %308 = vector.broadcast %305 : f32 to vector<16x16xf32>
      %309 = arith.mulf %308, %303 : vector<16x16xf32>
      %310 = arith.addf %307, %309 : vector<16x16xf32>
      %311 = arith.addf %263, %310 : vector<16x16xf32>
      %c0_240 = arith.constant 0 : index
      %c4_241 = arith.constant 4 : index
      %c2_242 = arith.constant 2 : index
      %c0_243 = arith.constant 0 : index
      %312 = vector.load %arg8[%c0_240, %c4_241, %c2_242, %c0_243] : memref<2x7x22x16xf32, #tpu.memory_space<vmem>>, vector<1x1x16x16xf32>
      %313 = vector.shape_cast %312 : vector<1x1x16x16xf32> to vector<16x16xf32>
      %c1_244 = arith.constant 1 : index
      %c4_245 = arith.constant 4 : index
      %c2_246 = arith.constant 2 : index
      %c0_247 = arith.constant 0 : index
      %314 = vector.load %arg8[%c1_244, %c4_245, %c2_246, %c0_247] : memref<2x7x22x16xf32, #tpu.memory_space<vmem>>, vector<1x1x16x16xf32>
      %315 = vector.shape_cast %314 : vector<1x1x16x16xf32> to vector<16x16xf32>
      %c18 = arith.constant 18 : index
      %316 = memref.load %arg3[%c18] : memref<98xf32, #tpu.memory_space<smem>>
      %c67 = arith.constant 67 : index
      %317 = memref.load %arg3[%c67] : memref<98xf32, #tpu.memory_space<smem>>
      %318 = vector.broadcast %316 : f32 to vector<16x16xf32>
      %319 = arith.mulf %318, %313 : vector<16x16xf32>
      %320 = vector.broadcast %317 : f32 to vector<16x16xf32>
      %321 = arith.mulf %320, %315 : vector<16x16xf32>
      %322 = arith.addf %319, %321 : vector<16x16xf32>
      %323 = arith.addf %275, %322 : vector<16x16xf32>
      %c0_248 = arith.constant 0 : index
      %c5_249 = arith.constant 5 : index
      %c2_250 = arith.constant 2 : index
      %c0_251 = arith.constant 0 : index
      %324 = vector.load %arg8[%c0_248, %c5_249, %c2_250, %c0_251] : memref<2x7x22x16xf32, #tpu.memory_space<vmem>>, vector<1x1x16x16xf32>
      %325 = vector.shape_cast %324 : vector<1x1x16x16xf32> to vector<16x16xf32>
      %c1_252 = arith.constant 1 : index
      %c5_253 = arith.constant 5 : index
      %c2_254 = arith.constant 2 : index
      %c0_255 = arith.constant 0 : index
      %326 = vector.load %arg8[%c1_252, %c5_253, %c2_254, %c0_255] : memref<2x7x22x16xf32, #tpu.memory_space<vmem>>, vector<1x1x16x16xf32>
      %327 = vector.shape_cast %326 : vector<1x1x16x16xf32> to vector<16x16xf32>
      %c19 = arith.constant 19 : index
      %328 = memref.load %arg3[%c19] : memref<98xf32, #tpu.memory_space<smem>>
      %c68 = arith.constant 68 : index
      %329 = memref.load %arg3[%c68] : memref<98xf32, #tpu.memory_space<smem>>
      %330 = vector.broadcast %328 : f32 to vector<16x16xf32>
      %331 = arith.mulf %330, %325 : vector<16x16xf32>
      %332 = vector.broadcast %329 : f32 to vector<16x16xf32>
      %333 = arith.mulf %332, %327 : vector<16x16xf32>
      %334 = arith.addf %331, %333 : vector<16x16xf32>
      %335 = arith.addf %287, %334 : vector<16x16xf32>
      %c0_256 = arith.constant 0 : index
      %c6_257 = arith.constant 6 : index
      %c2_258 = arith.constant 2 : index
      %c0_259 = arith.constant 0 : index
      %336 = vector.load %arg8[%c0_256, %c6_257, %c2_258, %c0_259] : memref<2x7x22x16xf32, #tpu.memory_space<vmem>>, vector<1x1x16x16xf32>
      %337 = vector.shape_cast %336 : vector<1x1x16x16xf32> to vector<16x16xf32>
      %c1_260 = arith.constant 1 : index
      %c6_261 = arith.constant 6 : index
      %c2_262 = arith.constant 2 : index
      %c0_263 = arith.constant 0 : index
      %338 = vector.load %arg8[%c1_260, %c6_261, %c2_262, %c0_263] : memref<2x7x22x16xf32, #tpu.memory_space<vmem>>, vector<1x1x16x16xf32>
      %339 = vector.shape_cast %338 : vector<1x1x16x16xf32> to vector<16x16xf32>
      %c20 = arith.constant 20 : index
      %340 = memref.load %arg3[%c20] : memref<98xf32, #tpu.memory_space<smem>>
      %c69 = arith.constant 69 : index
      %341 = memref.load %arg3[%c69] : memref<98xf32, #tpu.memory_space<smem>>
      %342 = vector.broadcast %340 : f32 to vector<16x16xf32>
      %343 = arith.mulf %342, %337 : vector<16x16xf32>
      %344 = vector.broadcast %341 : f32 to vector<16x16xf32>
      %345 = arith.mulf %344, %339 : vector<16x16xf32>
      %346 = arith.addf %343, %345 : vector<16x16xf32>
      %347 = arith.addf %299, %346 : vector<16x16xf32>
      %c0_264 = arith.constant 0 : index
      %c0_265 = arith.constant 0 : index
      %c3_266 = arith.constant 3 : index
      %c0_267 = arith.constant 0 : index
      %348 = vector.load %arg8[%c0_264, %c0_265, %c3_266, %c0_267] : memref<2x7x22x16xf32, #tpu.memory_space<vmem>>, vector<1x1x16x16xf32>
      %349 = vector.shape_cast %348 : vector<1x1x16x16xf32> to vector<16x16xf32>
      %c1_268 = arith.constant 1 : index
      %c0_269 = arith.constant 0 : index
      %c3_270 = arith.constant 3 : index
      %c0_271 = arith.constant 0 : index
      %350 = vector.load %arg8[%c1_268, %c0_269, %c3_270, %c0_271] : memref<2x7x22x16xf32, #tpu.memory_space<vmem>>, vector<1x1x16x16xf32>
      %351 = vector.shape_cast %350 : vector<1x1x16x16xf32> to vector<16x16xf32>
      %c21 = arith.constant 21 : index
      %352 = memref.load %arg3[%c21] : memref<98xf32, #tpu.memory_space<smem>>
      %c70 = arith.constant 70 : index
      %353 = memref.load %arg3[%c70] : memref<98xf32, #tpu.memory_space<smem>>
      %354 = vector.broadcast %352 : f32 to vector<16x16xf32>
      %355 = arith.mulf %354, %349 : vector<16x16xf32>
      %356 = vector.broadcast %353 : f32 to vector<16x16xf32>
      %357 = arith.mulf %356, %351 : vector<16x16xf32>
      %358 = arith.addf %355, %357 : vector<16x16xf32>
      %359 = arith.addf %311, %358 : vector<16x16xf32>
      %c0_272 = arith.constant 0 : index
      %c1_273 = arith.constant 1 : index
      %c3_274 = arith.constant 3 : index
      %c0_275 = arith.constant 0 : index
      %360 = vector.load %arg8[%c0_272, %c1_273, %c3_274, %c0_275] : memref<2x7x22x16xf32, #tpu.memory_space<vmem>>, vector<1x1x16x16xf32>
      %361 = vector.shape_cast %360 : vector<1x1x16x16xf32> to vector<16x16xf32>
      %c1_276 = arith.constant 1 : index
      %c1_277 = arith.constant 1 : index
      %c3_278 = arith.constant 3 : index
      %c0_279 = arith.constant 0 : index
      %362 = vector.load %arg8[%c1_276, %c1_277, %c3_278, %c0_279] : memref<2x7x22x16xf32, #tpu.memory_space<vmem>>, vector<1x1x16x16xf32>
      %363 = vector.shape_cast %362 : vector<1x1x16x16xf32> to vector<16x16xf32>
      %c22 = arith.constant 22 : index
      %364 = memref.load %arg3[%c22] : memref<98xf32, #tpu.memory_space<smem>>
      %c71 = arith.constant 71 : index
      %365 = memref.load %arg3[%c71] : memref<98xf32, #tpu.memory_space<smem>>
      %366 = vector.broadcast %364 : f32 to vector<16x16xf32>
      %367 = arith.mulf %366, %361 : vector<16x16xf32>
      %368 = vector.broadcast %365 : f32 to vector<16x16xf32>
      %369 = arith.mulf %368, %363 : vector<16x16xf32>
      %370 = arith.addf %367, %369 : vector<16x16xf32>
      %371 = arith.addf %323, %370 : vector<16x16xf32>
      %c0_280 = arith.constant 0 : index
      %c2_281 = arith.constant 2 : index
      %c3_282 = arith.constant 3 : index
      %c0_283 = arith.constant 0 : index
      %372 = vector.load %arg8[%c0_280, %c2_281, %c3_282, %c0_283] : memref<2x7x22x16xf32, #tpu.memory_space<vmem>>, vector<1x1x16x16xf32>
      %373 = vector.shape_cast %372 : vector<1x1x16x16xf32> to vector<16x16xf32>
      %c1_284 = arith.constant 1 : index
      %c2_285 = arith.constant 2 : index
      %c3_286 = arith.constant 3 : index
      %c0_287 = arith.constant 0 : index
      %374 = vector.load %arg8[%c1_284, %c2_285, %c3_286, %c0_287] : memref<2x7x22x16xf32, #tpu.memory_space<vmem>>, vector<1x1x16x16xf32>
      %375 = vector.shape_cast %374 : vector<1x1x16x16xf32> to vector<16x16xf32>
      %c23 = arith.constant 23 : index
      %376 = memref.load %arg3[%c23] : memref<98xf32, #tpu.memory_space<smem>>
      %c72 = arith.constant 72 : index
      %377 = memref.load %arg3[%c72] : memref<98xf32, #tpu.memory_space<smem>>
      %378 = vector.broadcast %376 : f32 to vector<16x16xf32>
      %379 = arith.mulf %378, %373 : vector<16x16xf32>
      %380 = vector.broadcast %377 : f32 to vector<16x16xf32>
      %381 = arith.mulf %380, %375 : vector<16x16xf32>
      %382 = arith.addf %379, %381 : vector<16x16xf32>
      %383 = arith.addf %335, %382 : vector<16x16xf32>
      %c0_288 = arith.constant 0 : index
      %c3_289 = arith.constant 3 : index
      %c3_290 = arith.constant 3 : index
      %c0_291 = arith.constant 0 : index
      %384 = vector.load %arg8[%c0_288, %c3_289, %c3_290, %c0_291] : memref<2x7x22x16xf32, #tpu.memory_space<vmem>>, vector<1x1x16x16xf32>
      %385 = vector.shape_cast %384 : vector<1x1x16x16xf32> to vector<16x16xf32>
      %c1_292 = arith.constant 1 : index
      %c3_293 = arith.constant 3 : index
      %c3_294 = arith.constant 3 : index
      %c0_295 = arith.constant 0 : index
      %386 = vector.load %arg8[%c1_292, %c3_293, %c3_294, %c0_295] : memref<2x7x22x16xf32, #tpu.memory_space<vmem>>, vector<1x1x16x16xf32>
      %387 = vector.shape_cast %386 : vector<1x1x16x16xf32> to vector<16x16xf32>
      %c24 = arith.constant 24 : index
      %388 = memref.load %arg3[%c24] : memref<98xf32, #tpu.memory_space<smem>>
      %c73 = arith.constant 73 : index
      %389 = memref.load %arg3[%c73] : memref<98xf32, #tpu.memory_space<smem>>
      %390 = vector.broadcast %388 : f32 to vector<16x16xf32>
      %391 = arith.mulf %390, %385 : vector<16x16xf32>
      %392 = vector.broadcast %389 : f32 to vector<16x16xf32>
      %393 = arith.mulf %392, %387 : vector<16x16xf32>
      %394 = arith.addf %391, %393 : vector<16x16xf32>
      %395 = arith.addf %347, %394 : vector<16x16xf32>
      %c0_296 = arith.constant 0 : index
      %c4_297 = arith.constant 4 : index
      %c3_298 = arith.constant 3 : index
      %c0_299 = arith.constant 0 : index
      %396 = vector.load %arg8[%c0_296, %c4_297, %c3_298, %c0_299] : memref<2x7x22x16xf32, #tpu.memory_space<vmem>>, vector<1x1x16x16xf32>
      %397 = vector.shape_cast %396 : vector<1x1x16x16xf32> to vector<16x16xf32>
      %c1_300 = arith.constant 1 : index
      %c4_301 = arith.constant 4 : index
      %c3_302 = arith.constant 3 : index
      %c0_303 = arith.constant 0 : index
      %398 = vector.load %arg8[%c1_300, %c4_301, %c3_302, %c0_303] : memref<2x7x22x16xf32, #tpu.memory_space<vmem>>, vector<1x1x16x16xf32>
      %399 = vector.shape_cast %398 : vector<1x1x16x16xf32> to vector<16x16xf32>
      %c25 = arith.constant 25 : index
      %400 = memref.load %arg3[%c25] : memref<98xf32, #tpu.memory_space<smem>>
      %c74 = arith.constant 74 : index
      %401 = memref.load %arg3[%c74] : memref<98xf32, #tpu.memory_space<smem>>
      %402 = vector.broadcast %400 : f32 to vector<16x16xf32>
      %403 = arith.mulf %402, %397 : vector<16x16xf32>
      %404 = vector.broadcast %401 : f32 to vector<16x16xf32>
      %405 = arith.mulf %404, %399 : vector<16x16xf32>
      %406 = arith.addf %403, %405 : vector<16x16xf32>
      %407 = arith.addf %359, %406 : vector<16x16xf32>
      %c0_304 = arith.constant 0 : index
      %c5_305 = arith.constant 5 : index
      %c3_306 = arith.constant 3 : index
      %c0_307 = arith.constant 0 : index
      %408 = vector.load %arg8[%c0_304, %c5_305, %c3_306, %c0_307] : memref<2x7x22x16xf32, #tpu.memory_space<vmem>>, vector<1x1x16x16xf32>
      %409 = vector.shape_cast %408 : vector<1x1x16x16xf32> to vector<16x16xf32>
      %c1_308 = arith.constant 1 : index
      %c5_309 = arith.constant 5 : index
      %c3_310 = arith.constant 3 : index
      %c0_311 = arith.constant 0 : index
      %410 = vector.load %arg8[%c1_308, %c5_309, %c3_310, %c0_311] : memref<2x7x22x16xf32, #tpu.memory_space<vmem>>, vector<1x1x16x16xf32>
      %411 = vector.shape_cast %410 : vector<1x1x16x16xf32> to vector<16x16xf32>
      %c26 = arith.constant 26 : index
      %412 = memref.load %arg3[%c26] : memref<98xf32, #tpu.memory_space<smem>>
      %c75 = arith.constant 75 : index
      %413 = memref.load %arg3[%c75] : memref<98xf32, #tpu.memory_space<smem>>
      %414 = vector.broadcast %412 : f32 to vector<16x16xf32>
      %415 = arith.mulf %414, %409 : vector<16x16xf32>
      %416 = vector.broadcast %413 : f32 to vector<16x16xf32>
      %417 = arith.mulf %416, %411 : vector<16x16xf32>
      %418 = arith.addf %415, %417 : vector<16x16xf32>
      %419 = arith.addf %371, %418 : vector<16x16xf32>
      %c0_312 = arith.constant 0 : index
      %c6_313 = arith.constant 6 : index
      %c3_314 = arith.constant 3 : index
      %c0_315 = arith.constant 0 : index
      %420 = vector.load %arg8[%c0_312, %c6_313, %c3_314, %c0_315] : memref<2x7x22x16xf32, #tpu.memory_space<vmem>>, vector<1x1x16x16xf32>
      %421 = vector.shape_cast %420 : vector<1x1x16x16xf32> to vector<16x16xf32>
      %c1_316 = arith.constant 1 : index
      %c6_317 = arith.constant 6 : index
      %c3_318 = arith.constant 3 : index
      %c0_319 = arith.constant 0 : index
      %422 = vector.load %arg8[%c1_316, %c6_317, %c3_318, %c0_319] : memref<2x7x22x16xf32, #tpu.memory_space<vmem>>, vector<1x1x16x16xf32>
      %423 = vector.shape_cast %422 : vector<1x1x16x16xf32> to vector<16x16xf32>
      %c27 = arith.constant 27 : index
      %424 = memref.load %arg3[%c27] : memref<98xf32, #tpu.memory_space<smem>>
      %c76 = arith.constant 76 : index
      %425 = memref.load %arg3[%c76] : memref<98xf32, #tpu.memory_space<smem>>
      %426 = vector.broadcast %424 : f32 to vector<16x16xf32>
      %427 = arith.mulf %426, %421 : vector<16x16xf32>
      %428 = vector.broadcast %425 : f32 to vector<16x16xf32>
      %429 = arith.mulf %428, %423 : vector<16x16xf32>
      %430 = arith.addf %427, %429 : vector<16x16xf32>
      %431 = arith.addf %383, %430 : vector<16x16xf32>
      %c0_320 = arith.constant 0 : index
      %c0_321 = arith.constant 0 : index
      %c4_322 = arith.constant 4 : index
      %c0_323 = arith.constant 0 : index
      %432 = vector.load %arg8[%c0_320, %c0_321, %c4_322, %c0_323] : memref<2x7x22x16xf32, #tpu.memory_space<vmem>>, vector<1x1x16x16xf32>
      %433 = vector.shape_cast %432 : vector<1x1x16x16xf32> to vector<16x16xf32>
      %c1_324 = arith.constant 1 : index
      %c0_325 = arith.constant 0 : index
      %c4_326 = arith.constant 4 : index
      %c0_327 = arith.constant 0 : index
      %434 = vector.load %arg8[%c1_324, %c0_325, %c4_326, %c0_327] : memref<2x7x22x16xf32, #tpu.memory_space<vmem>>, vector<1x1x16x16xf32>
      %435 = vector.shape_cast %434 : vector<1x1x16x16xf32> to vector<16x16xf32>
      %c28 = arith.constant 28 : index
      %436 = memref.load %arg3[%c28] : memref<98xf32, #tpu.memory_space<smem>>
      %c77 = arith.constant 77 : index
      %437 = memref.load %arg3[%c77] : memref<98xf32, #tpu.memory_space<smem>>
      %438 = vector.broadcast %436 : f32 to vector<16x16xf32>
      %439 = arith.mulf %438, %433 : vector<16x16xf32>
      %440 = vector.broadcast %437 : f32 to vector<16x16xf32>
      %441 = arith.mulf %440, %435 : vector<16x16xf32>
      %442 = arith.addf %439, %441 : vector<16x16xf32>
      %443 = arith.addf %395, %442 : vector<16x16xf32>
      %c0_328 = arith.constant 0 : index
      %c1_329 = arith.constant 1 : index
      %c4_330 = arith.constant 4 : index
      %c0_331 = arith.constant 0 : index
      %444 = vector.load %arg8[%c0_328, %c1_329, %c4_330, %c0_331] : memref<2x7x22x16xf32, #tpu.memory_space<vmem>>, vector<1x1x16x16xf32>
      %445 = vector.shape_cast %444 : vector<1x1x16x16xf32> to vector<16x16xf32>
      %c1_332 = arith.constant 1 : index
      %c1_333 = arith.constant 1 : index
      %c4_334 = arith.constant 4 : index
      %c0_335 = arith.constant 0 : index
      %446 = vector.load %arg8[%c1_332, %c1_333, %c4_334, %c0_335] : memref<2x7x22x16xf32, #tpu.memory_space<vmem>>, vector<1x1x16x16xf32>
      %447 = vector.shape_cast %446 : vector<1x1x16x16xf32> to vector<16x16xf32>
      %c29 = arith.constant 29 : index
      %448 = memref.load %arg3[%c29] : memref<98xf32, #tpu.memory_space<smem>>
      %c78 = arith.constant 78 : index
      %449 = memref.load %arg3[%c78] : memref<98xf32, #tpu.memory_space<smem>>
      %450 = vector.broadcast %448 : f32 to vector<16x16xf32>
      %451 = arith.mulf %450, %445 : vector<16x16xf32>
      %452 = vector.broadcast %449 : f32 to vector<16x16xf32>
      %453 = arith.mulf %452, %447 : vector<16x16xf32>
      %454 = arith.addf %451, %453 : vector<16x16xf32>
      %455 = arith.addf %407, %454 : vector<16x16xf32>
      %c0_336 = arith.constant 0 : index
      %c2_337 = arith.constant 2 : index
      %c4_338 = arith.constant 4 : index
      %c0_339 = arith.constant 0 : index
      %456 = vector.load %arg8[%c0_336, %c2_337, %c4_338, %c0_339] : memref<2x7x22x16xf32, #tpu.memory_space<vmem>>, vector<1x1x16x16xf32>
      %457 = vector.shape_cast %456 : vector<1x1x16x16xf32> to vector<16x16xf32>
      %c1_340 = arith.constant 1 : index
      %c2_341 = arith.constant 2 : index
      %c4_342 = arith.constant 4 : index
      %c0_343 = arith.constant 0 : index
      %458 = vector.load %arg8[%c1_340, %c2_341, %c4_342, %c0_343] : memref<2x7x22x16xf32, #tpu.memory_space<vmem>>, vector<1x1x16x16xf32>
      %459 = vector.shape_cast %458 : vector<1x1x16x16xf32> to vector<16x16xf32>
      %c30 = arith.constant 30 : index
      %460 = memref.load %arg3[%c30] : memref<98xf32, #tpu.memory_space<smem>>
      %c79 = arith.constant 79 : index
      %461 = memref.load %arg3[%c79] : memref<98xf32, #tpu.memory_space<smem>>
      %462 = vector.broadcast %460 : f32 to vector<16x16xf32>
      %463 = arith.mulf %462, %457 : vector<16x16xf32>
      %464 = vector.broadcast %461 : f32 to vector<16x16xf32>
      %465 = arith.mulf %464, %459 : vector<16x16xf32>
      %466 = arith.addf %463, %465 : vector<16x16xf32>
      %467 = arith.addf %419, %466 : vector<16x16xf32>
      %c0_344 = arith.constant 0 : index
      %c3_345 = arith.constant 3 : index
      %c4_346 = arith.constant 4 : index
      %c0_347 = arith.constant 0 : index
      %468 = vector.load %arg8[%c0_344, %c3_345, %c4_346, %c0_347] : memref<2x7x22x16xf32, #tpu.memory_space<vmem>>, vector<1x1x16x16xf32>
      %469 = vector.shape_cast %468 : vector<1x1x16x16xf32> to vector<16x16xf32>
      %c1_348 = arith.constant 1 : index
      %c3_349 = arith.constant 3 : index
      %c4_350 = arith.constant 4 : index
      %c0_351 = arith.constant 0 : index
      %470 = vector.load %arg8[%c1_348, %c3_349, %c4_350, %c0_351] : memref<2x7x22x16xf32, #tpu.memory_space<vmem>>, vector<1x1x16x16xf32>
      %471 = vector.shape_cast %470 : vector<1x1x16x16xf32> to vector<16x16xf32>
      %c31 = arith.constant 31 : index
      %472 = memref.load %arg3[%c31] : memref<98xf32, #tpu.memory_space<smem>>
      %c80 = arith.constant 80 : index
      %473 = memref.load %arg3[%c80] : memref<98xf32, #tpu.memory_space<smem>>
      %474 = vector.broadcast %472 : f32 to vector<16x16xf32>
      %475 = arith.mulf %474, %469 : vector<16x16xf32>
      %476 = vector.broadcast %473 : f32 to vector<16x16xf32>
      %477 = arith.mulf %476, %471 : vector<16x16xf32>
      %478 = arith.addf %475, %477 : vector<16x16xf32>
      %479 = arith.addf %431, %478 : vector<16x16xf32>
      %c0_352 = arith.constant 0 : index
      %c4_353 = arith.constant 4 : index
      %c4_354 = arith.constant 4 : index
      %c0_355 = arith.constant 0 : index
      %480 = vector.load %arg8[%c0_352, %c4_353, %c4_354, %c0_355] : memref<2x7x22x16xf32, #tpu.memory_space<vmem>>, vector<1x1x16x16xf32>
      %481 = vector.shape_cast %480 : vector<1x1x16x16xf32> to vector<16x16xf32>
      %c1_356 = arith.constant 1 : index
      %c4_357 = arith.constant 4 : index
      %c4_358 = arith.constant 4 : index
      %c0_359 = arith.constant 0 : index
      %482 = vector.load %arg8[%c1_356, %c4_357, %c4_358, %c0_359] : memref<2x7x22x16xf32, #tpu.memory_space<vmem>>, vector<1x1x16x16xf32>
      %483 = vector.shape_cast %482 : vector<1x1x16x16xf32> to vector<16x16xf32>
      %c32 = arith.constant 32 : index
      %484 = memref.load %arg3[%c32] : memref<98xf32, #tpu.memory_space<smem>>
      %c81 = arith.constant 81 : index
      %485 = memref.load %arg3[%c81] : memref<98xf32, #tpu.memory_space<smem>>
      %486 = vector.broadcast %484 : f32 to vector<16x16xf32>
      %487 = arith.mulf %486, %481 : vector<16x16xf32>
      %488 = vector.broadcast %485 : f32 to vector<16x16xf32>
      %489 = arith.mulf %488, %483 : vector<16x16xf32>
      %490 = arith.addf %487, %489 : vector<16x16xf32>
      %491 = arith.addf %443, %490 : vector<16x16xf32>
      %c0_360 = arith.constant 0 : index
      %c5_361 = arith.constant 5 : index
      %c4_362 = arith.constant 4 : index
      %c0_363 = arith.constant 0 : index
      %492 = vector.load %arg8[%c0_360, %c5_361, %c4_362, %c0_363] : memref<2x7x22x16xf32, #tpu.memory_space<vmem>>, vector<1x1x16x16xf32>
      %493 = vector.shape_cast %492 : vector<1x1x16x16xf32> to vector<16x16xf32>
      %c1_364 = arith.constant 1 : index
      %c5_365 = arith.constant 5 : index
      %c4_366 = arith.constant 4 : index
      %c0_367 = arith.constant 0 : index
      %494 = vector.load %arg8[%c1_364, %c5_365, %c4_366, %c0_367] : memref<2x7x22x16xf32, #tpu.memory_space<vmem>>, vector<1x1x16x16xf32>
      %495 = vector.shape_cast %494 : vector<1x1x16x16xf32> to vector<16x16xf32>
      %c33 = arith.constant 33 : index
      %496 = memref.load %arg3[%c33] : memref<98xf32, #tpu.memory_space<smem>>
      %c82 = arith.constant 82 : index
      %497 = memref.load %arg3[%c82] : memref<98xf32, #tpu.memory_space<smem>>
      %498 = vector.broadcast %496 : f32 to vector<16x16xf32>
      %499 = arith.mulf %498, %493 : vector<16x16xf32>
      %500 = vector.broadcast %497 : f32 to vector<16x16xf32>
      %501 = arith.mulf %500, %495 : vector<16x16xf32>
      %502 = arith.addf %499, %501 : vector<16x16xf32>
      %503 = arith.addf %455, %502 : vector<16x16xf32>
      %c0_368 = arith.constant 0 : index
      %c6_369 = arith.constant 6 : index
      %c4_370 = arith.constant 4 : index
      %c0_371 = arith.constant 0 : index
      %504 = vector.load %arg8[%c0_368, %c6_369, %c4_370, %c0_371] : memref<2x7x22x16xf32, #tpu.memory_space<vmem>>, vector<1x1x16x16xf32>
      %505 = vector.shape_cast %504 : vector<1x1x16x16xf32> to vector<16x16xf32>
      %c1_372 = arith.constant 1 : index
      %c6_373 = arith.constant 6 : index
      %c4_374 = arith.constant 4 : index
      %c0_375 = arith.constant 0 : index
      %506 = vector.load %arg8[%c1_372, %c6_373, %c4_374, %c0_375] : memref<2x7x22x16xf32, #tpu.memory_space<vmem>>, vector<1x1x16x16xf32>
      %507 = vector.shape_cast %506 : vector<1x1x16x16xf32> to vector<16x16xf32>
      %c34 = arith.constant 34 : index
      %508 = memref.load %arg3[%c34] : memref<98xf32, #tpu.memory_space<smem>>
      %c83 = arith.constant 83 : index
      %509 = memref.load %arg3[%c83] : memref<98xf32, #tpu.memory_space<smem>>
      %510 = vector.broadcast %508 : f32 to vector<16x16xf32>
      %511 = arith.mulf %510, %505 : vector<16x16xf32>
      %512 = vector.broadcast %509 : f32 to vector<16x16xf32>
      %513 = arith.mulf %512, %507 : vector<16x16xf32>
      %514 = arith.addf %511, %513 : vector<16x16xf32>
      %515 = arith.addf %467, %514 : vector<16x16xf32>
      %c0_376 = arith.constant 0 : index
      %c0_377 = arith.constant 0 : index
      %c5_378 = arith.constant 5 : index
      %c0_379 = arith.constant 0 : index
      %516 = vector.load %arg8[%c0_376, %c0_377, %c5_378, %c0_379] : memref<2x7x22x16xf32, #tpu.memory_space<vmem>>, vector<1x1x16x16xf32>
      %517 = vector.shape_cast %516 : vector<1x1x16x16xf32> to vector<16x16xf32>
      %c1_380 = arith.constant 1 : index
      %c0_381 = arith.constant 0 : index
      %c5_382 = arith.constant 5 : index
      %c0_383 = arith.constant 0 : index
      %518 = vector.load %arg8[%c1_380, %c0_381, %c5_382, %c0_383] : memref<2x7x22x16xf32, #tpu.memory_space<vmem>>, vector<1x1x16x16xf32>
      %519 = vector.shape_cast %518 : vector<1x1x16x16xf32> to vector<16x16xf32>
      %c35 = arith.constant 35 : index
      %520 = memref.load %arg3[%c35] : memref<98xf32, #tpu.memory_space<smem>>
      %c84 = arith.constant 84 : index
      %521 = memref.load %arg3[%c84] : memref<98xf32, #tpu.memory_space<smem>>
      %522 = vector.broadcast %520 : f32 to vector<16x16xf32>
      %523 = arith.mulf %522, %517 : vector<16x16xf32>
      %524 = vector.broadcast %521 : f32 to vector<16x16xf32>
      %525 = arith.mulf %524, %519 : vector<16x16xf32>
      %526 = arith.addf %523, %525 : vector<16x16xf32>
      %527 = arith.addf %479, %526 : vector<16x16xf32>
      %c0_384 = arith.constant 0 : index
      %c1_385 = arith.constant 1 : index
      %c5_386 = arith.constant 5 : index
      %c0_387 = arith.constant 0 : index
      %528 = vector.load %arg8[%c0_384, %c1_385, %c5_386, %c0_387] : memref<2x7x22x16xf32, #tpu.memory_space<vmem>>, vector<1x1x16x16xf32>
      %529 = vector.shape_cast %528 : vector<1x1x16x16xf32> to vector<16x16xf32>
      %c1_388 = arith.constant 1 : index
      %c1_389 = arith.constant 1 : index
      %c5_390 = arith.constant 5 : index
      %c0_391 = arith.constant 0 : index
      %530 = vector.load %arg8[%c1_388, %c1_389, %c5_390, %c0_391] : memref<2x7x22x16xf32, #tpu.memory_space<vmem>>, vector<1x1x16x16xf32>
      %531 = vector.shape_cast %530 : vector<1x1x16x16xf32> to vector<16x16xf32>
      %c36 = arith.constant 36 : index
      %532 = memref.load %arg3[%c36] : memref<98xf32, #tpu.memory_space<smem>>
      %c85 = arith.constant 85 : index
      %533 = memref.load %arg3[%c85] : memref<98xf32, #tpu.memory_space<smem>>
      %534 = vector.broadcast %532 : f32 to vector<16x16xf32>
      %535 = arith.mulf %534, %529 : vector<16x16xf32>
      %536 = vector.broadcast %533 : f32 to vector<16x16xf32>
      %537 = arith.mulf %536, %531 : vector<16x16xf32>
      %538 = arith.addf %535, %537 : vector<16x16xf32>
      %539 = arith.addf %491, %538 : vector<16x16xf32>
      %c0_392 = arith.constant 0 : index
      %c2_393 = arith.constant 2 : index
      %c5_394 = arith.constant 5 : index
      %c0_395 = arith.constant 0 : index
      %540 = vector.load %arg8[%c0_392, %c2_393, %c5_394, %c0_395] : memref<2x7x22x16xf32, #tpu.memory_space<vmem>>, vector<1x1x16x16xf32>
      %541 = vector.shape_cast %540 : vector<1x1x16x16xf32> to vector<16x16xf32>
      %c1_396 = arith.constant 1 : index
      %c2_397 = arith.constant 2 : index
      %c5_398 = arith.constant 5 : index
      %c0_399 = arith.constant 0 : index
      %542 = vector.load %arg8[%c1_396, %c2_397, %c5_398, %c0_399] : memref<2x7x22x16xf32, #tpu.memory_space<vmem>>, vector<1x1x16x16xf32>
      %543 = vector.shape_cast %542 : vector<1x1x16x16xf32> to vector<16x16xf32>
      %c37 = arith.constant 37 : index
      %544 = memref.load %arg3[%c37] : memref<98xf32, #tpu.memory_space<smem>>
      %c86 = arith.constant 86 : index
      %545 = memref.load %arg3[%c86] : memref<98xf32, #tpu.memory_space<smem>>
      %546 = vector.broadcast %544 : f32 to vector<16x16xf32>
      %547 = arith.mulf %546, %541 : vector<16x16xf32>
      %548 = vector.broadcast %545 : f32 to vector<16x16xf32>
      %549 = arith.mulf %548, %543 : vector<16x16xf32>
      %550 = arith.addf %547, %549 : vector<16x16xf32>
      %551 = arith.addf %503, %550 : vector<16x16xf32>
      %c0_400 = arith.constant 0 : index
      %c3_401 = arith.constant 3 : index
      %c5_402 = arith.constant 5 : index
      %c0_403 = arith.constant 0 : index
      %552 = vector.load %arg8[%c0_400, %c3_401, %c5_402, %c0_403] : memref<2x7x22x16xf32, #tpu.memory_space<vmem>>, vector<1x1x16x16xf32>
      %553 = vector.shape_cast %552 : vector<1x1x16x16xf32> to vector<16x16xf32>
      %c1_404 = arith.constant 1 : index
      %c3_405 = arith.constant 3 : index
      %c5_406 = arith.constant 5 : index
      %c0_407 = arith.constant 0 : index
      %554 = vector.load %arg8[%c1_404, %c3_405, %c5_406, %c0_407] : memref<2x7x22x16xf32, #tpu.memory_space<vmem>>, vector<1x1x16x16xf32>
      %555 = vector.shape_cast %554 : vector<1x1x16x16xf32> to vector<16x16xf32>
      %c38 = arith.constant 38 : index
      %556 = memref.load %arg3[%c38] : memref<98xf32, #tpu.memory_space<smem>>
      %c87 = arith.constant 87 : index
      %557 = memref.load %arg3[%c87] : memref<98xf32, #tpu.memory_space<smem>>
      %558 = vector.broadcast %556 : f32 to vector<16x16xf32>
      %559 = arith.mulf %558, %553 : vector<16x16xf32>
      %560 = vector.broadcast %557 : f32 to vector<16x16xf32>
      %561 = arith.mulf %560, %555 : vector<16x16xf32>
      %562 = arith.addf %559, %561 : vector<16x16xf32>
      %563 = arith.addf %515, %562 : vector<16x16xf32>
      %c0_408 = arith.constant 0 : index
      %c4_409 = arith.constant 4 : index
      %c5_410 = arith.constant 5 : index
      %c0_411 = arith.constant 0 : index
      %564 = vector.load %arg8[%c0_408, %c4_409, %c5_410, %c0_411] : memref<2x7x22x16xf32, #tpu.memory_space<vmem>>, vector<1x1x16x16xf32>
      %565 = vector.shape_cast %564 : vector<1x1x16x16xf32> to vector<16x16xf32>
      %c1_412 = arith.constant 1 : index
      %c4_413 = arith.constant 4 : index
      %c5_414 = arith.constant 5 : index
      %c0_415 = arith.constant 0 : index
      %566 = vector.load %arg8[%c1_412, %c4_413, %c5_414, %c0_415] : memref<2x7x22x16xf32, #tpu.memory_space<vmem>>, vector<1x1x16x16xf32>
      %567 = vector.shape_cast %566 : vector<1x1x16x16xf32> to vector<16x16xf32>
      %c39 = arith.constant 39 : index
      %568 = memref.load %arg3[%c39] : memref<98xf32, #tpu.memory_space<smem>>
      %c88 = arith.constant 88 : index
      %569 = memref.load %arg3[%c88] : memref<98xf32, #tpu.memory_space<smem>>
      %570 = vector.broadcast %568 : f32 to vector<16x16xf32>
      %571 = arith.mulf %570, %565 : vector<16x16xf32>
      %572 = vector.broadcast %569 : f32 to vector<16x16xf32>
      %573 = arith.mulf %572, %567 : vector<16x16xf32>
      %574 = arith.addf %571, %573 : vector<16x16xf32>
      %575 = arith.addf %527, %574 : vector<16x16xf32>
      %c0_416 = arith.constant 0 : index
      %c5_417 = arith.constant 5 : index
      %c5_418 = arith.constant 5 : index
      %c0_419 = arith.constant 0 : index
      %576 = vector.load %arg8[%c0_416, %c5_417, %c5_418, %c0_419] : memref<2x7x22x16xf32, #tpu.memory_space<vmem>>, vector<1x1x16x16xf32>
      %577 = vector.shape_cast %576 : vector<1x1x16x16xf32> to vector<16x16xf32>
      %c1_420 = arith.constant 1 : index
      %c5_421 = arith.constant 5 : index
      %c5_422 = arith.constant 5 : index
      %c0_423 = arith.constant 0 : index
      %578 = vector.load %arg8[%c1_420, %c5_421, %c5_422, %c0_423] : memref<2x7x22x16xf32, #tpu.memory_space<vmem>>, vector<1x1x16x16xf32>
      %579 = vector.shape_cast %578 : vector<1x1x16x16xf32> to vector<16x16xf32>
      %c40 = arith.constant 40 : index
      %580 = memref.load %arg3[%c40] : memref<98xf32, #tpu.memory_space<smem>>
      %c89 = arith.constant 89 : index
      %581 = memref.load %arg3[%c89] : memref<98xf32, #tpu.memory_space<smem>>
      %582 = vector.broadcast %580 : f32 to vector<16x16xf32>
      %583 = arith.mulf %582, %577 : vector<16x16xf32>
      %584 = vector.broadcast %581 : f32 to vector<16x16xf32>
      %585 = arith.mulf %584, %579 : vector<16x16xf32>
      %586 = arith.addf %583, %585 : vector<16x16xf32>
      %587 = arith.addf %539, %586 : vector<16x16xf32>
      %c0_424 = arith.constant 0 : index
      %c6_425 = arith.constant 6 : index
      %c5_426 = arith.constant 5 : index
      %c0_427 = arith.constant 0 : index
      %588 = vector.load %arg8[%c0_424, %c6_425, %c5_426, %c0_427] : memref<2x7x22x16xf32, #tpu.memory_space<vmem>>, vector<1x1x16x16xf32>
      %589 = vector.shape_cast %588 : vector<1x1x16x16xf32> to vector<16x16xf32>
      %c1_428 = arith.constant 1 : index
      %c6_429 = arith.constant 6 : index
      %c5_430 = arith.constant 5 : index
      %c0_431 = arith.constant 0 : index
      %590 = vector.load %arg8[%c1_428, %c6_429, %c5_430, %c0_431] : memref<2x7x22x16xf32, #tpu.memory_space<vmem>>, vector<1x1x16x16xf32>
      %591 = vector.shape_cast %590 : vector<1x1x16x16xf32> to vector<16x16xf32>
      %c41 = arith.constant 41 : index
      %592 = memref.load %arg3[%c41] : memref<98xf32, #tpu.memory_space<smem>>
      %c90 = arith.constant 90 : index
      %593 = memref.load %arg3[%c90] : memref<98xf32, #tpu.memory_space<smem>>
      %594 = vector.broadcast %592 : f32 to vector<16x16xf32>
      %595 = arith.mulf %594, %589 : vector<16x16xf32>
      %596 = vector.broadcast %593 : f32 to vector<16x16xf32>
      %597 = arith.mulf %596, %591 : vector<16x16xf32>
      %598 = arith.addf %595, %597 : vector<16x16xf32>
      %599 = arith.addf %551, %598 : vector<16x16xf32>
      %c0_432 = arith.constant 0 : index
      %c0_433 = arith.constant 0 : index
      %c6_434 = arith.constant 6 : index
      %c0_435 = arith.constant 0 : index
      %600 = vector.load %arg8[%c0_432, %c0_433, %c6_434, %c0_435] : memref<2x7x22x16xf32, #tpu.memory_space<vmem>>, vector<1x1x16x16xf32>
      %601 = vector.shape_cast %600 : vector<1x1x16x16xf32> to vector<16x16xf32>
      %c1_436 = arith.constant 1 : index
      %c0_437 = arith.constant 0 : index
      %c6_438 = arith.constant 6 : index
      %c0_439 = arith.constant 0 : index
      %602 = vector.load %arg8[%c1_436, %c0_437, %c6_438, %c0_439] : memref<2x7x22x16xf32, #tpu.memory_space<vmem>>, vector<1x1x16x16xf32>
      %603 = vector.shape_cast %602 : vector<1x1x16x16xf32> to vector<16x16xf32>
      %c42 = arith.constant 42 : index
      %604 = memref.load %arg3[%c42] : memref<98xf32, #tpu.memory_space<smem>>
      %c91 = arith.constant 91 : index
      %605 = memref.load %arg3[%c91] : memref<98xf32, #tpu.memory_space<smem>>
      %606 = vector.broadcast %604 : f32 to vector<16x16xf32>
      %607 = arith.mulf %606, %601 : vector<16x16xf32>
      %608 = vector.broadcast %605 : f32 to vector<16x16xf32>
      %609 = arith.mulf %608, %603 : vector<16x16xf32>
      %610 = arith.addf %607, %609 : vector<16x16xf32>
      %611 = arith.addf %563, %610 : vector<16x16xf32>
      %c0_440 = arith.constant 0 : index
      %c1_441 = arith.constant 1 : index
      %c6_442 = arith.constant 6 : index
      %c0_443 = arith.constant 0 : index
      %612 = vector.load %arg8[%c0_440, %c1_441, %c6_442, %c0_443] : memref<2x7x22x16xf32, #tpu.memory_space<vmem>>, vector<1x1x16x16xf32>
      %613 = vector.shape_cast %612 : vector<1x1x16x16xf32> to vector<16x16xf32>
      %c1_444 = arith.constant 1 : index
      %c1_445 = arith.constant 1 : index
      %c6_446 = arith.constant 6 : index
      %c0_447 = arith.constant 0 : index
      %614 = vector.load %arg8[%c1_444, %c1_445, %c6_446, %c0_447] : memref<2x7x22x16xf32, #tpu.memory_space<vmem>>, vector<1x1x16x16xf32>
      %615 = vector.shape_cast %614 : vector<1x1x16x16xf32> to vector<16x16xf32>
      %c43 = arith.constant 43 : index
      %616 = memref.load %arg3[%c43] : memref<98xf32, #tpu.memory_space<smem>>
      %c92 = arith.constant 92 : index
      %617 = memref.load %arg3[%c92] : memref<98xf32, #tpu.memory_space<smem>>
      %618 = vector.broadcast %616 : f32 to vector<16x16xf32>
      %619 = arith.mulf %618, %613 : vector<16x16xf32>
      %620 = vector.broadcast %617 : f32 to vector<16x16xf32>
      %621 = arith.mulf %620, %615 : vector<16x16xf32>
      %622 = arith.addf %619, %621 : vector<16x16xf32>
      %623 = arith.addf %575, %622 : vector<16x16xf32>
      %c0_448 = arith.constant 0 : index
      %c2_449 = arith.constant 2 : index
      %c6_450 = arith.constant 6 : index
      %c0_451 = arith.constant 0 : index
      %624 = vector.load %arg8[%c0_448, %c2_449, %c6_450, %c0_451] : memref<2x7x22x16xf32, #tpu.memory_space<vmem>>, vector<1x1x16x16xf32>
      %625 = vector.shape_cast %624 : vector<1x1x16x16xf32> to vector<16x16xf32>
      %c1_452 = arith.constant 1 : index
      %c2_453 = arith.constant 2 : index
      %c6_454 = arith.constant 6 : index
      %c0_455 = arith.constant 0 : index
      %626 = vector.load %arg8[%c1_452, %c2_453, %c6_454, %c0_455] : memref<2x7x22x16xf32, #tpu.memory_space<vmem>>, vector<1x1x16x16xf32>
      %627 = vector.shape_cast %626 : vector<1x1x16x16xf32> to vector<16x16xf32>
      %c44 = arith.constant 44 : index
      %628 = memref.load %arg3[%c44] : memref<98xf32, #tpu.memory_space<smem>>
      %c93 = arith.constant 93 : index
      %629 = memref.load %arg3[%c93] : memref<98xf32, #tpu.memory_space<smem>>
      %630 = vector.broadcast %628 : f32 to vector<16x16xf32>
      %631 = arith.mulf %630, %625 : vector<16x16xf32>
      %632 = vector.broadcast %629 : f32 to vector<16x16xf32>
      %633 = arith.mulf %632, %627 : vector<16x16xf32>
      %634 = arith.addf %631, %633 : vector<16x16xf32>
      %635 = arith.addf %587, %634 : vector<16x16xf32>
      %c0_456 = arith.constant 0 : index
      %c3_457 = arith.constant 3 : index
      %c6_458 = arith.constant 6 : index
      %c0_459 = arith.constant 0 : index
      %636 = vector.load %arg8[%c0_456, %c3_457, %c6_458, %c0_459] : memref<2x7x22x16xf32, #tpu.memory_space<vmem>>, vector<1x1x16x16xf32>
      %637 = vector.shape_cast %636 : vector<1x1x16x16xf32> to vector<16x16xf32>
      %c1_460 = arith.constant 1 : index
      %c3_461 = arith.constant 3 : index
      %c6_462 = arith.constant 6 : index
      %c0_463 = arith.constant 0 : index
      %638 = vector.load %arg8[%c1_460, %c3_461, %c6_462, %c0_463] : memref<2x7x22x16xf32, #tpu.memory_space<vmem>>, vector<1x1x16x16xf32>
      %639 = vector.shape_cast %638 : vector<1x1x16x16xf32> to vector<16x16xf32>
      %c45 = arith.constant 45 : index
      %640 = memref.load %arg3[%c45] : memref<98xf32, #tpu.memory_space<smem>>
      %c94 = arith.constant 94 : index
      %641 = memref.load %arg3[%c94] : memref<98xf32, #tpu.memory_space<smem>>
      %642 = vector.broadcast %640 : f32 to vector<16x16xf32>
      %643 = arith.mulf %642, %637 : vector<16x16xf32>
      %644 = vector.broadcast %641 : f32 to vector<16x16xf32>
      %645 = arith.mulf %644, %639 : vector<16x16xf32>
      %646 = arith.addf %643, %645 : vector<16x16xf32>
      %647 = arith.addf %599, %646 : vector<16x16xf32>
      %c0_464 = arith.constant 0 : index
      %c4_465 = arith.constant 4 : index
      %c6_466 = arith.constant 6 : index
      %c0_467 = arith.constant 0 : index
      %648 = vector.load %arg8[%c0_464, %c4_465, %c6_466, %c0_467] : memref<2x7x22x16xf32, #tpu.memory_space<vmem>>, vector<1x1x16x16xf32>
      %649 = vector.shape_cast %648 : vector<1x1x16x16xf32> to vector<16x16xf32>
      %c1_468 = arith.constant 1 : index
      %c4_469 = arith.constant 4 : index
      %c6_470 = arith.constant 6 : index
      %c0_471 = arith.constant 0 : index
      %650 = vector.load %arg8[%c1_468, %c4_469, %c6_470, %c0_471] : memref<2x7x22x16xf32, #tpu.memory_space<vmem>>, vector<1x1x16x16xf32>
      %651 = vector.shape_cast %650 : vector<1x1x16x16xf32> to vector<16x16xf32>
      %c46 = arith.constant 46 : index
      %652 = memref.load %arg3[%c46] : memref<98xf32, #tpu.memory_space<smem>>
      %c95 = arith.constant 95 : index
      %653 = memref.load %arg3[%c95] : memref<98xf32, #tpu.memory_space<smem>>
      %654 = vector.broadcast %652 : f32 to vector<16x16xf32>
      %655 = arith.mulf %654, %649 : vector<16x16xf32>
      %656 = vector.broadcast %653 : f32 to vector<16x16xf32>
      %657 = arith.mulf %656, %651 : vector<16x16xf32>
      %658 = arith.addf %655, %657 : vector<16x16xf32>
      %659 = arith.addf %611, %658 : vector<16x16xf32>
      %c0_472 = arith.constant 0 : index
      %c5_473 = arith.constant 5 : index
      %c6_474 = arith.constant 6 : index
      %c0_475 = arith.constant 0 : index
      %660 = vector.load %arg8[%c0_472, %c5_473, %c6_474, %c0_475] : memref<2x7x22x16xf32, #tpu.memory_space<vmem>>, vector<1x1x16x16xf32>
      %661 = vector.shape_cast %660 : vector<1x1x16x16xf32> to vector<16x16xf32>
      %c1_476 = arith.constant 1 : index
      %c5_477 = arith.constant 5 : index
      %c6_478 = arith.constant 6 : index
      %c0_479 = arith.constant 0 : index
      %662 = vector.load %arg8[%c1_476, %c5_477, %c6_478, %c0_479] : memref<2x7x22x16xf32, #tpu.memory_space<vmem>>, vector<1x1x16x16xf32>
      %663 = vector.shape_cast %662 : vector<1x1x16x16xf32> to vector<16x16xf32>
      %c47 = arith.constant 47 : index
      %664 = memref.load %arg3[%c47] : memref<98xf32, #tpu.memory_space<smem>>
      %c96 = arith.constant 96 : index
      %665 = memref.load %arg3[%c96] : memref<98xf32, #tpu.memory_space<smem>>
      %666 = vector.broadcast %664 : f32 to vector<16x16xf32>
      %667 = arith.mulf %666, %661 : vector<16x16xf32>
      %668 = vector.broadcast %665 : f32 to vector<16x16xf32>
      %669 = arith.mulf %668, %663 : vector<16x16xf32>
      %670 = arith.addf %667, %669 : vector<16x16xf32>
      %671 = arith.addf %623, %670 : vector<16x16xf32>
      %c0_480 = arith.constant 0 : index
      %c6_481 = arith.constant 6 : index
      %c6_482 = arith.constant 6 : index
      %c0_483 = arith.constant 0 : index
      %672 = vector.load %arg8[%c0_480, %c6_481, %c6_482, %c0_483] : memref<2x7x22x16xf32, #tpu.memory_space<vmem>>, vector<1x1x16x16xf32>
      %673 = vector.shape_cast %672 : vector<1x1x16x16xf32> to vector<16x16xf32>
      %c1_484 = arith.constant 1 : index
      %c6_485 = arith.constant 6 : index
      %c6_486 = arith.constant 6 : index
      %c0_487 = arith.constant 0 : index
      %674 = vector.load %arg8[%c1_484, %c6_485, %c6_486, %c0_487] : memref<2x7x22x16xf32, #tpu.memory_space<vmem>>, vector<1x1x16x16xf32>
      %675 = vector.shape_cast %674 : vector<1x1x16x16xf32> to vector<16x16xf32>
      %c48 = arith.constant 48 : index
      %676 = memref.load %arg3[%c48] : memref<98xf32, #tpu.memory_space<smem>>
      %c97 = arith.constant 97 : index
      %677 = memref.load %arg3[%c97] : memref<98xf32, #tpu.memory_space<smem>>
      %678 = vector.broadcast %676 : f32 to vector<16x16xf32>
      %679 = arith.mulf %678, %673 : vector<16x16xf32>
      %680 = vector.broadcast %677 : f32 to vector<16x16xf32>
      %681 = arith.mulf %680, %675 : vector<16x16xf32>
      %682 = arith.addf %679, %681 : vector<16x16xf32>
      %683 = arith.addf %635, %682 : vector<16x16xf32>
      %684 = arith.addf %683, %647 : vector<16x16xf32>
      %685 = arith.addf %659, %671 : vector<16x16xf32>
      %686 = arith.addf %684, %685 : vector<16x16xf32>
      %687 = arith.negf %686 : vector<16x16xf32>
      %688 = math.exp %687 : vector<16x16xf32>
      %cst_488 = arith.constant 1.000000e+00 : f32
      %689 = vector.broadcast %cst_488 : f32 to vector<16x16xf32>
      %690 = arith.addf %689, %688 : vector<16x16xf32>
      %691 = arith.divf %689, %690 : vector<16x16xf32>
      %c0_489 = arith.constant 0 : index
      %c0_490 = arith.constant 0 : index
      %c0_491 = arith.constant 0 : index
      %c0_492 = arith.constant 0 : index
      %692 = vector.load %arg4[%c0_489, %c0_490, %c0_491, %c0_492] : memref<1x1x16x16xf32, #tpu.memory_space<vmem>>, vector<1x1x16x16xf32>
      %693 = vector.shape_cast %692 : vector<1x1x16x16xf32> to vector<16x16xf32>
      %694 = vector.shape_cast %691 : vector<16x16xf32> to vector<1x1x16x16xf32>
      tpu.vector_store %arg4[%c0_489, %c0_490, %c0_491, %c0_492], %694 {strides = array<i32>} : memref<1x1x16x16xf32, #tpu.memory_space<vmem>>, vector<1x1x16x16xf32>,
    } else {
    }
    return
  }
  func.func @transform_0(%arg0: i32, %arg1: i32) -> (i32, i32, i32) {
    %c0_i32 = arith.constant 0 : i32
    %c0_i32_0 = arith.constant 0 : i32
    return %arg0, %arg1, %c0_i32 : i32, i32, i32
  }
  func.func @transform_1(%arg0: i32, %arg1: i32) -> i32 {
    %c0_i32 = arith.constant 0 : i32
    %c0_i32_0 = arith.constant 0 : i32
    return %c0_i32 : i32
  }
  func.func @transform_2(%arg0: i32, %arg1: i32) -> (i32, i32, i32, i32) {
    %c0_i32 = arith.constant 0 : i32
    %c0_i32_0 = arith.constant 0 : i32
    %c0_i32_1 = arith.constant 0 : i32
    %c0_i32_2 = arith.constant 0 : i32
    return %arg0, %c0_i32, %c0_i32_0, %c0_i32_1 : i32, i32, i32, i32
  }
}

</mosaic_0001>

<llo_original>
// kernel: tpu_custom_call.1
$region0: #{tpu_custom_call.1}
  #allocation0 [shape = 'u32[]', space=smem, size = 0x4, offset = 0x4, fixed_abs, tag = 'smem constant byte address 0x4 - core index']
  #allocation1 [shape = 'u32[72,128]{1,0:T(1,128)}', space=vmem, size = 0x9000, scoped, tag = 'internal scratch']
  #allocation2 [shape = 'f32[1,256]{1,0:T(1,128)}', space=vmem, size = 0x400, scoped, tag = 'scratch operand']
  #allocation3 [shape = 'f32[1,256]{1,0:T(1,128)}', space=vmem, size = 0x400, scoped, tag = 'scratch operand']
  #allocation4 [shape = 'f32[2,22,22]{2,1,0:T(8,128)}', space=vmem, size = 0x6000, scoped, tag = 'scratch operand']
  #allocation5 [shape = 'f32[2,7,22,16]{3,2,1,0:T(8,128)}', space=vmem, size = 0x2a000, scoped, tag = 'scratch operand']
  %s0 = inlined_call_operand.hbm [shape: f32[2,4,256], index: 0, kind: input, shape index: {}]
  %s1 = inlined_call_operand.hbm [shape: f32[98], index: 1, kind: input, shape index: {}]
  %s2 = inlined_call_operand.hbm [shape: f32[2,1,16,16], index: 2, kind: output, shape index: {}]
  %s3 = sld [smem:[#allocation0]]
  $region57: #{tpu_custom_call.1} parent=0
    _
  %s5 = ssub.s32 1, %s3
  %s6 = scalar_select 0, %s5, %s3
  $region1: #{tpu_custom_call.1} parent=0
    #allocation6 [shape = 'u8[8192]{0}', space=vmem, size = 0x2000, scoped, tag = 'input window, operand 0']
    #allocation7 [shape = 's32[2]{0}', space=sflag, size = 0x8, scoped, tag = 'scoped memory for tpu_custom_call.1']
    #allocation8 [shape = 's32[2]{0}', space=sflag, size = 0x8, scoped, tag = 'scoped memory for tpu_custom_call.1']
    #allocation9 [shape = 's32[2]{0}', space=sflag, size = 0x8, scoped, tag = 'scoped memory for tpu_custom_call.1']
    #allocation10 [shape = 'u8[512]{0}', space=smem, size = 0x200, scoped, tag = 'input window, operand 1, single buffered']
    #allocation11 [shape = 'u8[16384]{0}', space=vmem, size = 0x4000, scoped, tag = 'output window, operand 0']
    %7 = vsyncpa [#allocation7], 0
    %s8 = scalar_lea.sflag [#allocation7], 1
    %9 = vsyncpa %s8, 0
    %10 = vsyncpa [#allocation9], 0
    %11 = vsyncpa [#allocation8], 0
    %s12 = scalar_lea.sflag [#allocation8], 1
    %13 = vsyncpa %s12, 0
    loop: start=0, step=1, limit=4
    $region2: #{tpu_custom_call.1} parent=1 // loop_pre_header
      _
    $region3: #{tpu_custom_call.1} parent=1 // loop_header
      %s15 = sphi 0, %s19
      %p16 = scmp.ge.s32.totalorder %s15, 4
      %s22 = sphi 0, %s34
      %s23 = sphi 0, %s30
      %s24 = sphi 0, %s22
      %s25 = sphi 0, %s23
      %s26 = sphi 0, %s24
      %s27 = sphi 0, %s25
      %s39 = sphi 0, %s41
      %s42 = sphi 0, %s39
      %s43 = sphi 0, %s42
      %s59 = sphi 0, %s43
      %s63 = sphi 0, %s63
      %s65 = sphi 0, %s63
      %s66 = sphi 0, %s65
      %s80 = sphi 0, %s66
      %s86 = sphi 0, %s88
      %s89 = sphi 0, %s86
      %s90 = sphi 0, %s89
      %s106 = sphi 0, %s90
    $region4: #{tpu_custom_call.1} parent=1 // loop_header_branch
      %18 = sbr.rel (%p16) target = $region8
    $region5: #{tpu_custom_call.1} parent=1 // loop_body
      %s20 = ssub.s32 %s15, 1
      %s21 = ssub.s32 %s15, 2
      %s28 = sadd.s32 1, %s23
      %p29 = scmp.ge.s32.totalorder %s28, 1
      %s30 = scalar_select %p29, 0, %s28
      %s31 = sadd.s32 1, %s22
      %s32 = scalar_select %p29, %s31, %s22
      %p33 = scmp.ge.s32.totalorder %s32, 2
      %s34 = scalar_select %p33, 0, %s32
      %s35 = ssub.s32 %s22, %s34
      %s36 = ssub.s32 %s23, %s30
      %s37 = sor.u32 %s35, %s36
      %p38 = scmp.eq.s32.totalorder %s37, 0
      %s40 = sadd.s32 %s39, 1
      %s41 = scalar_select %p38, %s39, %s40
      %p44 = pneg %p38
      %p45 = scmp.eq.s32.totalorder %s15, 1
      %p46 = por %p44, %p45
      %p47 = scmp.ne.s32.totalorder %s39, %s42
      %p48 = scmp.eq.s32.totalorder %s15, 0
      %p49 = por %p47, %p48
      %p50 = scmp.ne.s32.totalorder %s39, %s42
      %p51 = scmp.eq.s32.totalorder %s20, 1
      %p52 = por %p50, %p51
      %p53 = scmp.ne.s32.totalorder %s42, %s43
      %p54 = scmp.eq.s32.totalorder %s20, 0
      %p55 = por %p53, %p54
      %p56 = scmp.ne.s32.totalorder %s42, %s43
      %p57 = scmp.eq.s32.totalorder %s21, 1
      %p58 = por %p56, %p57
      %p60 = scmp.ne.s32.totalorder %s43, %s59
      %p61 = scmp.eq.s32.totalorder %s21, 0
      %p62 = por %p60, %p61
      %s64 = sadd.s32 %s63, 1
      %p67 = scmp.eq.s32.totalorder %s15, 1
      %p68 = scmp.ne.s32.totalorder %s63, %s65
      %p69 = scmp.eq.s32.totalorder %s15, 0
      %p70 = por %p68, %p69
      %p71 = scmp.ne.s32.totalorder %s63, %s65
      %p72 = scmp.eq.s32.totalorder %s20, 1
      %p73 = por %p71, %p72
      %p74 = scmp.ne.s32.totalorder %s65, %s66
      %p75 = scmp.eq.s32.totalorder %s20, 0
      %p76 = por %p74, %p75
      %p77 = scmp.ne.s32.totalorder %s65, %s66
      %p78 = scmp.eq.s32.totalorder %s21, 1
      %p79 = por %p77, %p78
      %p81 = scmp.ne.s32.totalorder %s66, %s80
      %p82 = scmp.eq.s32.totalorder %s21, 0
      %p83 = por %p81, %p82
      %s84 = ssub.s32 %s22, %s34
      %p85 = scmp.eq.s32.totalorder %s84, 0
      %s87 = sadd.s32 %s86, 1
      %s88 = scalar_select %p85, %s86, %s87
      %p91 = pneg %p85
      %p92 = scmp.eq.s32.totalorder %s15, 1
      %p93 = por %p91, %p92
      %p94 = scmp.ne.s32.totalorder %s86, %s89
      %p95 = scmp.eq.s32.totalorder %s15, 0
      %p96 = por %p94, %p95
      %p97 = scmp.ne.s32.totalorder %s86, %s89
      %p98 = scmp.eq.s32.totalorder %s20, 1
      %p99 = por %p97, %p98
      %p100 = scmp.ne.s32.totalorder %s89, %s90
      %p101 = scmp.eq.s32.totalorder %s20, 0
      %p102 = por %p100, %p101
      %p103 = scmp.ne.s32.totalorder %s89, %s90
      %p104 = scmp.eq.s32.totalorder %s21, 1
      %p105 = por %p103, %p104
      %p107 = scmp.ne.s32.totalorder %s90, %s106
      %p108 = scmp.eq.s32.totalorder %s21, 0
      %p109 = por %p107, %p108
      %p110 = scmp.le.s32.totalorder 1, %s15
      %p111 = scmp.lt.s32.totalorder %s15, 3
      %p112 = pnand %p110, %p111
      %p113 = pneg %p112
      // Predicated region
      $region9: #{tpu_custom_call.1} parent=5 // pred_check
        _
      $region10: #{tpu_custom_call.1} parent=5 // pred_check_branch
        %115 = sbr.rel (%p112) target = $region12
      $region11: #{tpu_custom_call.1} parent=5 // pred_region
        %s116 = ssub.s32 %s15, 1
        // Predicated region
        $region13: #{tpu_custom_call.1} parent=11 // pred_check
          %p117 = pneg %p76
        $region14: #{tpu_custom_call.1} parent=11 // pred_check_branch
          %119 = sbr.rel (%p117) target = $region16
        $region15: #{tpu_custom_call.1} parent=11 // pred_region
          %121 = vsyncadd [#allocation9], 0
          %s123 = sshll.u32 %s1, 4
          %s124 = int_to_ptr.hbm [resolvable:$true] %s123
          %126 = dma.hbm_to_smem %s124, 16, [#allocation10], [#allocation9]
        $region16: #{tpu_custom_call.1} parent=11 // pred_fallthru
          _
      $region12: #{tpu_custom_call.1} parent=5 // pred_fallthru
        _
      %p127 = scmp.lt.s32.totalorder %s15, 2
      // Predicated region
      $region17: #{tpu_custom_call.1} parent=5 // pred_check
        %p128 = pneg %p127
      $region18: #{tpu_custom_call.1} parent=5 // pred_check_branch
        %130 = sbr.rel (%p128) target = $region20
      $region19: #{tpu_custom_call.1} parent=5 // pred_region
        // Predicated region
        $region21: #{tpu_custom_call.1} parent=19 // pred_check
          %p131 = pneg %p49
        $region22: #{tpu_custom_call.1} parent=19 // pred_check_branch
          %133 = sbr.rel (%p131) target = $region24
        $region23: #{tpu_custom_call.1} parent=19 // pred_region
          %s134 = sand.u32 %s39, 1
          %s135 = scalar_lea.sflag [#allocation7], %s134
          %s136 = sand.u32 %s39, 1
          %s137 = smul.addr %s136, 8
          %s138 = scalar_lea.vmem [#allocation6], %s137
          %140 = vsyncadd %s135, 0
          %s141 = smul.addr %s23, 2
          %s142 = smul.addr %s22, 2
          %s143 = sadd.s32 %s141, %s142
          %s144 = smul.addr %s143, 4
          %s145 = scalar_lea.hbm %s0, %s144
          %s147 = sshll.u32 %s145, 4
          %s148 = int_to_ptr.hbm [resolvable:$true] %s147
          %s149 = sshll.u32 %s138, 4
          %s150 = int_to_ptr.vmem [resolvable:$true] %s149
          %152 = dma.hbm_to_vmem [thread:$0]  %s148, 128, %s150, %s135
        $region24: #{tpu_custom_call.1} parent=19 // pred_fallthru
          _
      $region20: #{tpu_custom_call.1} parent=5 // pred_fallthru
        _
      %p153 = scmp.le.s32.totalorder 1, %s15
      %p154 = scmp.lt.s32.totalorder %s15, 3
      %p155 = pnand %p153, %p154
      %p156 = pneg %p155
      // Predicated region
      $region25: #{tpu_custom_call.1} parent=5 // pred_check
        _
      $region26: #{tpu_custom_call.1} parent=5 // pred_check_branch
        %158 = sbr.rel (%p155) target = $region28
      $region27: #{tpu_custom_call.1} parent=5 // pred_region
        %s159 = ssub.s32 %s15, 1
        %s160 = sand.u32 %s42, 1
        %s161 = scalar_lea.sflag [#allocation7], %s160
        %s162 = sand.u32 %s42, 1
        %s163 = smul.addr %s162, 8
        %s164 = scalar_lea.vmem [#allocation6], %s163
        // Predicated region
        $region29: #{tpu_custom_call.1} parent=27 // pred_check
          %p165 = pneg %p55
        $region30: #{tpu_custom_call.1} parent=27 // pred_check_branch
          %167 = sbr.rel (%p165) target = $region32
        $region31: #{tpu_custom_call.1} parent=27 // pred_region
          %169 = dma.done %s161, 128
        $region32: #{tpu_custom_call.1} parent=27 // pred_fallthru
          _
        // Predicated region
        $region33: #{tpu_custom_call.1} parent=27 // pred_check
          %p170 = pneg %p76
        $region34: #{tpu_custom_call.1} parent=27 // pred_check_branch
          %172 = sbr.rel (%p170) target = $region36
        $region35: #{tpu_custom_call.1} parent=27 // pred_region
          %174 = dma.done [#allocation9], 16
        $region36: #{tpu_custom_call.1} parent=27 // pred_fallthru
          _
        %175 = sfence
        %s176 = sand.u32 %s42, 1
        %s177 = scalar_lea.sflag [#allocation7], %s176
        %s178 = sand.u32 %s42, 1
        %s179 = smul.addr %s178, 8
        %s180 = scalar_lea.vmem [#allocation6], %s179
        %p181 = pneg %p55
        %p182 = pneg %p52
        %p183 = pneg %p76
        %p184 = pneg %p73
        %p185 = pneg %p102
        %p186 = pneg %p99
        %s187 = sand.u32 %s89, 1
        %s188 = scalar_lea.sflag [#allocation8], %s187
        %s189 = sand.u32 %s89, 1
        %s190 = smul.addr %s189, 16
        %s191 = scalar_lea.vmem [#allocation11], %s190
        %p192 = scmp.eq.s32.totalorder %s25, 0
        // Predicated region
        $region37: #{tpu_custom_call.1} parent=27 // pred_check
          %p193 = pneg %p192
        $region38: #{tpu_custom_call.1} parent=27 // pred_check_branch
          %195 = sbr.rel (%p193) target = $region40
        $region39: #{tpu_custom_call.1} parent=27 // pred_region
          %v196 = vlaneseq
          %vm197 = vcmp.ge.s32.totalorder %v196, 0
          %vm198 = vcmp.lt.s32.totalorder %v196, 256
          %vm199 = vmand %vm197, %vm198
          %200 = vst.msk [vmem:[#allocation2] sm:$0x3] %vm199, 0.0
          %201 = vst.msk [vmem:[#allocation3] sm:$0x3] %vm199, -inf
        $region40: #{tpu_custom_call.1} parent=27 // pred_fallthru
          _
        %v202 = vld [vmem:[%s164] sm:$0xff]
        %v203 = vld [vmem:[#allocation2] sm:$0x3]
        %205 = vst [vmem:[#allocation1] ss:$2 sm:$0xff] %v202
        %v206 = vld.sshfl [vmem:[#allocation1] sm:$0xff pattern:$0x75316420]
        %v207 = vld.sshfl [vmem:[#allocation1 + $0x8] sm:$0xff pattern:$0x75316420]
        %vm210 = vcmask 1043456
        %v211 = vsel %vm210, %v206, 0.0
        %v212 = vrot.slane %v211, 4
        %v213 = vadd.f32 %v211, %v212
        %v214 = vrot.slane %v213, 2
        %v215 = vadd.f32 %v213, %v214
        %v216 = vrot.slane %v215, 1
        %v217 = vadd.f32 %v215, %v216
        %v218 = vsel %vm210, %v207, 0.0
        %v219 = vrot.slane %v218, 4
        %v220 = vadd.f32 %v218, %v219
        %v221 = vrot.slane %v220, 2
        %v222 = vadd.f32 %v220, %v221
        %v223 = vrot.slane %v222, 1
        %v224 = vadd.f32 %v222, %v223
        %v227 = vrot.slane %v224, 7
        %vm228 = vcmask 1040384
        %v229 = vsel %vm228, %v217, %v227
        %v231 = vadd.f32 %v203, %v229
        %v232 = vlaneseq
        %vm233 = vcmp.ge.s32.totalorder %v232, 0
        %vm234 = vcmp.lt.s32.totalorder %v232, 256
        %vm235 = vmand %vm233, %vm234
        %236 = vst.msk [vmem:[#allocation2] sm:$0x3] %vm235, %v231
        %v237 = vld [vmem:[#allocation3] sm:$0x3]
        %238 = vst [vmem:[#allocation1] ss:$2 sm:$0xff] %v202
        %v239 = vld.sshfl [vmem:[#allocation1] sm:$0xff pattern:$0x75316420]
        %v240 = vld.sshfl [vmem:[#allocation1 + $0x8] sm:$0xff pattern:$0x75316420]
        %v243 = vsel %vm210, %v239, -inf
        %v244 = vrot.slane %v243, 4
        %v245 = vmax.f32 %v243, %v244
        %v246 = vrot.slane %v245, 2
        %v247 = vmax.f32 %v245, %v246
        %v248 = vrot.slane %v247, 1
        %v249 = vmax.f32 %v247, %v248
        %v250 = vsel %vm210, %v240, -inf
        %v251 = vrot.slane %v250, 4
        %v252 = vmax.f32 %v250, %v251
        %v253 = vrot.slane %v252, 2
        %v254 = vmax.f32 %v252, %v253
        %v255 = vrot.slane %v254, 1
        %v256 = vmax.f32 %v254, %v255
        %v259 = vrot.slane %v256, 7
        %v260 = vsel %vm228, %v249, %v259
        %v262 = vmax.f32 %v237, %v260
        %263 = vst.msk [vmem:[#allocation3] sm:$0x3] %vm235, %v262
        // Predicated region
        $region41: #{tpu_custom_call.1} parent=27 // pred_check
          %p264 = pneg %p192
        $region42: #{tpu_custom_call.1} parent=27 // pred_check_branch
          %266 = sbr.rel (%p264) target = $region44
        $region43: #{tpu_custom_call.1} parent=27 // pred_region
          %v267 = vld [vmem:[#allocation2] sm:$0x3]
          %v268 = vmul.f32 %v267, 0.25
          %v269 = vld [vmem:[#allocation3] sm:$0x3]
          %vm270 = vcmask 179200
          %271 = vst.msk [vmem:[#allocation4] sm:$0xff] %vm270, 0.0
          %272 = vst.msk [vmem:[#allocation4 + $0x8] sm:$0xff] %vm270, 0.0
          %vm273 = vcmask 177152
          %274 = vst.msk [vmem:[#allocation4 + $0x10] sm:$0x3f] %vm273, 0.0
          %275 = vst.msk [vmem:[#allocation4 + $0x18] sm:$0xff] %vm270, 0.0
          %276 = vst.msk [vmem:[#allocation4 + $0x20] sm:$0xff] %vm270, 0.0
          %277 = vst.msk [vmem:[#allocation4 + $0x28] sm:$0x3f] %vm273, 0.0
          %v279 = vrot.slane %v268, 1
          %280 = vrot.lane.b32.xlu0 %v268, 112
          %v281 = vpop.permute.xlu0 %280
          %v282 = vrot.slane %v281, 1
          %283 = vrot.lane.b32.xlu0 %v268, 96
          %v284 = vpop.permute.xlu0 %283
          %v285 = vrot.slane %v284, 1
          %286 = vrot.lane.b32.xlu0 %v268, 80
          %v287 = vpop.permute.xlu0 %286
          %v288 = vrot.slane %v287, 1
          %289 = vrot.lane.b32.xlu0 %v268, 64
          %v290 = vpop.permute.xlu0 %289
          %v291 = vrot.slane %v290, 1
          %292 = vrot.lane.b32.xlu0 %v268, 48
          %v293 = vpop.permute.xlu0 %292
          %v294 = vrot.slane %v293, 1
          %295 = vrot.lane.b32.xlu0 %v268, 32
          %v296 = vpop.permute.xlu0 %295
          %v297 = vrot.slane %v296, 1
          %298 = vrot.lane.b32.xlu0 %v268, 16
          %v299 = vpop.permute.xlu0 %298
          %v300 = vrot.slane %v299, 1
          %301 = vst [vmem:[#allocation1] ss:$9 sm:$0xff] %v268
          %s302 = scalar_lea.vmem [#allocation1], 1
          %303 = vst [vmem:[%s302] ss:$9 sm:$0xff] %v281
          %s304 = scalar_lea.vmem [#allocation1], 2
          %305 = vst [vmem:[%s304] ss:$9 sm:$0xff] %v284
          %s306 = scalar_lea.vmem [#allocation1], 3
          %307 = vst [vmem:[%s306] ss:$9 sm:$0xff] %v287
          %s308 = scalar_lea.vmem [#allocation1], 4
          %309 = vst [vmem:[%s308] ss:$9 sm:$0xff] %v290
          %s310 = scalar_lea.vmem [#allocation1], 5
          %311 = vst [vmem:[%s310] ss:$9 sm:$0xff] %v293
          %s312 = scalar_lea.vmem [#allocation1], 6
          %313 = vst [vmem:[%s312] ss:$9 sm:$0xff] %v296
          %s314 = scalar_lea.vmem [#allocation1], 7
          %315 = vst [vmem:[%s314] ss:$9 sm:$0xff] %v299
          %v316 = vld [vmem:[#allocation1] sm:$0xff]
          %317 = vst [vmem:[#allocation1] ss:$9 sm:$0xff] %v279
          %318 = vst [vmem:[%s302] ss:$9 sm:$0xff] %v282
          %319 = vst [vmem:[%s304] ss:$9 sm:$0xff] %v285
          %320 = vst [vmem:[%s306] ss:$9 sm:$0xff] %v288
          %321 = vst [vmem:[%s308] ss:$9 sm:$0xff] %v291
          %322 = vst [vmem:[%s310] ss:$9 sm:$0xff] %v294
          %323 = vst [vmem:[%s312] ss:$9 sm:$0xff] %v297
          %324 = vst [vmem:[%s314] ss:$9 sm:$0xff] %v300
          %v325 = vld [vmem:[#allocation1] sm:$0xff]
          %326 = vrot.lane.b32.xlu0 %v316, 3
          %v327 = vpop.permute.xlu0 %326
          %328 = vrot.lane.b32.xlu0 %v325, 3
          %v329 = vpop.permute.xlu0 %328
          %vm332 = vcmask 154648
          %333 = vst.msk [vmem:[#allocation4 + $0x3] sm:$0xff] %vm332, %v327
          %334 = vst.msk [vmem:[#allocation4 + $0xb] sm:$0xff] %vm332, %v329
          %v336 = vrot.slane %v269, 1
          %337 = vrot.lane.b32.xlu0 %v269, 112
          %v338 = vpop.permute.xlu0 %337
          %v339 = vrot.slane %v338, 1
          %340 = vrot.lane.b32.xlu0 %v269, 96
          %v341 = vpop.permute.xlu0 %340
          %v342 = vrot.slane %v341, 1
          %343 = vrot.lane.b32.xlu0 %v269, 80
          %v344 = vpop.permute.xlu0 %343
          %v345 = vrot.slane %v344, 1
          %346 = vrot.lane.b32.xlu0 %v269, 64
          %v347 = vpop.permute.xlu0 %346
          %v348 = vrot.slane %v347, 1
          %349 = vrot.lane.b32.xlu0 %v269, 48
          %v350 = vpop.permute.xlu0 %349
          %v351 = vrot.slane %v350, 1
          %352 = vrot.lane.b32.xlu0 %v269, 32
          %v353 = vpop.permute.xlu0 %352
          %v354 = vrot.slane %v353, 1
          %355 = vrot.lane.b32.xlu0 %v269, 16
          %v356 = vpop.permute.xlu0 %355
          %v357 = vrot.slane %v356, 1
          %358 = vst [vmem:[#allocation1] ss:$9 sm:$0xff] %v269
          %s359 = scalar_lea.vmem [#allocation1], 1
          %360 = vst [vmem:[%s359] ss:$9 sm:$0xff] %v338
          %s361 = scalar_lea.vmem [#allocation1], 2
          %362 = vst [vmem:[%s361] ss:$9 sm:$0xff] %v341
          %s363 = scalar_lea.vmem [#allocation1], 3
          %364 = vst [vmem:[%s363] ss:$9 sm:$0xff] %v344
          %s365 = scalar_lea.vmem [#allocation1], 4
          %366 = vst [vmem:[%s365] ss:$9 sm:$0xff] %v347
          %s367 = scalar_lea.vmem [#allocation1], 5
          %368 = vst [vmem:[%s367] ss:$9 sm:$0xff] %v350
          %s369 = scalar_lea.vmem [#allocation1], 6
          %370 = vst [vmem:[%s369] ss:$9 sm:$0xff] %v353
          %s371 = scalar_lea.vmem [#allocation1], 7
          %372 = vst [vmem:[%s371] ss:$9 sm:$0xff] %v356
          %v373 = vld [vmem:[#allocation1] sm:$0xff]
          %374 = vst [vmem:[#allocation1] ss:$9 sm:$0xff] %v336
          %375 = vst [vmem:[%s359] ss:$9 sm:$0xff] %v339
          %376 = vst [vmem:[%s361] ss:$9 sm:$0xff] %v342
          %377 = vst [vmem:[%s363] ss:$9 sm:$0xff] %v345
          %378 = vst [vmem:[%s365] ss:$9 sm:$0xff] %v348
          %379 = vst [vmem:[%s367] ss:$9 sm:$0xff] %v351
          %380 = vst [vmem:[%s369] ss:$9 sm:$0xff] %v354
          %381 = vst [vmem:[%s371] ss:$9 sm:$0xff] %v357
          %v382 = vld [vmem:[#allocation1] sm:$0xff]
          %383 = vrot.lane.b32.xlu0 %v373, 3
          %v384 = vpop.permute.xlu0 %383
          %385 = vrot.lane.b32.xlu0 %v382, 3
          %v386 = vpop.permute.xlu0 %385
          %s389 = scalar_lea.vmem [#allocation4], 24
          %390 = vst.msk [vmem:[%s389 + $0x3] sm:$0xff] %vm332, %v384
          %391 = vst.msk [vmem:[%s389 + $0xb] sm:$0xff] %vm332, %v386
          %v392 = vld [vmem:[#allocation4] sm:$0xff]
          %v393 = vld [vmem:[#allocation4 + $0x8] sm:$0xff]
          %v394 = vld [vmem:[#allocation4 + $0x10] sm:$0x3f]
          %v395 = vld [vmem:[%s389] sm:$0xff]
          %v396 = vld [vmem:[%s389 + $0x8] sm:$0xff]
          %v397 = vld [vmem:[%s389 + $0x10] sm:$0x3f]
          %vm398 = vcmask 130048
          %399 = vst.msk [vmem:[#allocation5] sm:$0xff] %vm398, %v392
          %400 = vst.msk [vmem:[#allocation5 + $0x8] sm:$0xff] %vm398, %v393
          %vm401 = vcmask 128000
          %402 = vst.msk [vmem:[#allocation5 + $0x10] sm:$0x3f] %vm401, %v394
          %s403 = scalar_lea.vmem [#allocation5], 168
          %404 = vst.msk [vmem:[%s403] sm:$0xff] %vm398, %v395
          %405 = vst.msk [vmem:[%s403 + $0x8] sm:$0xff] %vm398, %v396
          %406 = vst.msk [vmem:[%s403 + $0x10] sm:$0x3f] %vm401, %v397
          %410 = vrot.lane.b32.xlu0 %v392, 127
          %v411 = vpop.permute.xlu0 %410
          %412 = vrot.lane.b32.xlu0 %v393, 127
          %v413 = vpop.permute.xlu0 %412
          %414 = vrot.lane.b32.xlu0 %v394, 127
          %v415 = vpop.permute.xlu0 %414
          %s419 = scalar_lea.vmem [#allocation5], 24
          %420 = vst.msk [vmem:[%s419] sm:$0xff] %vm398, %v411
          %421 = vst.msk [vmem:[%s419 + $0x8] sm:$0xff] %vm398, %v413
          %422 = vst.msk [vmem:[%s419 + $0x10] sm:$0x3f] %vm401, %v415
          %426 = vrot.lane.b32.xlu0 %v395, 127
          %v427 = vpop.permute.xlu0 %426
          %428 = vrot.lane.b32.xlu0 %v396, 127
          %v429 = vpop.permute.xlu0 %428
          %430 = vrot.lane.b32.xlu0 %v397, 127
          %v431 = vpop.permute.xlu0 %430
          %s435 = scalar_lea.vmem [#allocation5], 192
          %436 = vst.msk [vmem:[%s435] sm:$0xff] %vm398, %v427
          %437 = vst.msk [vmem:[%s435 + $0x8] sm:$0xff] %vm398, %v429
          %438 = vst.msk [vmem:[%s435 + $0x10] sm:$0x3f] %vm401, %v431
          %439 = vrot.lane.b32.xlu0 %v392, 126
          %v440 = vpop.permute.xlu0 %439
          %441 = vrot.lane.b32.xlu0 %v393, 126
          %v442 = vpop.permute.xlu0 %441
          %443 = vrot.lane.b32.xlu0 %v394, 126
          %v444 = vpop.permute.xlu0 %443
          %s448 = scalar_lea.vmem [#allocation5], 48
          %449 = vst.msk [vmem:[%s448] sm:$0xff] %vm398, %v440
          %450 = vst.msk [vmem:[%s448 + $0x8] sm:$0xff] %vm398, %v442
          %451 = vst.msk [vmem:[%s448 + $0x10] sm:$0x3f] %vm401, %v444
          %452 = vrot.lane.b32.xlu0 %v395, 126
          %v453 = vpop.permute.xlu0 %452
          %454 = vrot.lane.b32.xlu0 %v396, 126
          %v455 = vpop.permute.xlu0 %454
          %456 = vrot.lane.b32.xlu0 %v397, 126
          %v457 = vpop.permute.xlu0 %456
          %s461 = scalar_lea.vmem [#allocation5], 216
          %462 = vst.msk [vmem:[%s461] sm:$0xff] %vm398, %v453
          %463 = vst.msk [vmem:[%s461 + $0x8] sm:$0xff] %vm398, %v455
          %464 = vst.msk [vmem:[%s461 + $0x10] sm:$0x3f] %vm401, %v457
          %465 = vrot.lane.b32.xlu0 %v392, 125
          %v466 = vpop.permute.xlu0 %465
          %467 = vrot.lane.b32.xlu0 %v393, 125
          %v468 = vpop.permute.xlu0 %467
          %469 = vrot.lane.b32.xlu0 %v394, 125
          %v470 = vpop.permute.xlu0 %469
          %s474 = scalar_lea.vmem [#allocation5], 72
          %475 = vst.msk [vmem:[%s474] sm:$0xff] %vm398, %v466
          %476 = vst.msk [vmem:[%s474 + $0x8] sm:$0xff] %vm398, %v468
          %477 = vst.msk [vmem:[%s474 + $0x10] sm:$0x3f] %vm401, %v470
          %478 = vrot.lane.b32.xlu0 %v395, 125
          %v479 = vpop.permute.xlu0 %478
          %480 = vrot.lane.b32.xlu0 %v396, 125
          %v481 = vpop.permute.xlu0 %480
          %482 = vrot.lane.b32.xlu0 %v397, 125
          %v483 = vpop.permute.xlu0 %482
          %s487 = scalar_lea.vmem [#allocation5], 240
          %488 = vst.msk [vmem:[%s487] sm:$0xff] %vm398, %v479
          %489 = vst.msk [vmem:[%s487 + $0x8] sm:$0xff] %vm398, %v481
          %490 = vst.msk [vmem:[%s487 + $0x10] sm:$0x3f] %vm401, %v483
          %491 = vrot.lane.b32.xlu0 %v392, 124
          %v492 = vpop.permute.xlu0 %491
          %493 = vrot.lane.b32.xlu0 %v393, 124
          %v494 = vpop.permute.xlu0 %493
          %495 = vrot.lane.b32.xlu0 %v394, 124
          %v496 = vpop.permute.xlu0 %495
          %s500 = scalar_lea.vmem [#allocation5], 96
          %501 = vst.msk [vmem:[%s500] sm:$0xff] %vm398, %v492
          %502 = vst.msk [vmem:[%s500 + $0x8] sm:$0xff] %vm398, %v494
          %503 = vst.msk [vmem:[%s500 + $0x10] sm:$0x3f] %vm401, %v496
          %504 = vrot.lane.b32.xlu0 %v395, 124
          %v505 = vpop.permute.xlu0 %504
          %506 = vrot.lane.b32.xlu0 %v396, 124
          %v507 = vpop.permute.xlu0 %506
          %508 = vrot.lane.b32.xlu0 %v397, 124
          %v509 = vpop.permute.xlu0 %508
          %s513 = scalar_lea.vmem [#allocation5], 264
          %514 = vst.msk [vmem:[%s513] sm:$0xff] %vm398, %v505
          %515 = vst.msk [vmem:[%s513 + $0x8] sm:$0xff] %vm398, %v507
          %516 = vst.msk [vmem:[%s513 + $0x10] sm:$0x3f] %vm401, %v509
          %517 = vrot.lane.b32.xlu0 %v392, 123
          %v518 = vpop.permute.xlu0 %517
          %519 = vrot.lane.b32.xlu0 %v393, 123
          %v520 = vpop.permute.xlu0 %519
          %521 = vrot.lane.b32.xlu0 %v394, 123
          %v522 = vpop.permute.xlu0 %521
          %s526 = scalar_lea.vmem [#allocation5], 120
          %527 = vst.msk [vmem:[%s526] sm:$0xff] %vm398, %v518
          %528 = vst.msk [vmem:[%s526 + $0x8] sm:$0xff] %vm398, %v520
          %529 = vst.msk [vmem:[%s526 + $0x10] sm:$0x3f] %vm401, %v522
          %530 = vrot.lane.b32.xlu0 %v395, 123
          %v531 = vpop.permute.xlu0 %530
          %532 = vrot.lane.b32.xlu0 %v396, 123
          %v533 = vpop.permute.xlu0 %532
          %534 = vrot.lane.b32.xlu0 %v397, 123
          %v535 = vpop.permute.xlu0 %534
          %s539 = scalar_lea.vmem [#allocation5], 288
          %540 = vst.msk [vmem:[%s539] sm:$0xff] %vm398, %v531
          %541 = vst.msk [vmem:[%s539 + $0x8] sm:$0xff] %vm398, %v533
          %542 = vst.msk [vmem:[%s539 + $0x10] sm:$0x3f] %vm401, %v535
          %543 = vrot.lane.b32.xlu0 %v392, 122
          %v544 = vpop.permute.xlu0 %543
          %545 = vrot.lane.b32.xlu0 %v393, 122
          %v546 = vpop.permute.xlu0 %545
          %547 = vrot.lane.b32.xlu0 %v394, 122
          %v548 = vpop.permute.xlu0 %547
          %s552 = scalar_lea.vmem [#allocation5], 144
          %553 = vst.msk [vmem:[%s552] sm:$0xff] %vm398, %v544
          %554 = vst.msk [vmem:[%s552 + $0x8] sm:$0xff] %vm398, %v546
          %555 = vst.msk [vmem:[%s552 + $0x10] sm:$0x3f] %vm401, %v548
          %556 = vrot.lane.b32.xlu0 %v395, 122
          %v557 = vpop.permute.xlu0 %556
          %558 = vrot.lane.b32.xlu0 %v396, 122
          %v559 = vpop.permute.xlu0 %558
          %560 = vrot.lane.b32.xlu0 %v397, 122
          %v561 = vpop.permute.xlu0 %560
          %s565 = scalar_lea.vmem [#allocation5], 312
          %566 = vst.msk [vmem:[%s565] sm:$0xff] %vm398, %v557
          %567 = vst.msk [vmem:[%s565 + $0x8] sm:$0xff] %vm398, %v559
          %568 = vst.msk [vmem:[%s565 + $0x10] sm:$0x3f] %vm401, %v561
          %v569 = vld [vmem:[#allocation5] sm:$0xff]
          %v570 = vld [vmem:[#allocation5 + $0x8] sm:$0xff]
          %v571 = vld [vmem:[%s403] sm:$0xff]
          %v572 = vld [vmem:[%s403 + $0x8] sm:$0xff]
          %s573 = sld [smem:[#allocation10]]
          %s574 = sld [smem:[#allocation10 + $0x31]]
          %v575 = vstv %s573
          %v576 = vmul.f32 %v575, %v569
          %v577 = vmul.f32 %v575, %v570
          %v578 = vstv %s574
          %v579 = vmul.f32 %v578, %v571
          %v580 = vmul.f32 %v578, %v572
          %v581 = vadd.f32 %v576, %v579
          %v582 = vadd.f32 %v577, %v580
          %v583 = vadd.f32 %v581, 0.0
          %v584 = vadd.f32 %v582, 0.0
          %v585 = vld [vmem:[%s419] sm:$0xff]
          %v586 = vld [vmem:[%s419 + $0x8] sm:$0xff]
          %v587 = vld [vmem:[%s435] sm:$0xff]
          %v588 = vld [vmem:[%s435 + $0x8] sm:$0xff]
          %s589 = sld [smem:[#allocation10 + $0x1]]
          %s590 = sld [smem:[#allocation10 + $0x32]]
          %v591 = vstv %s589
          %v592 = vmul.f32 %v591, %v585
          %v593 = vmul.f32 %v591, %v586
          %v594 = vstv %s590
          %v595 = vmul.f32 %v594, %v587
          %v596 = vmul.f32 %v594, %v588
          %v597 = vadd.f32 %v592, %v595
          %v598 = vadd.f32 %v593, %v596
          %v599 = vadd.f32 %v597, 0.0
          %v600 = vadd.f32 %v598, 0.0
          %v601 = vld [vmem:[%s448] sm:$0xff]
          %v602 = vld [vmem:[%s448 + $0x8] sm:$0xff]
          %v603 = vld [vmem:[%s461] sm:$0xff]
          %v604 = vld [vmem:[%s461 + $0x8] sm:$0xff]
          %s605 = sld [smem:[#allocation10 + $0x2]]
          %s606 = sld [smem:[#allocation10 + $0x33]]
          %v607 = vstv %s605
          %v608 = vmul.f32 %v607, %v601
          %v609 = vmul.f32 %v607, %v602
          %v610 = vstv %s606
          %v611 = vmul.f32 %v610, %v603
          %v612 = vmul.f32 %v610, %v604
          %v613 = vadd.f32 %v608, %v611
          %v614 = vadd.f32 %v609, %v612
          %v615 = vadd.f32 %v613, 0.0
          %v616 = vadd.f32 %v614, 0.0
          %v617 = vld [vmem:[%s474] sm:$0xff]
          %v618 = vld [vmem:[%s474 + $0x8] sm:$0xff]
          %v619 = vld [vmem:[%s487] sm:$0xff]
          %v620 = vld [vmem:[%s487 + $0x8] sm:$0xff]
          %s621 = sld [smem:[#allocation10 + $0x3]]
          %s622 = sld [smem:[#allocation10 + $0x34]]
          %v623 = vstv %s621
          %v624 = vmul.f32 %v623, %v617
          %v625 = vmul.f32 %v623, %v618
          %v626 = vstv %s622
          %v627 = vmul.f32 %v626, %v619
          %v628 = vmul.f32 %v626, %v620
          %v629 = vadd.f32 %v624, %v627
          %v630 = vadd.f32 %v625, %v628
          %v631 = vadd.f32 %v629, 0.0
          %v632 = vadd.f32 %v630, 0.0
          %v633 = vld [vmem:[%s500] sm:$0xff]
          %v634 = vld [vmem:[%s500 + $0x8] sm:$0xff]
          %v635 = vld [vmem:[%s513] sm:$0xff]
          %v636 = vld [vmem:[%s513 + $0x8] sm:$0xff]
          %s637 = sld [smem:[#allocation10 + $0x4]]
          %s638 = sld [smem:[#allocation10 + $0x35]]
          %v639 = vstv %s637
          %v640 = vmul.f32 %v639, %v633
          %v641 = vmul.f32 %v639, %v634
          %v642 = vstv %s638
          %v643 = vmul.f32 %v642, %v635
          %v644 = vmul.f32 %v642, %v636
          %v645 = vadd.f32 %v640, %v643
          %v646 = vadd.f32 %v641, %v644
          %v647 = vadd.f32 %v583, %v645
          %v648 = vadd.f32 %v584, %v646
          %v649 = vld [vmem:[%s526] sm:$0xff]
          %v650 = vld [vmem:[%s526 + $0x8] sm:$0xff]
          %v651 = vld [vmem:[%s539] sm:$0xff]
          %v652 = vld [vmem:[%s539 + $0x8] sm:$0xff]
          %s653 = sld [smem:[#allocation10 + $0x5]]
          %s654 = sld [smem:[#allocation10 + $0x36]]
          %v655 = vstv %s653
          %v656 = vmul.f32 %v655, %v649
          %v657 = vmul.f32 %v655, %v650
          %v658 = vstv %s654
          %v659 = vmul.f32 %v658, %v651
          %v660 = vmul.f32 %v658, %v652
          %v661 = vadd.f32 %v656, %v659
          %v662 = vadd.f32 %v657, %v660
          %v663 = vadd.f32 %v599, %v661
          %v664 = vadd.f32 %v600, %v662
          %v665 = vld [vmem:[%s552] sm:$0xff]
          %v666 = vld [vmem:[%s552 + $0x8] sm:$0xff]
          %v667 = vld [vmem:[%s565] sm:$0xff]
          %v668 = vld [vmem:[%s565 + $0x8] sm:$0xff]
          %s669 = sld [smem:[#allocation10 + $0x6]]
          %s670 = sld [smem:[#allocation10 + $0x37]]
          %v671 = vstv %s669
          %v672 = vmul.f32 %v671, %v665
          %v673 = vmul.f32 %v671, %v666
          %v674 = vstv %s670
          %v675 = vmul.f32 %v674, %v667
          %v676 = vmul.f32 %v674, %v668
          %v677 = vadd.f32 %v672, %v675
          %v678 = vadd.f32 %v673, %v676
          %v679 = vadd.f32 %v615, %v677
          %v680 = vadd.f32 %v616, %v678
          %v681 = vld [vmem:[#allocation5 + $0x1] sm:$0xff]
          %v682 = vld [vmem:[#allocation5 + $0x9] sm:$0xff]
          %v683 = vld [vmem:[%s403 + $0x1] sm:$0xff]
          %v684 = vld [vmem:[%s403 + $0x9] sm:$0xff]
          %s685 = sld [smem:[#allocation10 + $0x7]]
          %s686 = sld [smem:[#allocation10 + $0x38]]
          %v687 = vstv %s685
          %v688 = vmul.f32 %v687, %v681
          %v689 = vmul.f32 %v687, %v682
          %v690 = vstv %s686
          %v691 = vmul.f32 %v690, %v683
          %v692 = vmul.f32 %v690, %v684
          %v693 = vadd.f32 %v688, %v691
          %v694 = vadd.f32 %v689, %v692
          %v695 = vadd.f32 %v631, %v693
          %v696 = vadd.f32 %v632, %v694
          %v697 = vld [vmem:[%s419 + $0x1] sm:$0xff]
          %v698 = vld [vmem:[%s419 + $0x9] sm:$0xff]
          %v699 = vld [vmem:[%s435 + $0x1] sm:$0xff]
          %v700 = vld [vmem:[%s435 + $0x9] sm:$0xff]
          %s701 = sld [smem:[#allocation10 + $0x8]]
          %s702 = sld [smem:[#allocation10 + $0x39]]
          %v703 = vstv %s701
          %v704 = vmul.f32 %v703, %v697
          %v705 = vmul.f32 %v703, %v698
          %v706 = vstv %s702
          %v707 = vmul.f32 %v706, %v699
          %v708 = vmul.f32 %v706, %v700
          %v709 = vadd.f32 %v704, %v707
          %v710 = vadd.f32 %v705, %v708
          %v711 = vadd.f32 %v647, %v709
          %v712 = vadd.f32 %v648, %v710
          %v713 = vld [vmem:[%s448 + $0x1] sm:$0xff]
          %v714 = vld [vmem:[%s448 + $0x9] sm:$0xff]
          %v715 = vld [vmem:[%s461 + $0x1] sm:$0xff]
          %v716 = vld [vmem:[%s461 + $0x9] sm:$0xff]
          %s717 = sld [smem:[#allocation10 + $0x9]]
          %s718 = sld [smem:[#allocation10 + $0x3a]]
          %v719 = vstv %s717
          %v720 = vmul.f32 %v719, %v713
          %v721 = vmul.f32 %v719, %v714
          %v722 = vstv %s718
          %v723 = vmul.f32 %v722, %v715
          %v724 = vmul.f32 %v722, %v716
          %v725 = vadd.f32 %v720, %v723
          %v726 = vadd.f32 %v721, %v724
          %v727 = vadd.f32 %v663, %v725
          %v728 = vadd.f32 %v664, %v726
          %v729 = vld [vmem:[%s474 + $0x1] sm:$0xff]
          %v730 = vld [vmem:[%s474 + $0x9] sm:$0xff]
          %v731 = vld [vmem:[%s487 + $0x1] sm:$0xff]
          %v732 = vld [vmem:[%s487 + $0x9] sm:$0xff]
          %s733 = sld [smem:[#allocation10 + $0xa]]
          %s734 = sld [smem:[#allocation10 + $0x3b]]
          %v735 = vstv %s733
          %v736 = vmul.f32 %v735, %v729
          %v737 = vmul.f32 %v735, %v730
          %v738 = vstv %s734
          %v739 = vmul.f32 %v738, %v731
          %v740 = vmul.f32 %v738, %v732
          %v741 = vadd.f32 %v736, %v739
          %v742 = vadd.f32 %v737, %v740
          %v743 = vadd.f32 %v679, %v741
          %v744 = vadd.f32 %v680, %v742
          %v745 = vld [vmem:[%s500 + $0x1] sm:$0xff]
          %v746 = vld [vmem:[%s500 + $0x9] sm:$0xff]
          %v747 = vld [vmem:[%s513 + $0x1] sm:$0xff]
          %v748 = vld [vmem:[%s513 + $0x9] sm:$0xff]
          %s749 = sld [smem:[#allocation10 + $0xb]]
          %s750 = sld [smem:[#allocation10 + $0x3c]]
          %v751 = vstv %s749
          %v752 = vmul.f32 %v751, %v745
          %v753 = vmul.f32 %v751, %v746
          %v754 = vstv %s750
          %v755 = vmul.f32 %v754, %v747
          %v756 = vmul.f32 %v754, %v748
          %v757 = vadd.f32 %v752, %v755
          %v758 = vadd.f32 %v753, %v756
          %v759 = vadd.f32 %v695, %v757
          %v760 = vadd.f32 %v696, %v758
          %v761 = vld [vmem:[%s526 + $0x1] sm:$0xff]
          %v762 = vld [vmem:[%s526 + $0x9] sm:$0xff]
          %v763 = vld [vmem:[%s539 + $0x1] sm:$0xff]
          %v764 = vld [vmem:[%s539 + $0x9] sm:$0xff]
          %s765 = sld [smem:[#allocation10 + $0xc]]
          %s766 = sld [smem:[#allocation10 + $0x3d]]
          %v767 = vstv %s765
          %v768 = vmul.f32 %v767, %v761
          %v769 = vmul.f32 %v767, %v762
          %v770 = vstv %s766
          %v771 = vmul.f32 %v770, %v763
          %v772 = vmul.f32 %v770, %v764
          %v773 = vadd.f32 %v768, %v771
          %v774 = vadd.f32 %v769, %v772
          %v775 = vadd.f32 %v711, %v773
          %v776 = vadd.f32 %v712, %v774
          %v777 = vld [vmem:[%s552 + $0x1] sm:$0xff]
          %v778 = vld [vmem:[%s552 + $0x9] sm:$0xff]
          %v779 = vld [vmem:[%s565 + $0x1] sm:$0xff]
          %v780 = vld [vmem:[%s565 + $0x9] sm:$0xff]
          %s781 = sld [smem:[#allocation10 + $0xd]]
          %s782 = sld [smem:[#allocation10 + $0x3e]]
          %v783 = vstv %s781
          %v784 = vmul.f32 %v783, %v777
          %v785 = vmul.f32 %v783, %v778
          %v786 = vstv %s782
          %v787 = vmul.f32 %v786, %v779
          %v788 = vmul.f32 %v786, %v780
          %v789 = vadd.f32 %v784, %v787
          %v790 = vadd.f32 %v785, %v788
          %v791 = vadd.f32 %v727, %v789
          %v792 = vadd.f32 %v728, %v790
          %v793 = vld [vmem:[#allocation5 + $0x2] sm:$0xff]
          %v794 = vld [vmem:[#allocation5 + $0xa] sm:$0xff]
          %v795 = vld [vmem:[%s403 + $0x2] sm:$0xff]
          %v796 = vld [vmem:[%s403 + $0xa] sm:$0xff]
          %s797 = sld [smem:[#allocation10 + $0xe]]
          %s798 = sld [smem:[#allocation10 + $0x3f]]
          %v799 = vstv %s797
          %v800 = vmul.f32 %v799, %v793
          %v801 = vmul.f32 %v799, %v794
          %v802 = vstv %s798
          %v803 = vmul.f32 %v802, %v795
          %v804 = vmul.f32 %v802, %v796
          %v805 = vadd.f32 %v800, %v803
          %v806 = vadd.f32 %v801, %v804
          %v807 = vadd.f32 %v743, %v805
          %v808 = vadd.f32 %v744, %v806
          %v809 = vld [vmem:[%s419 + $0x2] sm:$0xff]
          %v810 = vld [vmem:[%s419 + $0xa] sm:$0xff]
          %v811 = vld [vmem:[%s435 + $0x2] sm:$0xff]
          %v812 = vld [vmem:[%s435 + $0xa] sm:$0xff]
          %s813 = sld [smem:[#allocation10 + $0xf]]
          %s814 = sld [smem:[#allocation10 + $0x40]]
          %v815 = vstv %s813
          %v816 = vmul.f32 %v815, %v809
          %v817 = vmul.f32 %v815, %v810
          %v818 = vstv %s814
          %v819 = vmul.f32 %v818, %v811
          %v820 = vmul.f32 %v818, %v812
          %v821 = vadd.f32 %v816, %v819
          %v822 = vadd.f32 %v817, %v820
          %v823 = vadd.f32 %v759, %v821
          %v824 = vadd.f32 %v760, %v822
          %v825 = vld [vmem:[%s448 + $0x2] sm:$0xff]
          %v826 = vld [vmem:[%s448 + $0xa] sm:$0xff]
          %v827 = vld [vmem:[%s461 + $0x2] sm:$0xff]
          %v828 = vld [vmem:[%s461 + $0xa] sm:$0xff]
          %s829 = sld [smem:[#allocation10 + $0x10]]
          %s830 = sld [smem:[#allocation10 + $0x41]]
          %v831 = vstv %s829
          %v832 = vmul.f32 %v831, %v825
          %v833 = vmul.f32 %v831, %v826
          %v834 = vstv %s830
          %v835 = vmul.f32 %v834, %v827
          %v836 = vmul.f32 %v834, %v828
          %v837 = vadd.f32 %v832, %v835
          %v838 = vadd.f32 %v833, %v836
          %v839 = vadd.f32 %v775, %v837
          %v840 = vadd.f32 %v776, %v838
          %v841 = vld [vmem:[%s474 + $0x2] sm:$0xff]
          %v842 = vld [vmem:[%s474 + $0xa] sm:$0xff]
          %v843 = vld [vmem:[%s487 + $0x2] sm:$0xff]
          %v844 = vld [vmem:[%s487 + $0xa] sm:$0xff]
          %s845 = sld [smem:[#allocation10 + $0x11]]
          %s846 = sld [smem:[#allocation10 + $0x42]]
          %v847 = vstv %s845
          %v848 = vmul.f32 %v847, %v841
          %v849 = vmul.f32 %v847, %v842
          %v850 = vstv %s846
          %v851 = vmul.f32 %v850, %v843
          %v852 = vmul.f32 %v850, %v844
          %v853 = vadd.f32 %v848, %v851
          %v854 = vadd.f32 %v849, %v852
          %v855 = vadd.f32 %v791, %v853
          %v856 = vadd.f32 %v792, %v854
          %v857 = vld [vmem:[%s500 + $0x2] sm:$0xff]
          %v858 = vld [vmem:[%s500 + $0xa] sm:$0xff]
          %v859 = vld [vmem:[%s513 + $0x2] sm:$0xff]
          %v860 = vld [vmem:[%s513 + $0xa] sm:$0xff]
          %s861 = sld [smem:[#allocation10 + $0x12]]
          %s862 = sld [smem:[#allocation10 + $0x43]]
          %v863 = vstv %s861
          %v864 = vmul.f32 %v863, %v857
          %v865 = vmul.f32 %v863, %v858
          %v866 = vstv %s862
          %v867 = vmul.f32 %v866, %v859
          %v868 = vmul.f32 %v866, %v860
          %v869 = vadd.f32 %v864, %v867
          %v870 = vadd.f32 %v865, %v868
          %v871 = vadd.f32 %v807, %v869
          %v872 = vadd.f32 %v808, %v870
          %v873 = vld [vmem:[%s526 + $0x2] sm:$0xff]
          %v874 = vld [vmem:[%s526 + $0xa] sm:$0xff]
          %v875 = vld [vmem:[%s539 + $0x2] sm:$0xff]
          %v876 = vld [vmem:[%s539 + $0xa] sm:$0xff]
          %s877 = sld [smem:[#allocation10 + $0x13]]
          %s878 = sld [smem:[#allocation10 + $0x44]]
          %v879 = vstv %s877
          %v880 = vmul.f32 %v879, %v873
          %v881 = vmul.f32 %v879, %v874
          %v882 = vstv %s878
          %v883 = vmul.f32 %v882, %v875
          %v884 = vmul.f32 %v882, %v876
          %v885 = vadd.f32 %v880, %v883
          %v886 = vadd.f32 %v881, %v884
          %v887 = vadd.f32 %v823, %v885
          %v888 = vadd.f32 %v824, %v886
          %v889 = vld [vmem:[%s552 + $0x2] sm:$0xff]
          %v890 = vld [vmem:[%s552 + $0xa] sm:$0xff]
          %v891 = vld [vmem:[%s565 + $0x2] sm:$0xff]
          %v892 = vld [vmem:[%s565 + $0xa] sm:$0xff]
          %s893 = sld [smem:[#allocation10 + $0x14]]
          %s894 = sld [smem:[#allocation10 + $0x45]]
          %v895 = vstv %s893
          %v896 = vmul.f32 %v895, %v889
          %v897 = vmul.f32 %v895, %v890
          %v898 = vstv %s894
          %v899 = vmul.f32 %v898, %v891
          %v900 = vmul.f32 %v898, %v892
          %v901 = vadd.f32 %v896, %v899
          %v902 = vadd.f32 %v897, %v900
          %v903 = vadd.f32 %v839, %v901
          %v904 = vadd.f32 %v840, %v902
          %v905 = vld [vmem:[#allocation5 + $0x3] sm:$0xff]
          %v906 = vld [vmem:[#allocation5 + $0xb] sm:$0xff]
          %v907 = vld [vmem:[%s403 + $0x3] sm:$0xff]
          %v908 = vld [vmem:[%s403 + $0xb] sm:$0xff]
          %s909 = sld [smem:[#allocation10 + $0x15]]
          %s910 = sld [smem:[#allocation10 + $0x46]]
          %v911 = vstv %s909
          %v912 = vmul.f32 %v911, %v905
          %v913 = vmul.f32 %v911, %v906
          %v914 = vstv %s910
          %v915 = vmul.f32 %v914, %v907
          %v916 = vmul.f32 %v914, %v908
          %v917 = vadd.f32 %v912, %v915
          %v918 = vadd.f32 %v913, %v916
          %v919 = vadd.f32 %v855, %v917
          %v920 = vadd.f32 %v856, %v918
          %v921 = vld [vmem:[%s419 + $0x3] sm:$0xff]
          %v922 = vld [vmem:[%s419 + $0xb] sm:$0xff]
          %v923 = vld [vmem:[%s435 + $0x3] sm:$0xff]
          %v924 = vld [vmem:[%s435 + $0xb] sm:$0xff]
          %s925 = sld [smem:[#allocation10 + $0x16]]
          %s926 = sld [smem:[#allocation10 + $0x47]]
          %v927 = vstv %s925
          %v928 = vmul.f32 %v927, %v921
          %v929 = vmul.f32 %v927, %v922
          %v930 = vstv %s926
          %v931 = vmul.f32 %v930, %v923
          %v932 = vmul.f32 %v930, %v924
          %v933 = vadd.f32 %v928, %v931
          %v934 = vadd.f32 %v929, %v932
          %v935 = vadd.f32 %v871, %v933
          %v936 = vadd.f32 %v872, %v934
          %v937 = vld [vmem:[%s448 + $0x3] sm:$0xff]
          %v938 = vld [vmem:[%s448 + $0xb] sm:$0xff]
          %v939 = vld [vmem:[%s461 + $0x3] sm:$0xff]
          %v940 = vld [vmem:[%s461 + $0xb] sm:$0xff]
          %s941 = sld [smem:[#allocation10 + $0x17]]
          %s942 = sld [smem:[#allocation10 + $0x48]]
          %v943 = vstv %s941
          %v944 = vmul.f32 %v943, %v937
          %v945 = vmul.f32 %v943, %v938
          %v946 = vstv %s942
          %v947 = vmul.f32 %v946, %v939
          %v948 = vmul.f32 %v946, %v940
          %v949 = vadd.f32 %v944, %v947
          %v950 = vadd.f32 %v945, %v948
          %v951 = vadd.f32 %v887, %v949
          %v952 = vadd.f32 %v888, %v950
          %v953 = vld [vmem:[%s474 + $0x3] sm:$0xff]
          %v954 = vld [vmem:[%s474 + $0xb] sm:$0xff]
          %v955 = vld [vmem:[%s487 + $0x3] sm:$0xff]
          %v956 = vld [vmem:[%s487 + $0xb] sm:$0xff]
          %s957 = sld [smem:[#allocation10 + $0x18]]
          %s958 = sld [smem:[#allocation10 + $0x49]]
          %v959 = vstv %s957
          %v960 = vmul.f32 %v959, %v953
          %v961 = vmul.f32 %v959, %v954
          %v962 = vstv %s958
          %v963 = vmul.f32 %v962, %v955
          %v964 = vmul.f32 %v962, %v956
          %v965 = vadd.f32 %v960, %v963
          %v966 = vadd.f32 %v961, %v964
          %v967 = vadd.f32 %v903, %v965
          %v968 = vadd.f32 %v904, %v966
          %v969 = vld [vmem:[%s500 + $0x3] sm:$0xff]
          %v970 = vld [vmem:[%s500 + $0xb] sm:$0xff]
          %v971 = vld [vmem:[%s513 + $0x3] sm:$0xff]
          %v972 = vld [vmem:[%s513 + $0xb] sm:$0xff]
          %s973 = sld [smem:[#allocation10 + $0x19]]
          %s974 = sld [smem:[#allocation10 + $0x4a]]
          %v975 = vstv %s973
          %v976 = vmul.f32 %v975, %v969
          %v977 = vmul.f32 %v975, %v970
          %v978 = vstv %s974
          %v979 = vmul.f32 %v978, %v971
          %v980 = vmul.f32 %v978, %v972
          %v981 = vadd.f32 %v976, %v979
          %v982 = vadd.f32 %v977, %v980
          %v983 = vadd.f32 %v919, %v981
          %v984 = vadd.f32 %v920, %v982
          %v985 = vld [vmem:[%s526 + $0x3] sm:$0xff]
          %v986 = vld [vmem:[%s526 + $0xb] sm:$0xff]
          %v987 = vld [vmem:[%s539 + $0x3] sm:$0xff]
          %v988 = vld [vmem:[%s539 + $0xb] sm:$0xff]
          %s989 = sld [smem:[#allocation10 + $0x1a]]
          %s990 = sld [smem:[#allocation10 + $0x4b]]
          %v991 = vstv %s989
          %v992 = vmul.f32 %v991, %v985
          %v993 = vmul.f32 %v991, %v986
          %v994 = vstv %s990
          %v995 = vmul.f32 %v994, %v987
          %v996 = vmul.f32 %v994, %v988
          %v997 = vadd.f32 %v992, %v995
          %v998 = vadd.f32 %v993, %v996
          %v999 = vadd.f32 %v935, %v997
          %v1000 = vadd.f32 %v936, %v998
          %v1001 = vld [vmem:[%s552 + $0x3] sm:$0xff]
          %v1002 = vld [vmem:[%s552 + $0xb] sm:$0xff]
          %v1003 = vld [vmem:[%s565 + $0x3] sm:$0xff]
          %v1004 = vld [vmem:[%s565 + $0xb] sm:$0xff]
          %s1005 = sld [smem:[#allocation10 + $0x1b]]
          %s1006 = sld [smem:[#allocation10 + $0x4c]]
          %v1007 = vstv %s1005
          %v1008 = vmul.f32 %v1007, %v1001
          %v1009 = vmul.f32 %v1007, %v1002
          %v1010 = vstv %s1006
          %v1011 = vmul.f32 %v1010, %v1003
          %v1012 = vmul.f32 %v1010, %v1004
          %v1013 = vadd.f32 %v1008, %v1011
          %v1014 = vadd.f32 %v1009, %v1012
          %v1015 = vadd.f32 %v951, %v1013
          %v1016 = vadd.f32 %v952, %v1014
          %v1017 = vld [vmem:[#allocation5 + $0x4] sm:$0xff]
          %v1018 = vld [vmem:[#allocation5 + $0xc] sm:$0xff]
          %v1019 = vld [vmem:[%s403 + $0x4] sm:$0xff]
          %v1020 = vld [vmem:[%s403 + $0xc] sm:$0xff]
          %s1021 = sld [smem:[#allocation10 + $0x1c]]
          %s1022 = sld [smem:[#allocation10 + $0x4d]]
          %v1023 = vstv %s1021
          %v1024 = vmul.f32 %v1023, %v1017
          %v1025 = vmul.f32 %v1023, %v1018
          %v1026 = vstv %s1022
          %v1027 = vmul.f32 %v1026, %v1019
          %v1028 = vmul.f32 %v1026, %v1020
          %v1029 = vadd.f32 %v1024, %v1027
          %v1030 = vadd.f32 %v1025, %v1028
          %v1031 = vadd.f32 %v967, %v1029
          %v1032 = vadd.f32 %v968, %v1030
          %v1033 = vld [vmem:[%s419 + $0x4] sm:$0xff]
          %v1034 = vld [vmem:[%s419 + $0xc] sm:$0xff]
          %v1035 = vld [vmem:[%s435 + $0x4] sm:$0xff]
          %v1036 = vld [vmem:[%s435 + $0xc] sm:$0xff]
          %s1037 = sld [smem:[#allocation10 + $0x1d]]
          %s1038 = sld [smem:[#allocation10 + $0x4e]]
          %v1039 = vstv %s1037
          %v1040 = vmul.f32 %v1039, %v1033
          %v1041 = vmul.f32 %v1039, %v1034
          %v1042 = vstv %s1038
          %v1043 = vmul.f32 %v1042, %v1035
          %v1044 = vmul.f32 %v1042, %v1036
          %v1045 = vadd.f32 %v1040, %v1043
          %v1046 = vadd.f32 %v1041, %v1044
          %v1047 = vadd.f32 %v983, %v1045
          %v1048 = vadd.f32 %v984, %v1046
          %v1049 = vld [vmem:[%s448 + $0x4] sm:$0xff]
          %v1050 = vld [vmem:[%s448 + $0xc] sm:$0xff]
          %v1051 = vld [vmem:[%s461 + $0x4] sm:$0xff]
          %v1052 = vld [vmem:[%s461 + $0xc] sm:$0xff]
          %s1053 = sld [smem:[#allocation10 + $0x1e]]
          %s1054 = sld [smem:[#allocation10 + $0x4f]]
          %v1055 = vstv %s1053
          %v1056 = vmul.f32 %v1055, %v1049
          %v1057 = vmul.f32 %v1055, %v1050
          %v1058 = vstv %s1054
          %v1059 = vmul.f32 %v1058, %v1051
          %v1060 = vmul.f32 %v1058, %v1052
          %v1061 = vadd.f32 %v1056, %v1059
          %v1062 = vadd.f32 %v1057, %v1060
          %v1063 = vadd.f32 %v999, %v1061
          %v1064 = vadd.f32 %v1000, %v1062
          %v1065 = vld [vmem:[%s474 + $0x4] sm:$0xff]
          %v1066 = vld [vmem:[%s474 + $0xc] sm:$0xff]
          %v1067 = vld [vmem:[%s487 + $0x4] sm:$0xff]
          %v1068 = vld [vmem:[%s487 + $0xc] sm:$0xff]
          %s1069 = sld [smem:[#allocation10 + $0x1f]]
          %s1070 = sld [smem:[#allocation10 + $0x50]]
          %v1071 = vstv %s1069
          %v1072 = vmul.f32 %v1071, %v1065
          %v1073 = vmul.f32 %v1071, %v1066
          %v1074 = vstv %s1070
          %v1075 = vmul.f32 %v1074, %v1067
          %v1076 = vmul.f32 %v1074, %v1068
          %v1077 = vadd.f32 %v1072, %v1075
          %v1078 = vadd.f32 %v1073, %v1076
          %v1079 = vadd.f32 %v1015, %v1077
          %v1080 = vadd.f32 %v1016, %v1078
          %v1081 = vld [vmem:[%s500 + $0x4] sm:$0xff]
          %v1082 = vld [vmem:[%s500 + $0xc] sm:$0xff]
          %v1083 = vld [vmem:[%s513 + $0x4] sm:$0xff]
          %v1084 = vld [vmem:[%s513 + $0xc] sm:$0xff]
          %s1085 = sld [smem:[#allocation10 + $0x20]]
          %s1086 = sld [smem:[#allocation10 + $0x51]]
          %v1087 = vstv %s1085
          %v1088 = vmul.f32 %v1087, %v1081
          %v1089 = vmul.f32 %v1087, %v1082
          %v1090 = vstv %s1086
          %v1091 = vmul.f32 %v1090, %v1083
          %v1092 = vmul.f32 %v1090, %v1084
          %v1093 = vadd.f32 %v1088, %v1091
          %v1094 = vadd.f32 %v1089, %v1092
          %v1095 = vadd.f32 %v1031, %v1093
          %v1096 = vadd.f32 %v1032, %v1094
          %v1097 = vld [vmem:[%s526 + $0x4] sm:$0xff]
          %v1098 = vld [vmem:[%s526 + $0xc] sm:$0xff]
          %v1099 = vld [vmem:[%s539 + $0x4] sm:$0xff]
          %v1100 = vld [vmem:[%s539 + $0xc] sm:$0xff]
          %s1101 = sld [smem:[#allocation10 + $0x21]]
          %s1102 = sld [smem:[#allocation10 + $0x52]]
          %v1103 = vstv %s1101
          %v1104 = vmul.f32 %v1103, %v1097
          %v1105 = vmul.f32 %v1103, %v1098
          %v1106 = vstv %s1102
          %v1107 = vmul.f32 %v1106, %v1099
          %v1108 = vmul.f32 %v1106, %v1100
          %v1109 = vadd.f32 %v1104, %v1107
          %v1110 = vadd.f32 %v1105, %v1108
          %v1111 = vadd.f32 %v1047, %v1109
          %v1112 = vadd.f32 %v1048, %v1110
          %v1113 = vld [vmem:[%s552 + $0x4] sm:$0xff]
          %v1114 = vld [vmem:[%s552 + $0xc] sm:$0xff]
          %v1115 = vld [vmem:[%s565 + $0x4] sm:$0xff]
          %v1116 = vld [vmem:[%s565 + $0xc] sm:$0xff]
          %s1117 = sld [smem:[#allocation10 + $0x22]]
          %s1118 = sld [smem:[#allocation10 + $0x53]]
          %v1119 = vstv %s1117
          %v1120 = vmul.f32 %v1119, %v1113
          %v1121 = vmul.f32 %v1119, %v1114
          %v1122 = vstv %s1118
          %v1123 = vmul.f32 %v1122, %v1115
          %v1124 = vmul.f32 %v1122, %v1116
          %v1125 = vadd.f32 %v1120, %v1123
          %v1126 = vadd.f32 %v1121, %v1124
          %v1127 = vadd.f32 %v1063, %v1125
          %v1128 = vadd.f32 %v1064, %v1126
          %v1129 = vld [vmem:[#allocation5 + $0x5] sm:$0xff]
          %v1130 = vld [vmem:[#allocation5 + $0xd] sm:$0xff]
          %v1131 = vld [vmem:[%s403 + $0x5] sm:$0xff]
          %v1132 = vld [vmem:[%s403 + $0xd] sm:$0xff]
          %s1133 = sld [smem:[#allocation10 + $0x23]]
          %s1134 = sld [smem:[#allocation10 + $0x54]]
          %v1135 = vstv %s1133
          %v1136 = vmul.f32 %v1135, %v1129
          %v1137 = vmul.f32 %v1135, %v1130
          %v1138 = vstv %s1134
          %v1139 = vmul.f32 %v1138, %v1131
          %v1140 = vmul.f32 %v1138, %v1132
          %v1141 = vadd.f32 %v1136, %v1139
          %v1142 = vadd.f32 %v1137, %v1140
          %v1143 = vadd.f32 %v1079, %v1141
          %v1144 = vadd.f32 %v1080, %v1142
          %v1145 = vld [vmem:[%s419 + $0x5] sm:$0xff]
          %v1146 = vld [vmem:[%s419 + $0xd] sm:$0xff]
          %v1147 = vld [vmem:[%s435 + $0x5] sm:$0xff]
          %v1148 = vld [vmem:[%s435 + $0xd] sm:$0xff]
          %s1149 = sld [smem:[#allocation10 + $0x24]]
          %s1150 = sld [smem:[#allocation10 + $0x55]]
          %v1151 = vstv %s1149
          %v1152 = vmul.f32 %v1151, %v1145
          %v1153 = vmul.f32 %v1151, %v1146
          %v1154 = vstv %s1150
          %v1155 = vmul.f32 %v1154, %v1147
          %v1156 = vmul.f32 %v1154, %v1148
          %v1157 = vadd.f32 %v1152, %v1155
          %v1158 = vadd.f32 %v1153, %v1156
          %v1159 = vadd.f32 %v1095, %v1157
          %v1160 = vadd.f32 %v1096, %v1158
          %v1161 = vld [vmem:[%s448 + $0x5] sm:$0xff]
          %v1162 = vld [vmem:[%s448 + $0xd] sm:$0xff]
          %v1163 = vld [vmem:[%s461 + $0x5] sm:$0xff]
          %v1164 = vld [vmem:[%s461 + $0xd] sm:$0xff]
          %s1165 = sld [smem:[#allocation10 + $0x25]]
          %s1166 = sld [smem:[#allocation10 + $0x56]]
          %v1167 = vstv %s1165
          %v1168 = vmul.f32 %v1167, %v1161
          %v1169 = vmul.f32 %v1167, %v1162
          %v1170 = vstv %s1166
          %v1171 = vmul.f32 %v1170, %v1163
          %v1172 = vmul.f32 %v1170, %v1164
          %v1173 = vadd.f32 %v1168, %v1171
          %v1174 = vadd.f32 %v1169, %v1172
          %v1175 = vadd.f32 %v1111, %v1173
          %v1176 = vadd.f32 %v1112, %v1174
          %v1177 = vld [vmem:[%s474 + $0x5] sm:$0xff]
          %v1178 = vld [vmem:[%s474 + $0xd] sm:$0xff]
          %v1179 = vld [vmem:[%s487 + $0x5] sm:$0xff]
          %v1180 = vld [vmem:[%s487 + $0xd] sm:$0xff]
          %s1181 = sld [smem:[#allocation10 + $0x26]]
          %s1182 = sld [smem:[#allocation10 + $0x57]]
          %v1183 = vstv %s1181
          %v1184 = vmul.f32 %v1183, %v1177
          %v1185 = vmul.f32 %v1183, %v1178
          %v1186 = vstv %s1182
          %v1187 = vmul.f32 %v1186, %v1179
          %v1188 = vmul.f32 %v1186, %v1180
          %v1189 = vadd.f32 %v1184, %v1187
          %v1190 = vadd.f32 %v1185, %v1188
          %v1191 = vadd.f32 %v1127, %v1189
          %v1192 = vadd.f32 %v1128, %v1190
          %v1193 = vld [vmem:[%s500 + $0x5] sm:$0xff]
          %v1194 = vld [vmem:[%s500 + $0xd] sm:$0xff]
          %v1195 = vld [vmem:[%s513 + $0x5] sm:$0xff]
          %v1196 = vld [vmem:[%s513 + $0xd] sm:$0xff]
          %s1197 = sld [smem:[#allocation10 + $0x27]]
          %s1198 = sld [smem:[#allocation10 + $0x58]]
          %v1199 = vstv %s1197
          %v1200 = vmul.f32 %v1199, %v1193
          %v1201 = vmul.f32 %v1199, %v1194
          %v1202 = vstv %s1198
          %v1203 = vmul.f32 %v1202, %v1195
          %v1204 = vmul.f32 %v1202, %v1196
          %v1205 = vadd.f32 %v1200, %v1203
          %v1206 = vadd.f32 %v1201, %v1204
          %v1207 = vadd.f32 %v1143, %v1205
          %v1208 = vadd.f32 %v1144, %v1206
          %v1209 = vld [vmem:[%s526 + $0x5] sm:$0xff]
          %v1210 = vld [vmem:[%s526 + $0xd] sm:$0xff]
          %v1211 = vld [vmem:[%s539 + $0x5] sm:$0xff]
          %v1212 = vld [vmem:[%s539 + $0xd] sm:$0xff]
          %s1213 = sld [smem:[#allocation10 + $0x28]]
          %s1214 = sld [smem:[#allocation10 + $0x59]]
          %v1215 = vstv %s1213
          %v1216 = vmul.f32 %v1215, %v1209
          %v1217 = vmul.f32 %v1215, %v1210
          %v1218 = vstv %s1214
          %v1219 = vmul.f32 %v1218, %v1211
          %v1220 = vmul.f32 %v1218, %v1212
          %v1221 = vadd.f32 %v1216, %v1219
          %v1222 = vadd.f32 %v1217, %v1220
          %v1223 = vadd.f32 %v1159, %v1221
          %v1224 = vadd.f32 %v1160, %v1222
          %v1225 = vld [vmem:[%s552 + $0x5] sm:$0xff]
          %v1226 = vld [vmem:[%s552 + $0xd] sm:$0xff]
          %v1227 = vld [vmem:[%s565 + $0x5] sm:$0xff]
          %v1228 = vld [vmem:[%s565 + $0xd] sm:$0xff]
          %s1229 = sld [smem:[#allocation10 + $0x29]]
          %s1230 = sld [smem:[#allocation10 + $0x5a]]
          %v1231 = vstv %s1229
          %v1232 = vmul.f32 %v1231, %v1225
          %v1233 = vmul.f32 %v1231, %v1226
          %v1234 = vstv %s1230
          %v1235 = vmul.f32 %v1234, %v1227
          %v1236 = vmul.f32 %v1234, %v1228
          %v1237 = vadd.f32 %v1232, %v1235
          %v1238 = vadd.f32 %v1233, %v1236
          %v1239 = vadd.f32 %v1175, %v1237
          %v1240 = vadd.f32 %v1176, %v1238
          %v1241 = vld [vmem:[#allocation5 + $0x6] sm:$0xff]
          %v1242 = vld [vmem:[#allocation5 + $0xe] sm:$0xff]
          %v1243 = vld [vmem:[%s403 + $0x6] sm:$0xff]
          %v1244 = vld [vmem:[%s403 + $0xe] sm:$0xff]
          %s1245 = sld [smem:[#allocation10 + $0x2a]]
          %s1246 = sld [smem:[#allocation10 + $0x5b]]
          %v1247 = vstv %s1245
          %v1248 = vmul.f32 %v1247, %v1241
          %v1249 = vmul.f32 %v1247, %v1242
          %v1250 = vstv %s1246
          %v1251 = vmul.f32 %v1250, %v1243
          %v1252 = vmul.f32 %v1250, %v1244
          %v1253 = vadd.f32 %v1248, %v1251
          %v1254 = vadd.f32 %v1249, %v1252
          %v1255 = vadd.f32 %v1191, %v1253
          %v1256 = vadd.f32 %v1192, %v1254
          %v1257 = vld [vmem:[%s419 + $0x6] sm:$0xff]
          %v1258 = vld [vmem:[%s419 + $0xe] sm:$0xff]
          %v1259 = vld [vmem:[%s435 + $0x6] sm:$0xff]
          %v1260 = vld [vmem:[%s435 + $0xe] sm:$0xff]
          %s1261 = sld [smem:[#allocation10 + $0x2b]]
          %s1262 = sld [smem:[#allocation10 + $0x5c]]
          %v1263 = vstv %s1261
          %v1264 = vmul.f32 %v1263, %v1257
          %v1265 = vmul.f32 %v1263, %v1258
          %v1266 = vstv %s1262
          %v1267 = vmul.f32 %v1266, %v1259
          %v1268 = vmul.f32 %v1266, %v1260
          %v1269 = vadd.f32 %v1264, %v1267
          %v1270 = vadd.f32 %v1265, %v1268
          %v1271 = vadd.f32 %v1207, %v1269
          %v1272 = vadd.f32 %v1208, %v1270
          %v1273 = vld [vmem:[%s448 + $0x6] sm:$0xff]
          %v1274 = vld [vmem:[%s448 + $0xe] sm:$0xff]
          %v1275 = vld [vmem:[%s461 + $0x6] sm:$0xff]
          %v1276 = vld [vmem:[%s461 + $0xe] sm:$0xff]
          %s1277 = sld [smem:[#allocation10 + $0x2c]]
          %s1278 = sld [smem:[#allocation10 + $0x5d]]
          %v1279 = vstv %s1277
          %v1280 = vmul.f32 %v1279, %v1273
          %v1281 = vmul.f32 %v1279, %v1274
          %v1282 = vstv %s1278
          %v1283 = vmul.f32 %v1282, %v1275
          %v1284 = vmul.f32 %v1282, %v1276
          %v1285 = vadd.f32 %v1280, %v1283
          %v1286 = vadd.f32 %v1281, %v1284
          %v1287 = vadd.f32 %v1223, %v1285
          %v1288 = vadd.f32 %v1224, %v1286
          %v1289 = vld [vmem:[%s474 + $0x6] sm:$0xff]
          %v1290 = vld [vmem:[%s474 + $0xe] sm:$0xff]
          %v1291 = vld [vmem:[%s487 + $0x6] sm:$0xff]
          %v1292 = vld [vmem:[%s487 + $0xe] sm:$0xff]
          %s1293 = sld [smem:[#allocation10 + $0x2d]]
          %s1294 = sld [smem:[#allocation10 + $0x5e]]
          %v1295 = vstv %s1293
          %v1296 = vmul.f32 %v1295, %v1289
          %v1297 = vmul.f32 %v1295, %v1290
          %v1298 = vstv %s1294
          %v1299 = vmul.f32 %v1298, %v1291
          %v1300 = vmul.f32 %v1298, %v1292
          %v1301 = vadd.f32 %v1296, %v1299
          %v1302 = vadd.f32 %v1297, %v1300
          %v1303 = vadd.f32 %v1239, %v1301
          %v1304 = vadd.f32 %v1240, %v1302
          %v1305 = vld [vmem:[%s500 + $0x6] sm:$0xff]
          %v1306 = vld [vmem:[%s500 + $0xe] sm:$0xff]
          %v1307 = vld [vmem:[%s513 + $0x6] sm:$0xff]
          %v1308 = vld [vmem:[%s513 + $0xe] sm:$0xff]
          %s1309 = sld [smem:[#allocation10 + $0x2e]]
          %s1310 = sld [smem:[#allocation10 + $0x5f]]
          %v1311 = vstv %s1309
          %v1312 = vmul.f32 %v1311, %v1305
          %v1313 = vmul.f32 %v1311, %v1306
          %v1314 = vstv %s1310
          %v1315 = vmul.f32 %v1314, %v1307
          %v1316 = vmul.f32 %v1314, %v1308
          %v1317 = vadd.f32 %v1312, %v1315
          %v1318 = vadd.f32 %v1313, %v1316
          %v1319 = vadd.f32 %v1255, %v1317
          %v1320 = vadd.f32 %v1256, %v1318
          %v1321 = vld [vmem:[%s526 + $0x6] sm:$0xff]
          %v1322 = vld [vmem:[%s526 + $0xe] sm:$0xff]
          %v1323 = vld [vmem:[%s539 + $0x6] sm:$0xff]
          %v1324 = vld [vmem:[%s539 + $0xe] sm:$0xff]
          %s1325 = sld [smem:[#allocation10 + $0x2f]]
          %s1326 = sld [smem:[#allocation10 + $0x60]]
          %v1327 = vstv %s1325
          %v1328 = vmul.f32 %v1327, %v1321
          %v1329 = vmul.f32 %v1327, %v1322
          %v1330 = vstv %s1326
          %v1331 = vmul.f32 %v1330, %v1323
          %v1332 = vmul.f32 %v1330, %v1324
          %v1333 = vadd.f32 %v1328, %v1331
          %v1334 = vadd.f32 %v1329, %v1332
          %v1335 = vadd.f32 %v1271, %v1333
          %v1336 = vadd.f32 %v1272, %v1334
          %v1337 = vld [vmem:[%s552 + $0x6] sm:$0xff]
          %v1338 = vld [vmem:[%s552 + $0xe] sm:$0xff]
          %v1339 = vld [vmem:[%s565 + $0x6] sm:$0xff]
          %v1340 = vld [vmem:[%s565 + $0xe] sm:$0xff]
          %s1341 = sld [smem:[#allocation10 + $0x30]]
          %s1342 = sld [smem:[#allocation10 + $0x61]]
          %v1343 = vstv %s1341
          %v1344 = vmul.f32 %v1343, %v1337
          %v1345 = vmul.f32 %v1343, %v1338
          %v1346 = vstv %s1342
          %v1347 = vmul.f32 %v1346, %v1339
          %v1348 = vmul.f32 %v1346, %v1340
          %v1349 = vadd.f32 %v1344, %v1347
          %v1350 = vadd.f32 %v1345, %v1348
          %v1351 = vadd.f32 %v1287, %v1349
          %v1352 = vadd.f32 %v1288, %v1350
          %v1353 = vadd.f32 %v1351, %v1303
          %v1354 = vadd.f32 %v1352, %v1304
          %v1355 = vadd.f32 %v1319, %v1335
          %v1356 = vadd.f32 %v1320, %v1336
          %v1357 = vadd.f32 %v1353, %v1355
          %v1358 = vadd.f32 %v1354, %v1356
          %v1359 = vxor.u32 %v1357, 2147483648
          %v1360 = vxor.u32 %v1358, 2147483648
          %v1361 = vmul.f32 %v1359, 1.442695
          %v1362 = vpow.pop %v1361
          %v1363 = vmul.f32 %v1360, 1.442695
          %v1364 = vpow.pop %v1363
          %v1365 = vadd.f32 %v1362, 1.0
          %v1366 = vadd.f32 %v1364, 1.0
          %v1367 = vrcp.pop %v1365
          %v1368 = vmul.f32 %v1365, %v1367
          %v1369 = vsub.f32 1.0, %v1368
          %v1370 = vmul.f32 %v1367, %v1369
          %v1371 = vadd.f32 %v1367, %v1370
          %vm1372 = vweird.f32 %v1365
          %vm1373 = vweird.f32 %v1367
          %vm1374 = vmor %vm1372, %vm1373
          %v1375 = vsel %vm1374, %v1367, %v1371
          %v1376 = vand.u32 2147483647, %v1365
          %vm1377 = vcmp.eq.f32.partialorder %v1376, 8.507059e+37
          %v1378 = vand.u32 %v1365, 2147483648
          %v1379 = vor.u32 1.1754944e-38, %v1378
          %v1380 = vsel %vm1377, %v1379, %v1375
          %v1381 = vmul.f32 1.0, %v1380
          %v1382 = vrcp.pop %v1366
          %v1383 = vmul.f32 %v1366, %v1382
          %v1384 = vsub.f32 1.0, %v1383
          %v1385 = vmul.f32 %v1382, %v1384
          %v1386 = vadd.f32 %v1382, %v1385
          %vm1387 = vweird.f32 %v1366
          %vm1388 = vweird.f32 %v1382
          %vm1389 = vmor %vm1387, %vm1388
          %v1390 = vsel %vm1389, %v1382, %v1386
          %v1391 = vand.u32 2147483647, %v1366
          %vm1392 = vcmp.eq.f32.partialorder %v1391, 8.507059e+37
          %v1393 = vand.u32 %v1366, 2147483648
          %v1394 = vor.u32 1.1754944e-38, %v1393
          %v1395 = vsel %vm1392, %v1394, %v1390
          %v1396 = vmul.f32 1.0, %v1395
          %1397 = vst.msk [vmem:[%s191] sm:$0xff] %vm398, %v1381
          %1398 = vst.msk [vmem:[%s191 + $0x8] sm:$0xff] %vm398, %v1396
        $region44: #{tpu_custom_call.1} parent=27 // pred_fallthru
          _
        %s1399 = sand.u32 %s89, 1
        %s1400 = scalar_lea.sflag [#allocation8], %s1399
        %s1401 = sand.u32 %s89, 1
        %s1402 = smul.addr %s1401, 16
        %s1403 = scalar_lea.vmem [#allocation11], %s1402
        // Predicated region
        $region45: #{tpu_custom_call.1} parent=27 // pred_check
          %p1404 = pneg %p99
        $region46: #{tpu_custom_call.1} parent=27 // pred_check_branch
          %1406 = sbr.rel (%p1404) target = $region48
        $region47: #{tpu_custom_call.1} parent=27 // pred_region
          %1408 = vsyncadd %s1400, 0
          %s1409 = smul.addr %s24, 2
          %s1410 = smul.addr %s1409, 8
          %s1411 = scalar_lea.hbm %s2, %s1410
          %s1412 = sshll.u32 %s1403, 4
          %s1413 = int_to_ptr.vmem [resolvable:$true] %s1412
          %s1414 = sshll.u32 %s1411, 4
          %s1415 = int_to_ptr.hbm [resolvable:$true] %s1414
          %1420 = dma.vmem_to_hbm [thread:$0]  %s1413, 256, %s1415, %s1400, 128, 128, 8
        $region48: #{tpu_custom_call.1} parent=27 // pred_fallthru
          _
      $region28: #{tpu_custom_call.1} parent=5 // pred_fallthru
        _
      %p1421 = scmp.le.s32.totalorder 2, %s15
      // Predicated region
      $region49: #{tpu_custom_call.1} parent=5 // pred_check
        %p1422 = pneg %p1421
      $region50: #{tpu_custom_call.1} parent=5 // pred_check_branch
        %1424 = sbr.rel (%p1422) target = $region52
      $region51: #{tpu_custom_call.1} parent=5 // pred_region
        %s1425 = ssub.s32 %s15, 2
        // Predicated region
        $region53: #{tpu_custom_call.1} parent=51 // pred_check
          %p1426 = pneg %p105
        $region54: #{tpu_custom_call.1} parent=51 // pred_check_branch
          %1428 = sbr.rel (%p1426) target = $region56
        $region55: #{tpu_custom_call.1} parent=51 // pred_region
          %s1429 = sand.u32 %s90, 1
          %s1430 = scalar_lea.sflag [#allocation8], %s1429
          %s1431 = sand.u32 %s90, 1
          %s1432 = smul.addr %s1431, 16
          %s1433 = scalar_lea.vmem [#allocation11], %s1432
          %1435 = dma.done %s1430, 256
        $region56: #{tpu_custom_call.1} parent=51 // pred_fallthru
          _
      $region52: #{tpu_custom_call.1} parent=5 // pred_fallthru
        _
    $region6: #{tpu_custom_call.1} parent=1 // loop_footer
      %s19 = sadd.s32 1, %s15
    $region7: #{tpu_custom_call.1} parent=1 // loop_footer_branch
      %14 = sbr.rel target = $region3
    $region8: #{tpu_custom_call.1} parent=1 // loop_exit
      _
    %1436 = vsyncpa [#allocation7], 1
    %s1437 = scalar_lea.sflag [#allocation7], 1
    %1438 = vsyncpa %s1437, 1
    %1439 = vsyncpa [#allocation8], 1
    %s1440 = scalar_lea.sflag [#allocation8], 1
    %1441 = vsyncpa %s1440, 1
    %1442 = vsyncpa [#allocation9], 1
    %s1443 = scalar_lea.sflag [#allocation9], 1
    %1444 = vsyncpa %s1443, 1

</llo_original>
